<compile_context>
chip_gen: v7x
topology: tpu7x:2x2x1
jax: 0.10.0
libtpu: 0.0.40
codegen_flags: <defaults>
</compile_context>

<pallas_src>
import functools

import jax
import jax.numpy as jnp
from jax import lax
from jax.experimental import pallas as pl
from jax.experimental.pallas import tpu as pltpu

N_NODE = 128
NOISE_DIM = 100
EMB_DIM = 10
IN_DIM = NOISE_DIM + EMB_DIM       # 110
IN_DIM_PAD = 128                   # pad layer-1 K to a full 128-lane width
OUT_DIM = 784
OUT_DIM_PAD = 896                  # 7*128 -> lane-dense final store
DIMS = [IN_DIM, N_NODE, N_NODE * 2, N_NODE * 4, N_NODE * 8, OUT_DIM]
BN_EPS = 0.8                       # positional arg in BatchNorm1d(out_feat, 0.8)
LEAKY_SLOPE = 0.2


def generator_kernel(x_ref,
                     w1_ref, b1_ref,
                     w2_ref, g2_ref, be2_ref,
                     w3_ref, g3_ref, be3_ref,
                     w4_hbm, g4_ref, be4_ref,
                     w5_hbm, b5_ref,
                     out_ref,
                     w4_vmem, w5_vmem, dma_sem,
                     *, b_actual):
    # Start streaming the two largest weights now; layers 1-3 hide the DMA.
    cp4 = pltpu.make_async_copy(w4_hbm, w4_vmem, dma_sem.at[0])
    cp5 = pltpu.make_async_copy(w5_hbm, w5_vmem, dma_sem.at[1])
    cp4.start()
    cp5.start()

    b_pad = x_ref.shape[0]
    inv_n = jnp.float32(1.0 / b_actual)
    # Masked "ones" matrix (8 identical rows, sublane-aligned) so the batch
    # reductions run on the MXU; padded batch rows contribute zero.
    cols = lax.broadcasted_iota(jnp.int32, (8, b_pad), 1)
    ones_mask = (cols < b_actual).astype(jnp.float32)          # (8, B_pad)

    def matmul(h, w_ref, b_ref=None):
        # bf16 MXU inputs, f32 accumulation; bias add (if any) stays in f32.
        acc = jnp.dot(h.astype(jnp.bfloat16), w_ref[...],
                      preferred_element_type=jnp.float32)
        return acc if b_ref is None else acc + b_ref[...]

    def leaky(v):
        return jnp.maximum(v, LEAKY_SLOPE * v)

    def bn_leaky(v, gamma, beta):
        # PyTorch BatchNorm1d training mode (biased batch stats), one-pass
        # variance, sums on the MXU, normalize folded to scale/shift.
        s1 = jnp.dot(ones_mask, v, preferred_element_type=jnp.float32)[0:1, :]
        s2 = jnp.dot(ones_mask, v * v, preferred_element_type=jnp.float32)[0:1, :]
        mu = s1 * inv_n
        var = s2 * inv_n - mu * mu
        scale = gamma * lax.rsqrt(var + BN_EPS)
        shift = beta - mu * scale
        return leaky(v * scale + shift)

    # Layer 1: Linear(128 (padded from 110) -> 128) + LeakyReLU
    h = leaky(matmul(x_ref[...], w1_ref, b1_ref))

    # Layer 2: Linear(128 -> 256) + BN(eps=0.8) + LeakyReLU  (bias cancels in BN)
    h = bn_leaky(matmul(h, w2_ref), g2_ref[...], be2_ref[...])

    # Layer 3: Linear(256 -> 512) + BN + LeakyReLU
    h = bn_leaky(matmul(h, w3_ref), g3_ref[...], be3_ref[...])

    # Layer 4: Linear(512 -> 1024) + BN + LeakyReLU  (wait for its weight DMA)
    cp4.wait()
    h = bn_leaky(matmul(h, w4_vmem), g4_ref[...], be4_ref[...])

    # Layer 5: Linear(1024 -> 896 (padded from 784)) + Tanh
    # (padded weight/bias columns are zero -> tanh(0)=0; sliced off in wrapper)
    cp5.wait()
    out_ref[...] = jnp.tanh(matmul(h, w5_vmem, b5_ref))


def init_params(key):
    """Deterministic synthetic parameters matching the PyTorch module's shapes."""
    params = {}
    keys = jax.random.split(key, 16)
    k_it = iter(keys)

    # Embedding(10, 10): N(0, 1) like PyTorch default.
    params["emb"] = jax.random.normal(next(k_it), (10, EMB_DIM), jnp.float32)

    # Linear layers: uniform(-1/sqrt(fan_in), 1/sqrt(fan_in)) like PyTorch default.
    for li in range(5):
        fan_in, fan_out = DIMS[li], DIMS[li + 1]
        bound = 1.0 / jnp.sqrt(jnp.float32(fan_in))
        params[f"w{li + 1}"] = jax.random.uniform(
            next(k_it), (fan_in, fan_out), jnp.float32, -bound, bound)
        params[f"b{li + 1}"] = jax.random.uniform(
            next(k_it), (1, fan_out), jnp.float32, -bound, bound)

    # BatchNorm affine params (weight=1, bias=0 defaults) for layers 2..4.
    for li in (2, 3, 4):
        fan_out = DIMS[li]
        params[f"g{li}"] = jnp.ones((1, fan_out), jnp.float32)
        params[f"be{li}"] = jnp.zeros((1, fan_out), jnp.float32)
    return params


def prepare_params(params):
    """One-time layout prep: pad w1/w5, cast weights to persistent bf16 copies.

    b2/b3/b4 are intentionally dropped: in training-mode BatchNorm the linear
    bias cancels under mean subtraction and does not affect variance.
    """
    w1 = jnp.pad(params["w1"], ((0, IN_DIM_PAD - IN_DIM), (0, 0)))       # (128, 128)
    w5 = jnp.pad(params["w5"], ((0, 0), (0, OUT_DIM_PAD - OUT_DIM)))     # (1024, 896)
    b5 = jnp.pad(params["b5"], ((0, 0), (0, OUT_DIM_PAD - OUT_DIM)))     # (1, 896)
    bf16 = lambda a: a.astype(jnp.bfloat16)
    return {
        "emb": params["emb"],
        "w1": bf16(w1), "b1": params["b1"],
        "w2": bf16(params["w2"]), "g2": params["g2"], "be2": params["be2"],
        "w3": bf16(params["w3"]), "g3": params["g3"], "be3": params["be3"],
        "w4": bf16(params["w4"]), "g4": params["g4"], "be4": params["be4"],
        "w5": bf16(w5), "b5": b5,
    }


def _vmem_limit_bytes():
    """48 MiB on 64 MiB-VMEM parts (v7x), ~100 MiB on 128 MiB parts (v5e/v6e)."""
    try:
        cap = int(pltpu.get_tpu_info().vmem_capacity_bytes)
    except Exception:
        cap = 64 << 20
    return int(min(max(cap - (16 << 20), 32 << 20), 100 << 20))


def generator_forward(prep, noise, labels):
    B = noise.shape[0]
    B_pad = ((B + 7) // 8) * 8   # sublane-aligned batch

    # Glue in plain JAX: embedding lookup + concat (matches torch.cat((emb, noise), -1)),
    # cast to bf16 (layer-1 MXU input), pad K 110 -> 128 and batch to a multiple of 8.
    gen_input = jnp.concatenate(
        [prep["emb"][labels], noise.astype(jnp.float32)], axis=-1)       # (B, 110) f32
    gen_input = jnp.pad(gen_input.astype(jnp.bfloat16),
                        ((0, B_pad - B), (0, IN_DIM_PAD - IN_DIM)))      # (B_pad, 128) bf16

    operands = (
        gen_input,
        prep["w1"], prep["b1"],
        prep["w2"], prep["g2"], prep["be2"],
        prep["w3"], prep["g3"], prep["be3"],
        prep["w4"], prep["g4"], prep["be4"],
        prep["w5"], prep["b5"],
    )

    vmem_spec = pl.BlockSpec(memory_space=pltpu.MemorySpace.VMEM)
    hbm_spec = pl.BlockSpec(memory_space=pl.ANY)
    in_specs = [vmem_spec] * len(operands)
    in_specs[9] = hbm_spec    # w4 -> streamed manually inside the kernel
    in_specs[12] = hbm_spec   # w5 -> streamed manually inside the kernel

    layer_kn = (IN_DIM_PAD * DIMS[1], DIMS[1] * DIMS[2], DIMS[2] * DIMS[3],
                DIMS[3] * DIMS[4], DIMS[4] * OUT_DIM_PAD)
    flops = 2 * B_pad * sum(layer_kn)
    weight_bytes = 2 * sum(layer_kn)                                      # bf16 weights
    act_bytes = 2 * B_pad * IN_DIM_PAD + 4 * B_pad * OUT_DIM_PAD          # bf16 in, f32 out
    cost = pl.CostEstimate(flops=flops,
                           transcendentals=B_pad * OUT_DIM_PAD,
                           bytes_accessed=weight_bytes + act_bytes)

    img_flat = pl.pallas_call(
        functools.partial(generator_kernel, b_actual=B),
        out_shape=jax.ShapeDtypeStruct((B_pad, OUT_DIM_PAD), jnp.float32),
        in_specs=in_specs,
        out_specs=vmem_spec,
        scratch_shapes=[
            pltpu.VMEM((DIMS[3], DIMS[4]), jnp.bfloat16),      # w4 landing buffer
            pltpu.VMEM((DIMS[4], OUT_DIM_PAD), jnp.bfloat16),  # w5 landing buffer
            pltpu.SemaphoreType.DMA((2,)),
        ],
        compiler_params=pltpu.CompilerParams(vmem_limit_bytes=_vmem_limit_bytes()),
        cost_estimate=cost,
    )(*operands)

    # Drop batch / lane padding, then PyTorch's img.view(B, 1, 28, 28) (NCHW).
    return img_flat[:B, :OUT_DIM].reshape(B, 1, 28, 28)


def generator_reference(params, noise, labels):
    """Pure-JAX f32 reference matching the PyTorch module (training-mode BN)."""
    hi = jax.lax.Precision.HIGHEST
    x = jnp.concatenate([params["emb"][labels], noise], axis=-1)
    h = jnp.dot(x, params["w1"], precision=hi) + params["b1"]
    h = jnp.where(h > 0, h, LEAKY_SLOPE * h)
    for li in (2, 3, 4):
        h = jnp.dot(h, params[f"w{li}"], precision=hi) + params[f"b{li}"]
        mu = jnp.mean(h, axis=0, keepdims=True)
        var = jnp.mean((h - mu) ** 2, axis=0, keepdims=True)
        h = (h - mu) / jnp.sqrt(var + BN_EPS) * params[f"g{li}"] + params[f"be{li}"]
        h = jnp.where(h > 0, h, LEAKY_SLOPE * h)
    h = jnp.tanh(jnp.dot(h, params["w5"], precision=hi) + params["b5"])
    return h.reshape(-1, 1, 28, 28)


if __name__ == "__main__":
    key = jax.random.PRNGKey(0)
    k_params, k_noise, k_labels = jax.random.split(key, 3)

    params = init_params(k_params)
    prep = prepare_params(params)     # persistent padded bf16 weight copies

    B = 8
    noise = jax.random.normal(k_noise, (B, NOISE_DIM), jnp.float32)
    labels = jax.random.randint(k_labels, (B,), 0, 10, jnp.int32)

    img = generator_forward(prep, noise, labels)
    img = jax.block_until_ready(img)

    assert img.shape == (B, 1, 28, 28), img.shape
    assert img.dtype == jnp.float32
    assert bool(jnp.all(jnp.isfinite(img)))
    assert bool(jnp.all(jnp.abs(img) <= 1.0))   # tanh output range

    ref = generator_reference(params, noise, labels)
    max_err = float(jnp.max(jnp.abs(img - ref)))
    assert max_err < 0.15, f"max abs error vs f32 reference: {max_err}"
    print("KERNEL_OK")
</pallas_src>

<mosaic_0001>
module attributes {stable_mosaic.version = 11 : i64} {
  func.func @generator_kernel(%arg0: memref<8x128xbf16, #tpu.memory_space<vmem>>, %arg1: memref<128x128xbf16, #tpu.memory_space<vmem>>, %arg2: memref<1x128xf32, #tpu.memory_space<vmem>>, %arg3: memref<128x256xbf16, #tpu.memory_space<vmem>>, %arg4: memref<1x256xf32, #tpu.memory_space<vmem>>, %arg5: memref<1x256xf32, #tpu.memory_space<vmem>>, %arg6: memref<256x512xbf16, #tpu.memory_space<vmem>>, %arg7: memref<1x512xf32, #tpu.memory_space<vmem>>, %arg8: memref<1x512xf32, #tpu.memory_space<vmem>>, %arg9: memref<512x1024xbf16, #tpu.memory_space<any>>, %arg10: memref<1x1024xf32, #tpu.memory_space<vmem>>, %arg11: memref<1x1024xf32, #tpu.memory_space<vmem>>, %arg12: memref<1024x896xbf16, #tpu.memory_space<any>>, %arg13: memref<1x896xf32, #tpu.memory_space<vmem>>, %arg14: memref<8x896xf32, #tpu.memory_space<vmem>>, %arg15: memref<512x1024xbf16, #tpu.memory_space<vmem>>, %arg16: memref<1024x896xbf16, #tpu.memory_space<vmem>>, %arg17: memref<2x!tpu.dma_semaphore, #tpu.memory_space<semaphore_mem>>) attributes {dimension_semantics = [], scalar_prefetch = 0 : i64, scratch_operands = 3 : i64, tpu.core_type = #tpu.core_type<tc>} {
    %c0_i32 = arith.constant 0 : i32
    %0 = tpu.memref_slice %arg17[%c0_i32] : memref<2x!tpu.dma_semaphore, #tpu.memory_space<semaphore_mem>> -> memref<1x!tpu.dma_semaphore, #tpu.memory_space<semaphore_mem>>
    %1 = tpu.memref_squeeze %0 : memref<1x!tpu.dma_semaphore, #tpu.memory_space<semaphore_mem>> -> memref<!tpu.dma_semaphore, #tpu.memory_space<semaphore_mem>>
    tpu.enqueue_dma source(%arg9 : memref<512x1024xbf16, #tpu.memory_space<any>>) target(%arg15 : memref<512x1024xbf16, #tpu.memory_space<vmem>>) target_semaphore(%1 : memref<!tpu.dma_semaphore, #tpu.memory_space<semaphore_mem>>)
    %c1_i32 = arith.constant 1 : i32
    %2 = tpu.memref_slice %arg17[%c1_i32] : memref<2x!tpu.dma_semaphore, #tpu.memory_space<semaphore_mem>> -> memref<1x!tpu.dma_semaphore, #tpu.memory_space<semaphore_mem>>
    %3 = tpu.memref_squeeze %2 : memref<1x!tpu.dma_semaphore, #tpu.memory_space<semaphore_mem>> -> memref<!tpu.dma_semaphore, #tpu.memory_space<semaphore_mem>>
    tpu.enqueue_dma source(%arg12 : memref<1024x896xbf16, #tpu.memory_space<any>>) target(%arg16 : memref<1024x896xbf16, #tpu.memory_space<vmem>>) target_semaphore(%3 : memref<!tpu.dma_semaphore, #tpu.memory_space<semaphore_mem>>)
    %4 = tpu.iota {dimensions = array<i32: 1>} : vector<8x8xi32>
    %c8_i32 = arith.constant 8 : i32
    %5 = vector.broadcast %c8_i32 : i32 to vector<8x8xi32>
    %6 = arith.cmpi slt, %4, %5 : vector<8x8xi32>
    %7 = arith.extui %6 : vector<8x8xi1> to vector<8x8xi32>
    %8 = arith.sitofp %7 : vector<8x8xi32> to vector<8x8xf32>
    %c0 = arith.constant 0 : index
    %c0_0 = arith.constant 0 : index
    %9 = vector.load %arg0[%c0, %c0_0] : memref<8x128xbf16, #tpu.memory_space<vmem>>, vector<8x128xbf16>
    %c0_1 = arith.constant 0 : index
    %c0_2 = arith.constant 0 : index
    %10 = vector.load %arg1[%c0_1, %c0_2] : memref<128x128xbf16, #tpu.memory_space<vmem>>, vector<128x128xbf16>
    %cst = arith.constant dense<0.000000e+00> : vector<8x128xf32>
    %11 = tpu.matmul %9, %10, %cst {dimension_numbers = #tpu.dot_dimension_numbers<[1], [0], [0], [1], [0, 0, 1, 1], [], []>} : vector<8x128xbf16>, vector<128x128xbf16>, vector<8x128xf32> -> vector<8x128xf32>
    %c0_3 = arith.constant 0 : index
    %c0_4 = arith.constant 0 : index
    %12 = vector.load %arg2[%c0_3, %c0_4] : memref<1x128xf32, #tpu.memory_space<vmem>>, vector<1x128xf32>
    %13 = vector.broadcast %12 : vector<1x128xf32> to vector<8x128xf32>
    %14 = arith.addf %11, %13 : vector<8x128xf32>
    %cst_5 = arith.constant 2.000000e-01 : f32
    %15 = vector.broadcast %cst_5 : f32 to vector<8x128xf32>
    %16 = arith.mulf %15, %14 : vector<8x128xf32>
    %17 = arith.maximumf %14, %16 : vector<8x128xf32>
    %18 = arith.truncf %17 : vector<8x128xf32> to vector<8x128xbf16>
    %c0_6 = arith.constant 0 : index
    %c0_7 = arith.constant 0 : index
    %19 = vector.load %arg3[%c0_6, %c0_7] : memref<128x256xbf16, #tpu.memory_space<vmem>>, vector<128x256xbf16>
    %cst_8 = arith.constant dense<0.000000e+00> : vector<8x256xf32>
    %20 = tpu.matmul %18, %19, %cst_8 {dimension_numbers = #tpu.dot_dimension_numbers<[1], [0], [0], [1], [0, 0, 1, 1], [], []>} : vector<8x128xbf16>, vector<128x256xbf16>, vector<8x256xf32> -> vector<8x256xf32>
    %c0_9 = arith.constant 0 : index
    %c0_10 = arith.constant 0 : index
    %21 = vector.load %arg4[%c0_9, %c0_10] : memref<1x256xf32, #tpu.memory_space<vmem>>, vector<1x256xf32>
    %c0_11 = arith.constant 0 : index
    %c0_12 = arith.constant 0 : index
    %22 = vector.load %arg5[%c0_11, %c0_12] : memref<1x256xf32, #tpu.memory_space<vmem>>, vector<1x256xf32>
    %cst_13 = arith.constant dense<0.000000e+00> : vector<8x256xf32>
    %23 = tpu.matmul %8, %20, %cst_13 {dimension_numbers = #tpu.dot_dimension_numbers<[1], [0], [0], [1], [0, 0, 1, 1], [], []>} : vector<8x8xf32>, vector<8x256xf32>, vector<8x256xf32> -> vector<8x256xf32>
    %24 = vector.extract_strided_slice %23 {offsets = [0, 0], sizes = [1, 256], strides = [1, 1]} : vector<8x256xf32> to vector<1x256xf32>
    %25 = arith.mulf %20, %20 : vector<8x256xf32>
    %cst_14 = arith.constant dense<0.000000e+00> : vector<8x256xf32>
    %26 = tpu.matmul %8, %25, %cst_14 {dimension_numbers = #tpu.dot_dimension_numbers<[1], [0], [0], [1], [0, 0, 1, 1], [], []>} : vector<8x8xf32>, vector<8x256xf32>, vector<8x256xf32> -> vector<8x256xf32>
    %27 = vector.extract_strided_slice %26 {offsets = [0, 0], sizes = [1, 256], strides = [1, 1]} : vector<8x256xf32> to vector<1x256xf32>
    %cst_15 = arith.constant 1.250000e-01 : f32
    %28 = vector.broadcast %cst_15 : f32 to vector<1x256xf32>
    %29 = arith.mulf %24, %28 : vector<1x256xf32>
    %cst_16 = arith.constant 1.250000e-01 : f32
    %30 = vector.broadcast %cst_16 : f32 to vector<1x256xf32>
    %31 = arith.mulf %27, %30 : vector<1x256xf32>
    %32 = arith.mulf %29, %29 : vector<1x256xf32>
    %33 = arith.subf %31, %32 : vector<1x256xf32>
    %cst_17 = arith.constant 8.000000e-01 : f32
    %34 = vector.broadcast %cst_17 : f32 to vector<1x256xf32>
    %35 = arith.addf %33, %34 : vector<1x256xf32>
    %36 = math.rsqrt %35 : vector<1x256xf32>
    %37 = arith.mulf %21, %36 : vector<1x256xf32>
    %38 = arith.mulf %29, %37 : vector<1x256xf32>
    %39 = arith.subf %22, %38 : vector<1x256xf32>
    %40 = vector.broadcast %37 : vector<1x256xf32> to vector<8x256xf32>
    %41 = arith.mulf %20, %40 : vector<8x256xf32>
    %42 = vector.broadcast %39 : vector<1x256xf32> to vector<8x256xf32>
    %43 = arith.addf %41, %42 : vector<8x256xf32>
    %cst_18 = arith.constant 2.000000e-01 : f32
    %44 = vector.broadcast %cst_18 : f32 to vector<8x256xf32>
    %45 = arith.mulf %44, %43 : vector<8x256xf32>
    %46 = arith.maximumf %43, %45 : vector<8x256xf32>
    %47 = arith.truncf %46 : vector<8x256xf32> to vector<8x256xbf16>
    %c0_19 = arith.constant 0 : index
    %c0_20 = arith.constant 0 : index
    %48 = vector.load %arg6[%c0_19, %c0_20] : memref<256x512xbf16, #tpu.memory_space<vmem>>, vector<256x512xbf16>
    %cst_21 = arith.constant dense<0.000000e+00> : vector<8x512xf32>
    %49 = tpu.matmul %47, %48, %cst_21 {dimension_numbers = #tpu.dot_dimension_numbers<[1], [0], [0], [1], [0, 0, 1, 1], [], []>} : vector<8x256xbf16>, vector<256x512xbf16>, vector<8x512xf32> -> vector<8x512xf32>
    %c0_22 = arith.constant 0 : index
    %c0_23 = arith.constant 0 : index
    %50 = vector.load %arg7[%c0_22, %c0_23] : memref<1x512xf32, #tpu.memory_space<vmem>>, vector<1x512xf32>
    %c0_24 = arith.constant 0 : index
    %c0_25 = arith.constant 0 : index
    %51 = vector.load %arg8[%c0_24, %c0_25] : memref<1x512xf32, #tpu.memory_space<vmem>>, vector<1x512xf32>
    %cst_26 = arith.constant dense<0.000000e+00> : vector<8x512xf32>
    %52 = tpu.matmul %8, %49, %cst_26 {dimension_numbers = #tpu.dot_dimension_numbers<[1], [0], [0], [1], [0, 0, 1, 1], [], []>} : vector<8x8xf32>, vector<8x512xf32>, vector<8x512xf32> -> vector<8x512xf32>
    %53 = vector.extract_strided_slice %52 {offsets = [0, 0], sizes = [1, 512], strides = [1, 1]} : vector<8x512xf32> to vector<1x512xf32>
    %54 = arith.mulf %49, %49 : vector<8x512xf32>
    %cst_27 = arith.constant dense<0.000000e+00> : vector<8x512xf32>
    %55 = tpu.matmul %8, %54, %cst_27 {dimension_numbers = #tpu.dot_dimension_numbers<[1], [0], [0], [1], [0, 0, 1, 1], [], []>} : vector<8x8xf32>, vector<8x512xf32>, vector<8x512xf32> -> vector<8x512xf32>
    %56 = vector.extract_strided_slice %55 {offsets = [0, 0], sizes = [1, 512], strides = [1, 1]} : vector<8x512xf32> to vector<1x512xf32>
    %cst_28 = arith.constant 1.250000e-01 : f32
    %57 = vector.broadcast %cst_28 : f32 to vector<1x512xf32>
    %58 = arith.mulf %53, %57 : vector<1x512xf32>
    %cst_29 = arith.constant 1.250000e-01 : f32
    %59 = vector.broadcast %cst_29 : f32 to vector<1x512xf32>
    %60 = arith.mulf %56, %59 : vector<1x512xf32>
    %61 = arith.mulf %58, %58 : vector<1x512xf32>
    %62 = arith.subf %60, %61 : vector<1x512xf32>
    %cst_30 = arith.constant 8.000000e-01 : f32
    %63 = vector.broadcast %cst_30 : f32 to vector<1x512xf32>
    %64 = arith.addf %62, %63 : vector<1x512xf32>
    %65 = math.rsqrt %64 : vector<1x512xf32>
    %66 = arith.mulf %50, %65 : vector<1x512xf32>
    %67 = arith.mulf %58, %66 : vector<1x512xf32>
    %68 = arith.subf %51, %67 : vector<1x512xf32>
    %69 = vector.broadcast %66 : vector<1x512xf32> to vector<8x512xf32>
    %70 = arith.mulf %49, %69 : vector<8x512xf32>
    %71 = vector.broadcast %68 : vector<1x512xf32> to vector<8x512xf32>
    %72 = arith.addf %70, %71 : vector<8x512xf32>
    %cst_31 = arith.constant 2.000000e-01 : f32
    %73 = vector.broadcast %cst_31 : f32 to vector<8x512xf32>
    %74 = arith.mulf %73, %72 : vector<8x512xf32>
    %75 = arith.maximumf %72, %74 : vector<8x512xf32>
    %c0_i32_32 = arith.constant 0 : i32
    %76 = tpu.memref_slice %arg17[%c0_i32_32] : memref<2x!tpu.dma_semaphore, #tpu.memory_space<semaphore_mem>> -> memref<1x!tpu.dma_semaphore, #tpu.memory_space<semaphore_mem>>
    %77 = tpu.memref_squeeze %76 : memref<1x!tpu.dma_semaphore, #tpu.memory_space<semaphore_mem>> -> memref<!tpu.dma_semaphore, #tpu.memory_space<semaphore_mem>>
    tpu.wait_dma2 semaphore(%77 : memref<!tpu.dma_semaphore, #tpu.memory_space<semaphore_mem>>) src(%arg9 : memref<512x1024xbf16, #tpu.memory_space<any>>) dst(%arg15 : memref<512x1024xbf16, #tpu.memory_space<vmem>>)
    %78 = arith.truncf %75 : vector<8x512xf32> to vector<8x512xbf16>
    %c0_33 = arith.constant 0 : index
    %c0_34 = arith.constant 0 : index
    %79 = vector.load %arg15[%c0_33, %c0_34] : memref<512x1024xbf16, #tpu.memory_space<vmem>>, vector<512x1024xbf16>
    %cst_35 = arith.constant dense<0.000000e+00> : vector<8x1024xf32>
    %80 = tpu.matmul %78, %79, %cst_35 {dimension_numbers = #tpu.dot_dimension_numbers<[1], [0], [0], [1], [0, 0, 1, 1], [], []>} : vector<8x512xbf16>, vector<512x1024xbf16>, vector<8x1024xf32> -> vector<8x1024xf32>
    %c0_36 = arith.constant 0 : index
    %c0_37 = arith.constant 0 : index
    %81 = vector.load %arg10[%c0_36, %c0_37] : memref<1x1024xf32, #tpu.memory_space<vmem>>, vector<1x1024xf32>
    %c0_38 = arith.constant 0 : index
    %c0_39 = arith.constant 0 : index
    %82 = vector.load %arg11[%c0_38, %c0_39] : memref<1x1024xf32, #tpu.memory_space<vmem>>, vector<1x1024xf32>
    %cst_40 = arith.constant dense<0.000000e+00> : vector<8x1024xf32>
    %83 = tpu.matmul %8, %80, %cst_40 {dimension_numbers = #tpu.dot_dimension_numbers<[1], [0], [0], [1], [0, 0, 1, 1], [], []>} : vector<8x8xf32>, vector<8x1024xf32>, vector<8x1024xf32> -> vector<8x1024xf32>
    %84 = vector.extract_strided_slice %83 {offsets = [0, 0], sizes = [1, 1024], strides = [1, 1]} : vector<8x1024xf32> to vector<1x1024xf32>
    %85 = arith.mulf %80, %80 : vector<8x1024xf32>
    %cst_41 = arith.constant dense<0.000000e+00> : vector<8x1024xf32>
    %86 = tpu.matmul %8, %85, %cst_41 {dimension_numbers = #tpu.dot_dimension_numbers<[1], [0], [0], [1], [0, 0, 1, 1], [], []>} : vector<8x8xf32>, vector<8x1024xf32>, vector<8x1024xf32> -> vector<8x1024xf32>
    %87 = vector.extract_strided_slice %86 {offsets = [0, 0], sizes = [1, 1024], strides = [1, 1]} : vector<8x1024xf32> to vector<1x1024xf32>
    %cst_42 = arith.constant 1.250000e-01 : f32
    %88 = vector.broadcast %cst_42 : f32 to vector<1x1024xf32>
    %89 = arith.mulf %84, %88 : vector<1x1024xf32>
    %cst_43 = arith.constant 1.250000e-01 : f32
    %90 = vector.broadcast %cst_43 : f32 to vector<1x1024xf32>
    %91 = arith.mulf %87, %90 : vector<1x1024xf32>
    %92 = arith.mulf %89, %89 : vector<1x1024xf32>
    %93 = arith.subf %91, %92 : vector<1x1024xf32>
    %cst_44 = arith.constant 8.000000e-01 : f32
    %94 = vector.broadcast %cst_44 : f32 to vector<1x1024xf32>
    %95 = arith.addf %93, %94 : vector<1x1024xf32>
    %96 = math.rsqrt %95 : vector<1x1024xf32>
    %97 = arith.mulf %81, %96 : vector<1x1024xf32>
    %98 = arith.mulf %89, %97 : vector<1x1024xf32>
    %99 = arith.subf %82, %98 : vector<1x1024xf32>
    %100 = vector.broadcast %97 : vector<1x1024xf32> to vector<8x1024xf32>
    %101 = arith.mulf %80, %100 : vector<8x1024xf32>
    %102 = vector.broadcast %99 : vector<1x1024xf32> to vector<8x1024xf32>
    %103 = arith.addf %101, %102 : vector<8x1024xf32>
    %cst_45 = arith.constant 2.000000e-01 : f32
    %104 = vector.broadcast %cst_45 : f32 to vector<8x1024xf32>
    %105 = arith.mulf %104, %103 : vector<8x1024xf32>
    %106 = arith.maximumf %103, %105 : vector<8x1024xf32>
    %c1_i32_46 = arith.constant 1 : i32
    %107 = tpu.memref_slice %arg17[%c1_i32_46] : memref<2x!tpu.dma_semaphore, #tpu.memory_space<semaphore_mem>> -> memref<1x!tpu.dma_semaphore, #tpu.memory_space<semaphore_mem>>
    %108 = tpu.memref_squeeze %107 : memref<1x!tpu.dma_semaphore, #tpu.memory_space<semaphore_mem>> -> memref<!tpu.dma_semaphore, #tpu.memory_space<semaphore_mem>>
    tpu.wait_dma2 semaphore(%108 : memref<!tpu.dma_semaphore, #tpu.memory_space<semaphore_mem>>) src(%arg12 : memref<1024x896xbf16, #tpu.memory_space<any>>) dst(%arg16 : memref<1024x896xbf16, #tpu.memory_space<vmem>>)
    %109 = arith.truncf %106 : vector<8x1024xf32> to vector<8x1024xbf16>
    %c0_47 = arith.constant 0 : index
    %c0_48 = arith.constant 0 : index
    %110 = vector.load %arg16[%c0_47, %c0_48] : memref<1024x896xbf16, #tpu.memory_space<vmem>>, vector<1024x896xbf16>
    %cst_49 = arith.constant dense<0.000000e+00> : vector<8x896xf32>
    %111 = tpu.matmul %109, %110, %cst_49 {dimension_numbers = #tpu.dot_dimension_numbers<[1], [0], [0], [1], [0, 0, 1, 1], [], []>} : vector<8x1024xbf16>, vector<1024x896xbf16>, vector<8x896xf32> -> vector<8x896xf32>
    %c0_50 = arith.constant 0 : index
    %c0_51 = arith.constant 0 : index
    %112 = vector.load %arg13[%c0_50, %c0_51] : memref<1x896xf32, #tpu.memory_space<vmem>>, vector<1x896xf32>
    %113 = vector.broadcast %112 : vector<1x896xf32> to vector<8x896xf32>
    %114 = arith.addf %111, %113 : vector<8x896xf32>
    %115 = math.tanh %114 : vector<8x896xf32>
    %c0_52 = arith.constant 0 : index
    %c0_53 = arith.constant 0 : index
    %116 = vector.load %arg14[%c0_52, %c0_53] : memref<8x896xf32, #tpu.memory_space<vmem>>, vector<8x896xf32>
    tpu.vector_store %arg14[%c0_52, %c0_53], %115 {strides = array<i32>} : memref<8x896xf32, #tpu.memory_space<vmem>>, vector<8x896xf32>,
    return
  }
}

</mosaic_0001>

<llo_original>
// kernel: tpu_custom_call.1
$region0: #{tpu_custom_call.1}
  #allocation0 [shape = 'u32[]', space=smem, size = 0x4, offset = 0x4, fixed_abs, tag = 'smem constant byte address 0x4 - core index']
  #allocation1 [shape = 'u32[144,128]{1,0:T(1,128)}', space=vmem, size = 0x12000, scoped, tag = 'internal scratch']
  #allocation2 [shape = 'bf16[512,1024]{1,0:T(16,128)(2,1)}', space=vmem, size = 0x100000, scoped, tag = 'scratch operand']
  #allocation3 [shape = 'bf16[1024,896]{1,0:T(16,128)(2,1)}', space=vmem, size = 0x1c0000, scoped, tag = 'scratch operand']
  #allocation4 [shape = 's32[2]{0}', space=sflag, size = 0x8, scoped, tag = 'scratch operand']
  #allocation26 [shape = 's32[]', space=sflag, size = 0x4, offset = 0, fixed_abs, tag = 'sflag constant byte address 0x0 - dummy sync flag']
  #allocation28 [shape = 's32[]', space=sflag, size = 0x4, offset = 0, fixed_abs, tag = 'sflag constant byte address 0x0 - dummy sync flag']
  %s0 = inlined_call_operand.hbm [shape: bf16[8,128], index: 0, kind: input, shape index: {}]
  %s1 = inlined_call_operand.hbm [shape: bf16[128,128], index: 1, kind: input, shape index: {}]
  %s2 = inlined_call_operand.hbm [shape: f32[1,128], index: 2, kind: input, shape index: {}]
  %s3 = inlined_call_operand.hbm [shape: bf16[128,256], index: 3, kind: input, shape index: {}]
  %s4 = inlined_call_operand.hbm [shape: f32[1,256], index: 4, kind: input, shape index: {}]
  %s5 = inlined_call_operand.hbm [shape: f32[1,256], index: 5, kind: input, shape index: {}]
  %s6 = inlined_call_operand.hbm [shape: bf16[256,512], index: 6, kind: input, shape index: {}]
  %s7 = inlined_call_operand.hbm [shape: f32[1,512], index: 7, kind: input, shape index: {}]
  %s8 = inlined_call_operand.hbm [shape: f32[1,512], index: 8, kind: input, shape index: {}]
  %s9 = inlined_call_operand.hbm [shape: bf16[512,1024], index: 9, kind: input, shape index: {}]
  %s10 = inlined_call_operand.hbm [shape: f32[1,1024], index: 10, kind: input, shape index: {}]
  %s11 = inlined_call_operand.hbm [shape: f32[1,1024], index: 11, kind: input, shape index: {}]
  %s12 = inlined_call_operand.hbm [shape: bf16[1024,896], index: 12, kind: input, shape index: {}]
  %s13 = inlined_call_operand.hbm [shape: f32[1,896], index: 13, kind: input, shape index: {}]
  %s14 = inlined_call_operand.hbm [shape: f32[8,896], index: 14, kind: output, shape index: {}]
  %s15 = sld [smem:[#allocation0]]
  $region106: #{tpu_custom_call.1} parent=0
    _
  %s17 = ssub.s32 1, %s15
  %s18 = scalar_select 0, %s17, %s15
  $region1: #{tpu_custom_call.1} parent=0
    #allocation5 [shape = 'u8[2048]{0}', space=vmem, size = 0x800, scoped, tag = 'input window, operand 0, single buffered']
    #allocation6 [shape = 's32[1]{0}', space=sflag, size = 0x4, scoped, tag = 'scoped memory for tpu_custom_call.1']
    #allocation7 [shape = 's32[1]{0}', space=sflag, size = 0x4, scoped, tag = 'scoped memory for tpu_custom_call.1']
    #allocation8 [shape = 'u8[32768]{0}', space=vmem, size = 0x8000, scoped, tag = 'input window, operand 1, single buffered']
    #allocation9 [shape = 's32[1]{0}', space=sflag, size = 0x4, scoped, tag = 'scoped memory for tpu_custom_call.1']
    #allocation10 [shape = 'u8[512]{0}', space=vmem, size = 0x400, scoped, tag = 'input window, operand 2, single buffered']
    #allocation11 [shape = 'u8[65536]{0}', space=vmem, size = 0x10000, scoped, tag = 'input window, operand 3, single buffered']
    #allocation12 [shape = 's32[1]{0}', space=sflag, size = 0x4, scoped, tag = 'scoped memory for tpu_custom_call.1']
    #allocation13 [shape = 'u8[1024]{0}', space=vmem, size = 0x400, scoped, tag = 'input window, operand 4, single buffered']
    #allocation14 [shape = 'u8[1024]{0}', space=vmem, size = 0x400, scoped, tag = 'input window, operand 5, single buffered']
    #allocation15 [shape = 's32[1]{0}', space=sflag, size = 0x4, scoped, tag = 'scoped memory for tpu_custom_call.1']
    #allocation16 [shape = 'u8[262144]{0}', space=vmem, size = 0x40000, scoped, tag = 'input window, operand 6, single buffered']
    #allocation17 [shape = 'u8[2048]{0}', space=vmem, size = 0x800, scoped, tag = 'input window, operand 7, single buffered']
    #allocation18 [shape = 's32[1]{0}', space=sflag, size = 0x4, scoped, tag = 'scoped memory for tpu_custom_call.1']
    #allocation19 [shape = 'u8[2048]{0}', space=vmem, size = 0x800, scoped, tag = 'input window, operand 8, single buffered']
    #allocation20 [shape = 'u8[4096]{0}', space=vmem, size = 0x1000, scoped, tag = 'input window, operand 10, single buffered']
    #allocation21 [shape = 's32[1]{0}', space=sflag, size = 0x4, scoped, tag = 'scoped memory for tpu_custom_call.1']
    #allocation22 [shape = 'u8[4096]{0}', space=vmem, size = 0x1000, scoped, tag = 'input window, operand 11, single buffered']
    #allocation23 [shape = 'u8[3584]{0}', space=vmem, size = 0x1000, scoped, tag = 'input window, operand 13, single buffered']
    #allocation24 [shape = 's32[1]{0}', space=sflag, size = 0x4, scoped, tag = 'scoped memory for tpu_custom_call.1']
    #allocation25 [shape = 'u8[28672]{0}', space=vmem, size = 0x7000, scoped, tag = 'output window, operand 0, single buffered']
    #allocation27 [shape = 'u32[9]{0}', space=smem, size = 0x24, scoped, tag = 'DMA stride descriptor']
    #allocation29 [shape = 'u32[9]{0}', space=smem, size = 0x24, scoped, tag = 'DMA stride descriptor']
    %19 = vsyncpa [#allocation6], 0
    %20 = vsyncpa [#allocation9], 0
    %21 = vsyncpa [#allocation12], 0
    %22 = vsyncpa [#allocation15], 0
    %23 = vsyncpa [#allocation18], 0
    %24 = vsyncpa [#allocation21], 0
    %25 = vsyncpa [#allocation24], 0
    %26 = vsyncpa [#allocation7], 0
    // Predicated region
    $region2: #{tpu_custom_call.1} parent=1 // pred_check
      _
    $region3: #{tpu_custom_call.1} parent=1 // pred_check_branch
      %28 = sbr.rel (0) target = $region5
    $region4: #{tpu_custom_call.1} parent=1 // pred_region
      %s30 = ssub.s32 64, 64
      %31 = vsyncadd [#allocation6], %s30
      %s33 = sshll.u32 [#allocation5], 4
      %s34 = int_to_ptr.vmem [resolvable:$true] %s33
      %36 = dma.hbm_to_vmem [thread:$0]  %s0, 64, %s34, [#allocation6]
    $region5: #{tpu_custom_call.1} parent=1 // pred_fallthru
      _
    // Predicated region
    $region6: #{tpu_custom_call.1} parent=1 // pred_check
      _
    $region7: #{tpu_custom_call.1} parent=1 // pred_check_branch
      %38 = sbr.rel (0) target = $region9
    $region8: #{tpu_custom_call.1} parent=1 // pred_region
      %s40 = ssub.s32 1024, 1024
      %41 = vsyncadd [#allocation9], %s40
      %s42 = sshll.u32 [#allocation8], 4
      %s43 = int_to_ptr.vmem [resolvable:$true] %s42
      %48 = dma.hbm_to_vmem [thread:$0]  %s1, 1024, %s43, [#allocation9], 64, 64, 4
    $region9: #{tpu_custom_call.1} parent=1 // pred_fallthru
      _
    // Predicated region
    $region10: #{tpu_custom_call.1} parent=1 // pred_check
      _
    $region11: #{tpu_custom_call.1} parent=1 // pred_check_branch
      %50 = sbr.rel (0) target = $region13
    $region12: #{tpu_custom_call.1} parent=1 // pred_region
      %s52 = ssub.s32 16, 16
      %53 = vsyncadd [#allocation9], %s52
      %s55 = sshll.u32 [#allocation10], 4
      %s56 = int_to_ptr.vmem [resolvable:$true] %s55
      %58 = dma.hbm_to_vmem [thread:$0]  %s2, 16, %s56, [#allocation9]
    $region13: #{tpu_custom_call.1} parent=1 // pred_fallthru
      _
    // Predicated region
    $region14: #{tpu_custom_call.1} parent=1 // pred_check
      _
    $region15: #{tpu_custom_call.1} parent=1 // pred_check_branch
      %60 = sbr.rel (0) target = $region17
    $region16: #{tpu_custom_call.1} parent=1 // pred_region
      %s62 = ssub.s32 2048, 2048
      %63 = vsyncadd [#allocation12], %s62
      %s64 = sshll.u32 [#allocation11], 4
      %s65 = int_to_ptr.vmem [resolvable:$true] %s64
      %70 = dma.hbm_to_vmem [thread:$0]  %s3, 2048, %s65, [#allocation12], 128, 128, 8
    $region17: #{tpu_custom_call.1} parent=1 // pred_fallthru
      _
    // Predicated region
    $region18: #{tpu_custom_call.1} parent=1 // pred_check
      _
    $region19: #{tpu_custom_call.1} parent=1 // pred_check_branch
      %72 = sbr.rel (0) target = $region21
    $region20: #{tpu_custom_call.1} parent=1 // pred_region
      %s74 = ssub.s32 32, 32
      %75 = vsyncadd [#allocation12], %s74
      %s77 = sshll.u32 [#allocation13], 4
      %s78 = int_to_ptr.vmem [resolvable:$true] %s77
      %80 = dma.hbm_to_vmem [thread:$0]  %s4, 32, %s78, [#allocation12]
    $region21: #{tpu_custom_call.1} parent=1 // pred_fallthru
      _
    // Predicated region
    $region22: #{tpu_custom_call.1} parent=1 // pred_check
      _
    $region23: #{tpu_custom_call.1} parent=1 // pred_check_branch
      %82 = sbr.rel (0) target = $region25
    $region24: #{tpu_custom_call.1} parent=1 // pred_region
      %s84 = ssub.s32 32, 32
      %85 = vsyncadd [#allocation15], %s84
      %s87 = sshll.u32 [#allocation14], 4
      %s88 = int_to_ptr.vmem [resolvable:$true] %s87
      %90 = dma.hbm_to_vmem [thread:$0]  %s5, 32, %s88, [#allocation15]
    $region25: #{tpu_custom_call.1} parent=1 // pred_fallthru
      _
    // Predicated region
    $region26: #{tpu_custom_call.1} parent=1 // pred_check
      _
    $region27: #{tpu_custom_call.1} parent=1 // pred_check_branch
      %92 = sbr.rel (0) target = $region29
    $region28: #{tpu_custom_call.1} parent=1 // pred_region
      %s94 = ssub.s32 8192, 8192
      %95 = vsyncadd [#allocation15], %s94
      %s96 = sshll.u32 [#allocation16], 4
      %s97 = int_to_ptr.vmem [resolvable:$true] %s96
      %102 = dma.hbm_to_vmem [thread:$0]  %s6, 8192, %s97, [#allocation15], 256, 256, 16
    $region29: #{tpu_custom_call.1} parent=1 // pred_fallthru
      _
    // Predicated region
    $region30: #{tpu_custom_call.1} parent=1 // pred_check
      _
    $region31: #{tpu_custom_call.1} parent=1 // pred_check_branch
      %104 = sbr.rel (0) target = $region33
    $region32: #{tpu_custom_call.1} parent=1 // pred_region
      %s106 = ssub.s32 64, 64
      %107 = vsyncadd [#allocation18], %s106
      %s109 = sshll.u32 [#allocation17], 4
      %s110 = int_to_ptr.vmem [resolvable:$true] %s109
      %112 = dma.hbm_to_vmem [thread:$0]  %s7, 64, %s110, [#allocation18]
    $region33: #{tpu_custom_call.1} parent=1 // pred_fallthru
      _
    // Predicated region
    $region34: #{tpu_custom_call.1} parent=1 // pred_check
      _
    $region35: #{tpu_custom_call.1} parent=1 // pred_check_branch
      %114 = sbr.rel (0) target = $region37
    $region36: #{tpu_custom_call.1} parent=1 // pred_region
      %s116 = ssub.s32 64, 64
      %117 = vsyncadd [#allocation18], %s116
      %s119 = sshll.u32 [#allocation19], 4
      %s120 = int_to_ptr.vmem [resolvable:$true] %s119
      %122 = dma.hbm_to_vmem [thread:$0]  %s8, 64, %s120, [#allocation18]
    $region37: #{tpu_custom_call.1} parent=1 // pred_fallthru
      _
    // Predicated region
    $region38: #{tpu_custom_call.1} parent=1 // pred_check
      _
    $region39: #{tpu_custom_call.1} parent=1 // pred_check_branch
      %124 = sbr.rel (0) target = $region41
    $region40: #{tpu_custom_call.1} parent=1 // pred_region
      %s126 = ssub.s32 128, 128
      %127 = vsyncadd [#allocation21], %s126
      %s129 = sshll.u32 [#allocation20], 4
      %s130 = int_to_ptr.vmem [resolvable:$true] %s129
      %132 = dma.hbm_to_vmem [thread:$0]  %s10, 128, %s130, [#allocation21]
    $region41: #{tpu_custom_call.1} parent=1 // pred_fallthru
      _
    // Predicated region
    $region42: #{tpu_custom_call.1} parent=1 // pred_check
      _
    $region43: #{tpu_custom_call.1} parent=1 // pred_check_branch
      %134 = sbr.rel (0) target = $region45
    $region44: #{tpu_custom_call.1} parent=1 // pred_region
      %s136 = ssub.s32 128, 128
      %137 = vsyncadd [#allocation21], %s136
      %s139 = sshll.u32 [#allocation22], 4
      %s140 = int_to_ptr.vmem [resolvable:$true] %s139
      %142 = dma.hbm_to_vmem [thread:$0]  %s11, 128, %s140, [#allocation21]
    $region45: #{tpu_custom_call.1} parent=1 // pred_fallthru
      _
    // Predicated region
    $region46: #{tpu_custom_call.1} parent=1 // pred_check
      _
    $region47: #{tpu_custom_call.1} parent=1 // pred_check_branch
      %144 = sbr.rel (0) target = $region49
    $region48: #{tpu_custom_call.1} parent=1 // pred_region
      %s146 = ssub.s32 112, 112
      %147 = vsyncadd [#allocation24], %s146
      %s149 = sshll.u32 [#allocation23], 4
      %s150 = int_to_ptr.vmem [resolvable:$true] %s149
      %152 = dma.hbm_to_vmem [thread:$0]  %s13, 112, %s150, [#allocation24]
    $region49: #{tpu_custom_call.1} parent=1 // pred_fallthru
      _
    // Predicated region
    $region50: #{tpu_custom_call.1} parent=1 // pred_check
      _
    $region51: #{tpu_custom_call.1} parent=1 // pred_check_branch
      %154 = sbr.rel (0) target = $region53
    $region52: #{tpu_custom_call.1} parent=1 // pred_region
      %155 = dma.done [#allocation6], 64
    $region53: #{tpu_custom_call.1} parent=1 // pred_fallthru
      _
    // Predicated region
    $region54: #{tpu_custom_call.1} parent=1 // pred_check
      _
    $region55: #{tpu_custom_call.1} parent=1 // pred_check_branch
      %157 = sbr.rel (0) target = $region57
    $region56: #{tpu_custom_call.1} parent=1 // pred_region
      %158 = dma.done [#allocation9], 1024
    $region57: #{tpu_custom_call.1} parent=1 // pred_fallthru
      _
    // Predicated region
    $region58: #{tpu_custom_call.1} parent=1 // pred_check
      _
    $region59: #{tpu_custom_call.1} parent=1 // pred_check_branch
      %160 = sbr.rel (0) target = $region61
    $region60: #{tpu_custom_call.1} parent=1 // pred_region
      %161 = dma.done [#allocation9], 16
    $region61: #{tpu_custom_call.1} parent=1 // pred_fallthru
      _
    // Predicated region
    $region62: #{tpu_custom_call.1} parent=1 // pred_check
      _
    $region63: #{tpu_custom_call.1} parent=1 // pred_check_branch
      %163 = sbr.rel (0) target = $region65
    $region64: #{tpu_custom_call.1} parent=1 // pred_region
      %164 = dma.done [#allocation12], 2048
    $region65: #{tpu_custom_call.1} parent=1 // pred_fallthru
      _
    // Predicated region
    $region66: #{tpu_custom_call.1} parent=1 // pred_check
      _
    $region67: #{tpu_custom_call.1} parent=1 // pred_check_branch
      %166 = sbr.rel (0) target = $region69
    $region68: #{tpu_custom_call.1} parent=1 // pred_region
      %167 = dma.done [#allocation12], 32
    $region69: #{tpu_custom_call.1} parent=1 // pred_fallthru
      _
    // Predicated region
    $region70: #{tpu_custom_call.1} parent=1 // pred_check
      _
    $region71: #{tpu_custom_call.1} parent=1 // pred_check_branch
      %169 = sbr.rel (0) target = $region73
    $region72: #{tpu_custom_call.1} parent=1 // pred_region
      %170 = dma.done [#allocation15], 32
    $region73: #{tpu_custom_call.1} parent=1 // pred_fallthru
      _
    // Predicated region
    $region74: #{tpu_custom_call.1} parent=1 // pred_check
      _
    $region75: #{tpu_custom_call.1} parent=1 // pred_check_branch
      %172 = sbr.rel (0) target = $region77
    $region76: #{tpu_custom_call.1} parent=1 // pred_region
      %173 = dma.done [#allocation15], 8192
    $region77: #{tpu_custom_call.1} parent=1 // pred_fallthru
      _
    // Predicated region
    $region78: #{tpu_custom_call.1} parent=1 // pred_check
      _
    $region79: #{tpu_custom_call.1} parent=1 // pred_check_branch
      %175 = sbr.rel (0) target = $region81
    $region80: #{tpu_custom_call.1} parent=1 // pred_region
      %176 = dma.done [#allocation18], 64
    $region81: #{tpu_custom_call.1} parent=1 // pred_fallthru
      _
    // Predicated region
    $region82: #{tpu_custom_call.1} parent=1 // pred_check
      _
    $region83: #{tpu_custom_call.1} parent=1 // pred_check_branch
      %178 = sbr.rel (0) target = $region85
    $region84: #{tpu_custom_call.1} parent=1 // pred_region
      %179 = dma.done [#allocation18], 64
    $region85: #{tpu_custom_call.1} parent=1 // pred_fallthru
      _
    // Predicated region
    $region86: #{tpu_custom_call.1} parent=1 // pred_check
      _
    $region87: #{tpu_custom_call.1} parent=1 // pred_check_branch
      %181 = sbr.rel (0) target = $region89
    $region88: #{tpu_custom_call.1} parent=1 // pred_region
      %182 = dma.done [#allocation21], 128
    $region89: #{tpu_custom_call.1} parent=1 // pred_fallthru
      _
    // Predicated region
    $region90: #{tpu_custom_call.1} parent=1 // pred_check
      _
    $region91: #{tpu_custom_call.1} parent=1 // pred_check_branch
      %184 = sbr.rel (0) target = $region93
    $region92: #{tpu_custom_call.1} parent=1 // pred_region
      %185 = dma.done [#allocation21], 128
    $region93: #{tpu_custom_call.1} parent=1 // pred_fallthru
      _
    // Predicated region
    $region94: #{tpu_custom_call.1} parent=1 // pred_check
      _
    $region95: #{tpu_custom_call.1} parent=1 // pred_check_branch
      %187 = sbr.rel (0) target = $region97
    $region96: #{tpu_custom_call.1} parent=1 // pred_region
      %188 = dma.done [#allocation24], 112
    $region97: #{tpu_custom_call.1} parent=1 // pred_fallthru
      _
    %s191 = sshll.u32 1, 14
    %s192 = sxor.u32 4294967295, %s191
    %s194 = sld [smem:[#allocation0]]
    %s195 = sadd.s32 2, %s194
    %s197 = sshll.u32 7, 26
    %s198 = sxor.u32 4294967295, %s197
    %s199 = sand.u32 0, %s198
    %s200 = sshll.u32 %s195, 26
    %s201 = sor.u32 %s199, %s200
    %s202 = sshll.u32 [#allocation2], 4
    %s203 = int_to_ptr.vmem [resolvable:$true] %s202
    %206 = sst [smem:[#allocation27]] 1024
    %s207 = scalar_lea.smem [#allocation27], 1
    %208 = sst [smem:[%s207]] 1024
    %s209 = scalar_lea.smem [#allocation27], 2
    %210 = sst [smem:[%s209]] 8
    %s211 = scalar_lea.smem [#allocation27], 3
    %212 = sst [smem:[%s211]] 64
    %s213 = scalar_lea.smem [#allocation27], 4
    %214 = sst [smem:[%s213]] 128
    %s215 = scalar_lea.smem [#allocation27], 5
    %216 = sst [smem:[%s215]] 2
    %s217 = scalar_lea.smem [#allocation27], 6
    %218 = sst [smem:[%s217]] 512
    %s219 = scalar_lea.smem [#allocation27], 7
    %220 = sst [smem:[%s219]] 64
    %s221 = scalar_lea.smem [#allocation27], 8
    %222 = sst [smem:[%s221]] 4
    %224 = dma.general %s9, 32768, %s203, [#allocation4], [#allocation26], [#allocation27], %s201, 0
    %s225 = scalar_lea.sflag [#allocation4], 1
    %s227 = sshll.u32 1, 14
    %s228 = sxor.u32 4294967295, %s227
    %s230 = sadd.s32 2, %s194
    %s232 = sshll.u32 7, 26
    %s233 = sxor.u32 4294967295, %s232
    %s234 = sand.u32 0, %s233
    %s235 = sshll.u32 %s230, 26
    %s236 = sor.u32 %s234, %s235
    %s237 = sshll.u32 [#allocation3], 4
    %s238 = int_to_ptr.vmem [resolvable:$true] %s237
    %241 = sst [smem:[#allocation29]] 896
    %s242 = scalar_lea.smem [#allocation29], 1
    %243 = sst [smem:[%s242]] 896
    %s244 = scalar_lea.smem [#allocation29], 2
    %245 = sst [smem:[%s244]] 7
    %s246 = scalar_lea.smem [#allocation29], 3
    %247 = sst [smem:[%s246]] 64
    %s248 = scalar_lea.smem [#allocation29], 4
    %249 = sst [smem:[%s248]] 128
    %s250 = scalar_lea.smem [#allocation29], 5
    %251 = sst [smem:[%s250]] 2
    %s252 = scalar_lea.smem [#allocation29], 6
    %253 = sst [smem:[%s252]] 448
    %s254 = scalar_lea.smem [#allocation29], 7
    %255 = sst [smem:[%s254]] 64
    %s256 = scalar_lea.smem [#allocation29], 8
    %257 = sst [smem:[%s256]] 4
    %259 = dma.general %s12, 57344, %s238, %s225, [#allocation28], [#allocation29], %s236, 0
    %v260 = vlaneseq
    %v261 = vand.u32 %v260, 127
    %vm262 = vcmp.lt.s32.totalorder %v261, 8
    %v263 = vsel %vm262, 1, 0
    %v264 = vcvt.s32.f32 %v263
    %v265 = vld [vmem:[#allocation5] sm:$0xf]
    %v266 = vld [vmem:[#allocation8] sm:$0xf]
    %v267 = vld [vmem:[#allocation8 + $0x4] sm:$0xf]
    %v268 = vld [vmem:[#allocation8 + $0x8] sm:$0xf]
    %v269 = vld [vmem:[#allocation8 + $0xc] sm:$0xf]
    %v270 = vld [vmem:[#allocation8 + $0x10] sm:$0xf]
    %v271 = vld [vmem:[#allocation8 + $0x14] sm:$0xf]
    %v272 = vld [vmem:[#allocation8 + $0x18] sm:$0xf]
    %v273 = vld [vmem:[#allocation8 + $0x1c] sm:$0xf]
    %v274 = vld [vmem:[#allocation8 + $0x20] sm:$0xf]
    %v275 = vld [vmem:[#allocation8 + $0x24] sm:$0xf]
    %v276 = vld [vmem:[#allocation8 + $0x28] sm:$0xf]
    %v277 = vld [vmem:[#allocation8 + $0x2c] sm:$0xf]
    %v278 = vld [vmem:[#allocation8 + $0x30] sm:$0xf]
    %v279 = vld [vmem:[#allocation8 + $0x34] sm:$0xf]
    %v280 = vld [vmem:[#allocation8 + $0x38] sm:$0xf]
    %v281 = vld [vmem:[#allocation8 + $0x3c] sm:$0xf]
    %v282 = vld [vmem:[#allocation10] sm:$0x1]
    %v284 = vlaneseq
    %v285 = vshrl.u32 %v284, 7
    %v286 = vsub.s32 0, %v285
    %v287 = vrot.slane %v282, %v286
    %v305 = vunpack.c.l.b16 %v266
    %v306 = vunpack.c.l.b16 %v267
    %v307 = vunpack.c.l.b16 %v268
    %v308 = vunpack.c.l.b16 %v269
    %v309 = vunpack.c.l.b16 %v270
    %v310 = vunpack.c.l.b16 %v271
    %v311 = vunpack.c.l.b16 %v272
    %v312 = vunpack.c.l.b16 %v273
    %v313 = vunpack.c.l.b16 %v274
    %v314 = vunpack.c.l.b16 %v275
    %v315 = vunpack.c.l.b16 %v276
    %v316 = vunpack.c.l.b16 %v277
    %v317 = vunpack.c.l.b16 %v278
    %v318 = vunpack.c.l.b16 %v279
    %v319 = vunpack.c.l.b16 %v280
    %v320 = vunpack.c.l.b16 %v281
    %v321 = vpack.c.b16 %v306, %v305
    %v322 = vpack.c.b16 %v308, %v307
    %v323 = vpack.c.b16 %v310, %v309
    %v324 = vpack.c.b16 %v312, %v311
    %v325 = vpack.c.b16 %v314, %v313
    %v326 = vpack.c.b16 %v316, %v315
    %v327 = vpack.c.b16 %v318, %v317
    %v328 = vpack.c.b16 %v320, %v319
    %337 = vmatprep.subr.bf16.mxu0 0
    %338 = vmatpush1.bf16.msra.mxu0 %v321
    %339 = vmatprep.subr.bf16.mxu0 0
    %340 = vmatpush1.bf16.msra.mxu0 %v322
    %341 = vmatprep.subr.bf16.mxu0 0
    %342 = vmatpush1.bf16.msra.mxu0 %v323
    %343 = vmatprep.subr.bf16.mxu0 0
    %344 = vmatpush1.bf16.msra.mxu0 %v324
    %345 = vmatprep.subr.bf16.mxu0 0
    %346 = vmatpush1.bf16.msra.mxu0 %v325
    %347 = vmatprep.subr.bf16.mxu0 0
    %348 = vmatpush1.bf16.msra.mxu0 %v326
    %349 = vmatprep.subr.bf16.mxu0 0
    %350 = vmatpush1.bf16.msra.mxu0 %v327
    %351 = vmatprep.subr.bf16.mxu0 0
    %352 = vmatpush1.bf16.msra.mxu0 %v328
    %353 = vmatprep.subr.bf16.mxu0 0
    %354 = vmatpush1.bf16.msra.mxu0 0
    %355 = vmatprep.subr.bf16.mxu0 0
    %356 = vmatpush1.bf16.msra.mxu0 0
    %357 = vmatprep.subr.bf16.mxu0 0
    %358 = vmatpush1.bf16.msra.mxu0 0
    %359 = vmatprep.subr.bf16.mxu0 0
    %360 = vmatpush1.bf16.msra.mxu0 0
    %361 = vmatprep.subr.bf16.mxu0 0
    %362 = vmatpush1.bf16.msra.mxu0 0
    %363 = vmatprep.subr.bf16.mxu0 0
    %364 = vmatpush1.bf16.msra.mxu0 0
    %365 = vmatprep.subr.bf16.mxu0 0
    %366 = vmatpush1.bf16.msra.mxu0 0
    %367 = vmatprep.subr.bf16.mxu0 0
    %368 = vmatpush1.bf16.msra.mxu0 0
    %369 = vmatprep.mubr.bf16.mxu0 0
    %370 = vmatmul.mubr.bf16.gmra.mrb[0].mxu0 %v265
    %v371 = vpop.f32.mrb[0].mxu0
    %v372 = vadd.f32 %v287, %v371
    %v373 = vpop.f32.mrb[0].mxu0
    %v374 = vpop.f32.mrb[0].mxu0
    %v375 = vpop.f32.mrb[0].mxu0
    %376 = vdwg.mxu0
    %v377 = vmul.f32 %v372, 0.2
    %v378 = vmax.f32 %v372, %v377
    %v379 = vpack.c.bf16 %v378, %v378
    %v380 = vld [vmem:[#allocation11] sm:$0xff]
    %v381 = vld [vmem:[#allocation11 + $0x8] sm:$0xff]
    %v382 = vld [vmem:[#allocation11 + $0x10] sm:$0xff]
    %v383 = vld [vmem:[#allocation11 + $0x18] sm:$0xff]
    %v384 = vld [vmem:[#allocation11 + $0x20] sm:$0xff]
    %v385 = vld [vmem:[#allocation11 + $0x28] sm:$0xff]
    %v386 = vld [vmem:[#allocation11 + $0x30] sm:$0xff]
    %v387 = vld [vmem:[#allocation11 + $0x38] sm:$0xff]
    %v388 = vld [vmem:[#allocation11 + $0x40] sm:$0xff]
    %v389 = vld [vmem:[#allocation11 + $0x48] sm:$0xff]
    %v390 = vld [vmem:[#allocation11 + $0x50] sm:$0xff]
    %v391 = vld [vmem:[#allocation11 + $0x58] sm:$0xff]
    %v392 = vld [vmem:[#allocation11 + $0x60] sm:$0xff]
    %v393 = vld [vmem:[#allocation11 + $0x68] sm:$0xff]
    %v394 = vld [vmem:[#allocation11 + $0x70] sm:$0xff]
    %v395 = vld [vmem:[#allocation11 + $0x78] sm:$0xff]
    %v412 = vunpack.c.l.b16 %v380
    %v413 = vunpack.c.h.b16 %v380
    %v414 = vunpack.c.l.b16 %v381
    %v415 = vunpack.c.h.b16 %v381
    %v416 = vunpack.c.l.b16 %v382
    %v417 = vunpack.c.h.b16 %v382
    %v418 = vunpack.c.l.b16 %v383
    %v419 = vunpack.c.h.b16 %v383
    %v420 = vunpack.c.l.b16 %v384
    %v421 = vunpack.c.h.b16 %v384
    %v422 = vunpack.c.l.b16 %v385
    %v423 = vunpack.c.h.b16 %v385
    %v424 = vunpack.c.l.b16 %v386
    %v425 = vunpack.c.h.b16 %v386
    %v426 = vunpack.c.l.b16 %v387
    %v427 = vunpack.c.h.b16 %v387
    %v428 = vunpack.c.l.b16 %v388
    %v429 = vunpack.c.h.b16 %v388
    %v430 = vunpack.c.l.b16 %v389
    %v431 = vunpack.c.h.b16 %v389
    %v432 = vunpack.c.l.b16 %v390
    %v433 = vunpack.c.h.b16 %v390
    %v434 = vunpack.c.l.b16 %v391
    %v435 = vunpack.c.h.b16 %v391
    %v436 = vunpack.c.l.b16 %v392
    %v437 = vunpack.c.h.b16 %v392
    %v438 = vunpack.c.l.b16 %v393
    %v439 = vunpack.c.h.b16 %v393
    %v440 = vunpack.c.l.b16 %v394
    %v441 = vunpack.c.h.b16 %v394
    %v442 = vunpack.c.l.b16 %v395
    %v443 = vunpack.c.h.b16 %v395
    %v444 = vpack.c.b16 %v414, %v412
    %v445 = vpack.c.b16 %v415, %v413
    %v446 = vpack.c.b16 %v418, %v416
    %v447 = vpack.c.b16 %v419, %v417
    %v448 = vpack.c.b16 %v422, %v420
    %v449 = vpack.c.b16 %v423, %v421
    %v450 = vpack.c.b16 %v426, %v424
    %v451 = vpack.c.b16 %v427, %v425
    %v452 = vpack.c.b16 %v430, %v428
    %v453 = vpack.c.b16 %v431, %v429
    %v454 = vpack.c.b16 %v434, %v432
    %v455 = vpack.c.b16 %v435, %v433
    %v456 = vpack.c.b16 %v438, %v436
    %v457 = vpack.c.b16 %v439, %v437
    %v458 = vpack.c.b16 %v442, %v440
    %v459 = vpack.c.b16 %v443, %v441
    %476 = vmatprep.subr.bf16.mxu0 %v445
    %477 = vmatpush1.bf16.msra.mxu0 %v444
    %478 = vmatprep.subr.bf16.mxu0 %v447
    %479 = vmatpush1.bf16.msra.mxu0 %v446
    %480 = vmatprep.subr.bf16.mxu0 %v449
    %481 = vmatpush1.bf16.msra.mxu0 %v448
    %482 = vmatprep.subr.bf16.mxu0 %v451
    %483 = vmatpush1.bf16.msra.mxu0 %v450
    %484 = vmatprep.subr.bf16.mxu0 %v453
    %485 = vmatpush1.bf16.msra.mxu0 %v452
    %486 = vmatprep.subr.bf16.mxu0 %v455
    %487 = vmatpush1.bf16.msra.mxu0 %v454
    %488 = vmatprep.subr.bf16.mxu0 %v457
    %489 = vmatpush1.bf16.msra.mxu0 %v456
    %490 = vmatprep.subr.bf16.mxu0 %v459
    %491 = vmatpush1.bf16.msra.mxu0 %v458
    %492 = vmatprep.subr.bf16.mxu0 0
    %493 = vmatpush1.bf16.msra.mxu0 0
    %494 = vmatprep.subr.bf16.mxu0 0
    %495 = vmatpush1.bf16.msra.mxu0 0
    %496 = vmatprep.subr.bf16.mxu0 0
    %497 = vmatpush1.bf16.msra.mxu0 0
    %498 = vmatprep.subr.bf16.mxu0 0
    %499 = vmatpush1.bf16.msra.mxu0 0
    %500 = vmatprep.subr.bf16.mxu0 0
    %501 = vmatpush1.bf16.msra.mxu0 0
    %502 = vmatprep.subr.bf16.mxu0 0
    %503 = vmatpush1.bf16.msra.mxu0 0
    %504 = vmatprep.subr.bf16.mxu0 0
    %505 = vmatpush1.bf16.msra.mxu0 0
    %506 = vmatprep.subr.bf16.mxu0 0
    %507 = vmatpush1.bf16.msra.mxu0 0
    %508 = vmatprep.mubr.bf16.mxu0 0
    %509 = vmatmul.mubr.bf16.gmra.mrb[0].mxu0 %v379
    %v510 = vpop.f32.mrb[0].mxu0
    %v511 = vadd.f32 0.0, %v510
    %v512 = vpop.f32.mrb[0].mxu0
    %v513 = vadd.f32 0.0, %v512
    %v514 = vpop.f32.mrb[0].mxu0
    %v515 = vpop.f32.mrb[0].mxu0
    %516 = vdwg.mxu0
    %v517 = vld [vmem:[#allocation13] sm:$0x3]
    %v518 = vld [vmem:[#allocation14] sm:$0x3]
    %vm519 = vcmask 64512
    %v521 = vsel %vm519, %v264, 0
    %523 = vmatprep.subr.mxu0 %v513
    %524 = vmatpush1.msra.mxu0 %v511
    %525 = vmatprep.subr.mxu0 0.0
    %526 = vmatpush1.msra.mxu0 0.0
    %527 = vmatprep.subr.mxu0 0.0
    %528 = vmatpush1.msra.mxu0 0.0
    %529 = vmatprep.subr.mxu0 0.0
    %530 = vmatpush1.msra.mxu0 0.0
    %531 = vmatprep.subr.mxu0 0.0
    %532 = vmatpush1.msra.mxu0 0.0
    %533 = vmatprep.subr.mxu0 0.0
    %534 = vmatpush1.msra.mxu0 0.0
    %535 = vmatprep.subr.mxu0 0.0
    %536 = vmatpush1.msra.mxu0 0.0
    %537 = vmatprep.subr.mxu0 0.0
    %538 = vmatpush1.msra.mxu0 0.0
    %539 = vmatprep.subr.mxu0 0.0
    %540 = vmatpush1.msra.mxu0 0.0
    %541 = vmatprep.subr.mxu0 0.0
    %542 = vmatpush1.msra.mxu0 0.0
    %543 = vmatprep.subr.mxu0 0.0
    %544 = vmatpush1.msra.mxu0 0.0
    %545 = vmatprep.subr.mxu0 0.0
    %546 = vmatpush1.msra.mxu0 0.0
    %547 = vmatprep.subr.mxu0 0.0
    %548 = vmatpush1.msra.mxu0 0.0
    %549 = vmatprep.subr.mxu0 0.0
    %550 = vmatpush1.msra.mxu0 0.0
    %551 = vmatprep.subr.mxu0 0.0
    %552 = vmatpush1.msra.mxu0 0.0
    %553 = vmatprep.subr.mxu0 0.0
    %554 = vmatpush1.msra.mxu0 0.0
    %555 = vmatprep.subr.mxu0 0.0
    %556 = vmatpush1.msra.mxu0 0.0
    %557 = vmatprep.subr.mxu0 0.0
    %558 = vmatpush1.msra.mxu0 0.0
    %559 = vmatprep.subr.mxu0 0.0
    %560 = vmatpush1.msra.mxu0 0.0
    %561 = vmatprep.subr.mxu0 0.0
    %562 = vmatpush1.msra.mxu0 0.0
    %563 = vmatprep.subr.mxu0 0.0
    %564 = vmatpush1.msra.mxu0 0.0
    %565 = vmatprep.subr.mxu0 0.0
    %566 = vmatpush1.msra.mxu0 0.0
    %567 = vmatprep.subr.mxu0 0.0
    %568 = vmatpush1.msra.mxu0 0.0
    %569 = vmatprep.subr.mxu0 0.0
    %570 = vmatpush1.msra.mxu0 0.0
    %571 = vmatprep.subr.mxu0 0.0
    %572 = vmatpush1.msra.mxu0 0.0
    %573 = vmatprep.subr.mxu0 0.0
    %574 = vmatpush1.msra.mxu0 0.0
    %575 = vmatprep.subr.mxu0 0.0
    %576 = vmatpush1.msra.mxu0 0.0
    %577 = vmatprep.subr.mxu0 0.0
    %578 = vmatpush1.msra.mxu0 0.0
    %579 = vmatprep.subr.mxu0 0.0
    %580 = vmatpush1.msra.mxu0 0.0
    %581 = vmatprep.subr.mxu0 0.0
    %582 = vmatpush1.msra.mxu0 0.0
    %583 = vmatprep.subr.mxu0 0.0
    %584 = vmatpush1.msra.mxu0 0.0
    %585 = vmatprep.subr.mxu0 0.0
    %586 = vmatpush1.msra.mxu0 0.0
    %587 = vmatprep.mubr.f32.mxu0 0.0
    %588 = vmatmul.mubr.f32.gmra.mrb[0].mxu0 %v521
    %v589 = vpop.f32.mrb[0].mxu0
    %v590 = vadd.f32 0.0, %v589
    %v591 = vpop.f32.mrb[0].mxu0
    %v592 = vadd.f32 0.0, %v591
    %593 = vdwg.mxu0
    %v594 = vmul.f32 %v511, %v511
    %v595 = vmul.f32 %v513, %v513
    %596 = vmatprep.subr.mxu0 %v595
    %597 = vmatpush1.msra.mxu0 %v594
    %598 = vmatprep.subr.mxu0 0.0
    %599 = vmatpush1.msra.mxu0 0.0
    %600 = vmatprep.subr.mxu0 0.0
    %601 = vmatpush1.msra.mxu0 0.0
    %602 = vmatprep.subr.mxu0 0.0
    %603 = vmatpush1.msra.mxu0 0.0
    %604 = vmatprep.subr.mxu0 0.0
    %605 = vmatpush1.msra.mxu0 0.0
    %606 = vmatprep.subr.mxu0 0.0
    %607 = vmatpush1.msra.mxu0 0.0
    %608 = vmatprep.subr.mxu0 0.0
    %609 = vmatpush1.msra.mxu0 0.0
    %610 = vmatprep.subr.mxu0 0.0
    %611 = vmatpush1.msra.mxu0 0.0
    %612 = vmatprep.subr.mxu0 0.0
    %613 = vmatpush1.msra.mxu0 0.0
    %614 = vmatprep.subr.mxu0 0.0
    %615 = vmatpush1.msra.mxu0 0.0
    %616 = vmatprep.subr.mxu0 0.0
    %617 = vmatpush1.msra.mxu0 0.0
    %618 = vmatprep.subr.mxu0 0.0
    %619 = vmatpush1.msra.mxu0 0.0
    %620 = vmatprep.subr.mxu0 0.0
    %621 = vmatpush1.msra.mxu0 0.0
    %622 = vmatprep.subr.mxu0 0.0
    %623 = vmatpush1.msra.mxu0 0.0
    %624 = vmatprep.subr.mxu0 0.0
    %625 = vmatpush1.msra.mxu0 0.0
    %626 = vmatprep.subr.mxu0 0.0
    %627 = vmatpush1.msra.mxu0 0.0
    %628 = vmatprep.subr.mxu0 0.0
    %629 = vmatpush1.msra.mxu0 0.0
    %630 = vmatprep.subr.mxu0 0.0
    %631 = vmatpush1.msra.mxu0 0.0
    %632 = vmatprep.subr.mxu0 0.0
    %633 = vmatpush1.msra.mxu0 0.0
    %634 = vmatprep.subr.mxu0 0.0
    %635 = vmatpush1.msra.mxu0 0.0
    %636 = vmatprep.subr.mxu0 0.0
    %637 = vmatpush1.msra.mxu0 0.0
    %638 = vmatprep.subr.mxu0 0.0
    %639 = vmatpush1.msra.mxu0 0.0
    %640 = vmatprep.subr.mxu0 0.0
    %641 = vmatpush1.msra.mxu0 0.0
    %642 = vmatprep.subr.mxu0 0.0
    %643 = vmatpush1.msra.mxu0 0.0
    %644 = vmatprep.subr.mxu0 0.0
    %645 = vmatpush1.msra.mxu0 0.0
    %646 = vmatprep.subr.mxu0 0.0
    %647 = vmatpush1.msra.mxu0 0.0
    %648 = vmatprep.subr.mxu0 0.0
    %649 = vmatpush1.msra.mxu0 0.0
    %650 = vmatprep.subr.mxu0 0.0
    %651 = vmatpush1.msra.mxu0 0.0
    %652 = vmatprep.subr.mxu0 0.0
    %653 = vmatpush1.msra.mxu0 0.0
    %654 = vmatprep.subr.mxu0 0.0
    %655 = vmatpush1.msra.mxu0 0.0
    %656 = vmatprep.subr.mxu0 0.0
    %657 = vmatpush1.msra.mxu0 0.0
    %658 = vmatprep.subr.mxu0 0.0
    %659 = vmatpush1.msra.mxu0 0.0
    %660 = vmatprep.mubr.f32.mxu0 0.0
    %661 = vmatmul.mubr.f32.gmra.mrb[0].mxu0 %v521
    %v662 = vpop.f32.mrb[0].mxu0
    %v663 = vadd.f32 0.0, %v662
    %v664 = vpop.f32.mrb[0].mxu0
    %v665 = vadd.f32 0.0, %v664
    %666 = vdwg.mxu0
    %v667 = vmul.f32 %v590, 0.125
    %v668 = vmul.f32 %v592, 0.125
    %v669 = vmul.f32 %v663, 0.125
    %v670 = vmul.f32 %v665, 0.125
    %v671 = vmul.f32 %v667, %v667
    %v672 = vmul.f32 %v668, %v668
    %v673 = vsub.f32 %v669, %v671
    %v674 = vsub.f32 %v670, %v672
    %v675 = vadd.f32 %v673, 0.8
    %v676 = vadd.f32 %v674, 0.8
    %v677 = vrsqrt.pop %v675
    %v678 = vrsqrt.pop %v676
    %v681 = vcombine.low %v677, %v678
    %v683 = vunpack.c.l.s4 1966171168
    %v684 = vunpack.c.0.s8 %v683
    %v685 = vlaneseq
    %v686 = vshrl.u32 %v685, 7
    %v687 = vsub.s32 %v684, %v686
    %v688 = vrot.slane %v681, %v687
    %v690 = vunpack.c.l.s4 1966171168
    %v691 = vunpack.c.0.s8 %v690
    %v692 = vlaneseq
    %v693 = vshrl.u32 %v692, 7
    %v694 = vsub.s32 %v691, %v693
    %v695 = vrot.slane %v688, %v694
    %v697 = vmul.f32 %v517, %v695
    %v699 = vlaneseq
    %v700 = vshrl.u32 %v699, 7
    %v701 = vsub.s32 0, %v700
    %v702 = vrot.slane %v697, %v701
    %v703 = vlaneseq
    %v704 = vshrl.u32 %v703, 7
    %v705 = vsub.s32 1, %v704
    %v706 = vrot.slane %v697, %v705
    %v709 = vmul.f32 %v667, %v702
    %v710 = vmul.f32 %v668, %v706
    %v713 = vcombine.low %v709, %v710
    %v715 = vunpack.c.l.s4 1966171168
    %v716 = vunpack.c.0.s8 %v715
    %v717 = vlaneseq
    %v718 = vshrl.u32 %v717, 7
    %v719 = vsub.s32 %v716, %v718
    %v720 = vrot.slane %v713, %v719
    %v722 = vunpack.c.l.s4 1966171168
    %v723 = vunpack.c.0.s8 %v722
    %v724 = vlaneseq
    %v725 = vshrl.u32 %v724, 7
    %v726 = vsub.s32 %v723, %v725
    %v727 = vrot.slane %v720, %v726
    %v729 = vsub.f32 %v518, %v727
    %v730 = vmul.f32 %v511, %v702
    %v731 = vmul.f32 %v513, %v706
    %v733 = vlaneseq
    %v734 = vshrl.u32 %v733, 7
    %v735 = vsub.s32 0, %v734
    %v736 = vrot.slane %v729, %v735
    %v737 = vlaneseq
    %v738 = vshrl.u32 %v737, 7
    %v739 = vsub.s32 1, %v738
    %v740 = vrot.slane %v729, %v739
    %v743 = vadd.f32 %v730, %v736
    %v744 = vadd.f32 %v731, %v740
    %v745 = vmul.f32 %v743, 0.2
    %v746 = vmul.f32 %v744, 0.2
    %v747 = vmax.f32 %v743, %v745
    %v748 = vmax.f32 %v744, %v746
    %v749 = vpack.c.bf16 %v747, %v747
    %v750 = vpack.c.bf16 %v748, %v748
    %v751 = vld [vmem:[#allocation16] sm:$0xff]
    %v752 = vld [vmem:[#allocation16 + $0x8] sm:$0xff]
    %v753 = vld [vmem:[#allocation16 + $0x10] sm:$0xff]
    %v754 = vld [vmem:[#allocation16 + $0x18] sm:$0xff]
    %v755 = vld [vmem:[#allocation16 + $0x20] sm:$0xff]
    %v756 = vld [vmem:[#allocation16 + $0x28] sm:$0xff]
    %v757 = vld [vmem:[#allocation16 + $0x30] sm:$0xff]
    %v758 = vld [vmem:[#allocation16 + $0x38] sm:$0xff]
    %v759 = vld [vmem:[#allocation16 + $0x40] sm:$0xff]
    %v760 = vld [vmem:[#allocation16 + $0x48] sm:$0xff]
    %v761 = vld [vmem:[#allocation16 + $0x50] sm:$0xff]
    %v762 = vld [vmem:[#allocation16 + $0x58] sm:$0xff]
    %v763 = vld [vmem:[#allocation16 + $0x60] sm:$0xff]
    %v764 = vld [vmem:[#allocation16 + $0x68] sm:$0xff]
    %v765 = vld [vmem:[#allocation16 + $0x70] sm:$0xff]
    %v766 = vld [vmem:[#allocation16 + $0x78] sm:$0xff]
    %v767 = vld [vmem:[#allocation16 + $0x80] sm:$0xff]
    %v768 = vld [vmem:[#allocation16 + $0x88] sm:$0xff]
    %v769 = vld [vmem:[#allocation16 + $0x90] sm:$0xff]
    %v770 = vld [vmem:[#allocation16 + $0x98] sm:$0xff]
    %v771 = vld [vmem:[#allocation16 + $0xa0] sm:$0xff]
    %v772 = vld [vmem:[#allocation16 + $0xa8] sm:$0xff]
    %v773 = vld [vmem:[#allocation16 + $0xb0] sm:$0xff]
    %v774 = vld [vmem:[#allocation16 + $0xb8] sm:$0xff]
    %v775 = vld [vmem:[#allocation16 + $0xc0] sm:$0xff]
    %v776 = vld [vmem:[#allocation16 + $0xc8] sm:$0xff]
    %v777 = vld [vmem:[#allocation16 + $0xd0] sm:$0xff]
    %v778 = vld [vmem:[#allocation16 + $0xd8] sm:$0xff]
    %v779 = vld [vmem:[#allocation16 + $0xe0] sm:$0xff]
    %v780 = vld [vmem:[#allocation16 + $0xe8] sm:$0xff]
    %v781 = vld [vmem:[#allocation16 + $0xf0] sm:$0xff]
    %v782 = vld [vmem:[#allocation16 + $0xf8] sm:$0xff]
    %v783 = vld [vmem:[#allocation16 + $0x100] sm:$0xff]
    %v784 = vld [vmem:[#allocation16 + $0x108] sm:$0xff]
    %v785 = vld [vmem:[#allocation16 + $0x110] sm:$0xff]
    %v786 = vld [vmem:[#allocation16 + $0x118] sm:$0xff]
    %v787 = vld [vmem:[#allocation16 + $0x120] sm:$0xff]
    %v788 = vld [vmem:[#allocation16 + $0x128] sm:$0xff]
    %v789 = vld [vmem:[#allocation16 + $0x130] sm:$0xff]
    %v790 = vld [vmem:[#allocation16 + $0x138] sm:$0xff]
    %v791 = vld [vmem:[#allocation16 + $0x140] sm:$0xff]
    %v792 = vld [vmem:[#allocation16 + $0x148] sm:$0xff]
    %v793 = vld [vmem:[#allocation16 + $0x150] sm:$0xff]
    %v794 = vld [vmem:[#allocation16 + $0x158] sm:$0xff]
    %v795 = vld [vmem:[#allocation16 + $0x160] sm:$0xff]
    %v796 = vld [vmem:[#allocation16 + $0x168] sm:$0xff]
    %v797 = vld [vmem:[#allocation16 + $0x170] sm:$0xff]
    %v798 = vld [vmem:[#allocation16 + $0x178] sm:$0xff]
    %v799 = vld [vmem:[#allocation16 + $0x180] sm:$0xff]
    %v800 = vld [vmem:[#allocation16 + $0x188] sm:$0xff]
    %v801 = vld [vmem:[#allocation16 + $0x190] sm:$0xff]
    %v802 = vld [vmem:[#allocation16 + $0x198] sm:$0xff]
    %v803 = vld [vmem:[#allocation16 + $0x1a0] sm:$0xff]
    %v804 = vld [vmem:[#allocation16 + $0x1a8] sm:$0xff]
    %v805 = vld [vmem:[#allocation16 + $0x1b0] sm:$0xff]
    %v806 = vld [vmem:[#allocation16 + $0x1b8] sm:$0xff]
    %v807 = vld [vmem:[#allocation16 + $0x1c0] sm:$0xff]
    %v808 = vld [vmem:[#allocation16 + $0x1c8] sm:$0xff]
    %v809 = vld [vmem:[#allocation16 + $0x1d0] sm:$0xff]
    %v810 = vld [vmem:[#allocation16 + $0x1d8] sm:$0xff]
    %v811 = vld [vmem:[#allocation16 + $0x1e0] sm:$0xff]
    %v812 = vld [vmem:[#allocation16 + $0x1e8] sm:$0xff]
    %v813 = vld [vmem:[#allocation16 + $0x1f0] sm:$0xff]
    %v814 = vld [vmem:[#allocation16 + $0x1f8] sm:$0xff]
    %v879 = vunpack.c.l.b16 %v751
    %v880 = vunpack.c.h.b16 %v751
    %v881 = vunpack.c.l.b16 %v752
    %v882 = vunpack.c.h.b16 %v752
    %v883 = vunpack.c.l.b16 %v753
    %v884 = vunpack.c.h.b16 %v753
    %v885 = vunpack.c.l.b16 %v754
    %v886 = vunpack.c.h.b16 %v754
    %v887 = vunpack.c.l.b16 %v755
    %v888 = vunpack.c.h.b16 %v755
    %v889 = vunpack.c.l.b16 %v756
    %v890 = vunpack.c.h.b16 %v756
    %v891 = vunpack.c.l.b16 %v757
    %v892 = vunpack.c.h.b16 %v757
    %v893 = vunpack.c.l.b16 %v758
    %v894 = vunpack.c.h.b16 %v758
    %v895 = vunpack.c.l.b16 %v759
    %v896 = vunpack.c.h.b16 %v759
    %v897 = vunpack.c.l.b16 %v760
    %v898 = vunpack.c.h.b16 %v760
    %v899 = vunpack.c.l.b16 %v761
    %v900 = vunpack.c.h.b16 %v761
    %v901 = vunpack.c.l.b16 %v762
    %v902 = vunpack.c.h.b16 %v762
    %v903 = vunpack.c.l.b16 %v763
    %v904 = vunpack.c.h.b16 %v763
    %v905 = vunpack.c.l.b16 %v764
    %v906 = vunpack.c.h.b16 %v764
    %v907 = vunpack.c.l.b16 %v765
    %v908 = vunpack.c.h.b16 %v765
    %v909 = vunpack.c.l.b16 %v766
    %v910 = vunpack.c.h.b16 %v766
    %v911 = vunpack.c.l.b16 %v767
    %v912 = vunpack.c.h.b16 %v767
    %v913 = vunpack.c.l.b16 %v768
    %v914 = vunpack.c.h.b16 %v768
    %v915 = vunpack.c.l.b16 %v769
    %v916 = vunpack.c.h.b16 %v769
    %v917 = vunpack.c.l.b16 %v770
    %v918 = vunpack.c.h.b16 %v770
    %v919 = vunpack.c.l.b16 %v771
    %v920 = vunpack.c.h.b16 %v771
    %v921 = vunpack.c.l.b16 %v772
    %v922 = vunpack.c.h.b16 %v772
    %v923 = vunpack.c.l.b16 %v773
    %v924 = vunpack.c.h.b16 %v773
    %v925 = vunpack.c.l.b16 %v774
    %v926 = vunpack.c.h.b16 %v774
    %v927 = vunpack.c.l.b16 %v775
    %v928 = vunpack.c.h.b16 %v775
    %v929 = vunpack.c.l.b16 %v776
    %v930 = vunpack.c.h.b16 %v776
    %v931 = vunpack.c.l.b16 %v777
    %v932 = vunpack.c.h.b16 %v777
    %v933 = vunpack.c.l.b16 %v778
    %v934 = vunpack.c.h.b16 %v778
    %v935 = vunpack.c.l.b16 %v779
    %v936 = vunpack.c.h.b16 %v779
    %v937 = vunpack.c.l.b16 %v780
    %v938 = vunpack.c.h.b16 %v780
    %v939 = vunpack.c.l.b16 %v781
    %v940 = vunpack.c.h.b16 %v781
    %v941 = vunpack.c.l.b16 %v782
    %v942 = vunpack.c.h.b16 %v782
    %v943 = vunpack.c.l.b16 %v783
    %v944 = vunpack.c.h.b16 %v783
    %v945 = vunpack.c.l.b16 %v784
    %v946 = vunpack.c.h.b16 %v784
    %v947 = vunpack.c.l.b16 %v785
    %v948 = vunpack.c.h.b16 %v785
    %v949 = vunpack.c.l.b16 %v786
    %v950 = vunpack.c.h.b16 %v786
    %v951 = vunpack.c.l.b16 %v787
    %v952 = vunpack.c.h.b16 %v787
    %v953 = vunpack.c.l.b16 %v788
    %v954 = vunpack.c.h.b16 %v788
    %v955 = vunpack.c.l.b16 %v789
    %v956 = vunpack.c.h.b16 %v789
    %v957 = vunpack.c.l.b16 %v790
    %v958 = vunpack.c.h.b16 %v790
    %v959 = vunpack.c.l.b16 %v791
    %v960 = vunpack.c.h.b16 %v791
    %v961 = vunpack.c.l.b16 %v792
    %v962 = vunpack.c.h.b16 %v792
    %v963 = vunpack.c.l.b16 %v793
    %v964 = vunpack.c.h.b16 %v793
    %v965 = vunpack.c.l.b16 %v794
    %v966 = vunpack.c.h.b16 %v794
    %v967 = vunpack.c.l.b16 %v795
    %v968 = vunpack.c.h.b16 %v795
    %v969 = vunpack.c.l.b16 %v796
    %v970 = vunpack.c.h.b16 %v796
    %v971 = vunpack.c.l.b16 %v797
    %v972 = vunpack.c.h.b16 %v797
    %v973 = vunpack.c.l.b16 %v798
    %v974 = vunpack.c.h.b16 %v798
    %v975 = vunpack.c.l.b16 %v799
    %v976 = vunpack.c.h.b16 %v799
    %v977 = vunpack.c.l.b16 %v800
    %v978 = vunpack.c.h.b16 %v800
    %v979 = vunpack.c.l.b16 %v801
    %v980 = vunpack.c.h.b16 %v801
    %v981 = vunpack.c.l.b16 %v802
    %v982 = vunpack.c.h.b16 %v802
    %v983 = vunpack.c.l.b16 %v803
    %v984 = vunpack.c.h.b16 %v803
    %v985 = vunpack.c.l.b16 %v804
    %v986 = vunpack.c.h.b16 %v804
    %v987 = vunpack.c.l.b16 %v805
    %v988 = vunpack.c.h.b16 %v805
    %v989 = vunpack.c.l.b16 %v806
    %v990 = vunpack.c.h.b16 %v806
    %v991 = vunpack.c.l.b16 %v807
    %v992 = vunpack.c.h.b16 %v807
    %v993 = vunpack.c.l.b16 %v808
    %v994 = vunpack.c.h.b16 %v808
    %v995 = vunpack.c.l.b16 %v809
    %v996 = vunpack.c.h.b16 %v809
    %v997 = vunpack.c.l.b16 %v810
    %v998 = vunpack.c.h.b16 %v810
    %v999 = vunpack.c.l.b16 %v811
    %v1000 = vunpack.c.h.b16 %v811
    %v1001 = vunpack.c.l.b16 %v812
    %v1002 = vunpack.c.h.b16 %v812
    %v1003 = vunpack.c.l.b16 %v813
    %v1004 = vunpack.c.h.b16 %v813
    %v1005 = vunpack.c.l.b16 %v814
    %v1006 = vunpack.c.h.b16 %v814
    %v1007 = vpack.c.b16 %v883, %v879
    %v1008 = vpack.c.b16 %v884, %v880
    %v1009 = vpack.c.b16 %v885, %v881
    %v1010 = vpack.c.b16 %v886, %v882
    %v1011 = vpack.c.b16 %v891, %v887
    %v1012 = vpack.c.b16 %v892, %v888
    %v1013 = vpack.c.b16 %v893, %v889
    %v1014 = vpack.c.b16 %v894, %v890
    %v1015 = vpack.c.b16 %v899, %v895
    %v1016 = vpack.c.b16 %v900, %v896
    %v1017 = vpack.c.b16 %v901, %v897
    %v1018 = vpack.c.b16 %v902, %v898
    %v1019 = vpack.c.b16 %v907, %v903
    %v1020 = vpack.c.b16 %v908, %v904
    %v1021 = vpack.c.b16 %v909, %v905
    %v1022 = vpack.c.b16 %v910, %v906
    %v1023 = vpack.c.b16 %v915, %v911
    %v1024 = vpack.c.b16 %v916, %v912
    %v1025 = vpack.c.b16 %v917, %v913
    %v1026 = vpack.c.b16 %v918, %v914
    %v1027 = vpack.c.b16 %v923, %v919
    %v1028 = vpack.c.b16 %v924, %v920
    %v1029 = vpack.c.b16 %v925, %v921
    %v1030 = vpack.c.b16 %v926, %v922
    %v1031 = vpack.c.b16 %v931, %v927
    %v1032 = vpack.c.b16 %v932, %v928
    %v1033 = vpack.c.b16 %v933, %v929
    %v1034 = vpack.c.b16 %v934, %v930
    %v1035 = vpack.c.b16 %v939, %v935
    %v1036 = vpack.c.b16 %v940, %v936
    %v1037 = vpack.c.b16 %v941, %v937
    %v1038 = vpack.c.b16 %v942, %v938
    %v1039 = vpack.c.b16 %v947, %v943
    %v1040 = vpack.c.b16 %v948, %v944
    %v1041 = vpack.c.b16 %v949, %v945
    %v1042 = vpack.c.b16 %v950, %v946
    %v1043 = vpack.c.b16 %v955, %v951
    %v1044 = vpack.c.b16 %v956, %v952
    %v1045 = vpack.c.b16 %v957, %v953
    %v1046 = vpack.c.b16 %v958, %v954
    %v1047 = vpack.c.b16 %v963, %v959
    %v1048 = vpack.c.b16 %v964, %v960
    %v1049 = vpack.c.b16 %v965, %v961
    %v1050 = vpack.c.b16 %v966, %v962
    %v1051 = vpack.c.b16 %v971, %v967
    %v1052 = vpack.c.b16 %v972, %v968
    %v1053 = vpack.c.b16 %v973, %v969
    %v1054 = vpack.c.b16 %v974, %v970
    %v1055 = vpack.c.b16 %v979, %v975
    %v1056 = vpack.c.b16 %v980, %v976
    %v1057 = vpack.c.b16 %v981, %v977
    %v1058 = vpack.c.b16 %v982, %v978
    %v1059 = vpack.c.b16 %v987, %v983
    %v1060 = vpack.c.b16 %v988, %v984
    %v1061 = vpack.c.b16 %v989, %v985
    %v1062 = vpack.c.b16 %v990, %v986
    %v1063 = vpack.c.b16 %v995, %v991
    %v1064 = vpack.c.b16 %v996, %v992
    %v1065 = vpack.c.b16 %v997, %v993
    %v1066 = vpack.c.b16 %v998, %v994
    %v1067 = vpack.c.b16 %v1003, %v999
    %v1068 = vpack.c.b16 %v1004, %v1000
    %v1069 = vpack.c.b16 %v1005, %v1001
    %v1070 = vpack.c.b16 %v1006, %v1002
    %1135 = vmatprep.subr.bf16.mxu0 %v1008
    %1136 = vmatpush1.bf16.msra.mxu0 %v1007
    %1137 = vmatprep.subr.bf16.mxu0 %v1012
    %1138 = vmatpush1.bf16.msra.mxu0 %v1011
    %1139 = vmatprep.subr.bf16.mxu0 %v1016
    %1140 = vmatpush1.bf16.msra.mxu0 %v1015
    %1141 = vmatprep.subr.bf16.mxu0 %v1020
    %1142 = vmatpush1.bf16.msra.mxu0 %v1019
    %1143 = vmatprep.subr.bf16.mxu0 %v1024
    %1144 = vmatpush1.bf16.msra.mxu0 %v1023
    %1145 = vmatprep.subr.bf16.mxu0 %v1028
    %1146 = vmatpush1.bf16.msra.mxu0 %v1027
    %1147 = vmatprep.subr.bf16.mxu0 %v1032
    %1148 = vmatpush1.bf16.msra.mxu0 %v1031
    %1149 = vmatprep.subr.bf16.mxu0 %v1036
    %1150 = vmatpush1.bf16.msra.mxu0 %v1035
    %1151 = vmatprep.subr.bf16.mxu0 %v1040
    %1152 = vmatpush1.bf16.msra.mxu0 %v1039
    %1153 = vmatprep.subr.bf16.mxu0 %v1044
    %1154 = vmatpush1.bf16.msra.mxu0 %v1043
    %1155 = vmatprep.subr.bf16.mxu0 %v1048
    %1156 = vmatpush1.bf16.msra.mxu0 %v1047
    %1157 = vmatprep.subr.bf16.mxu0 %v1052
    %1158 = vmatpush1.bf16.msra.mxu0 %v1051
    %1159 = vmatprep.subr.bf16.mxu0 %v1056
    %1160 = vmatpush1.bf16.msra.mxu0 %v1055
    %1161 = vmatprep.subr.bf16.mxu0 %v1060
    %1162 = vmatpush1.bf16.msra.mxu0 %v1059
    %1163 = vmatprep.subr.bf16.mxu0 %v1064
    %1164 = vmatpush1.bf16.msra.mxu0 %v1063
    %1165 = vmatprep.subr.bf16.mxu0 %v1068
    %1166 = vmatpush1.bf16.msra.mxu0 %v1067
    %1167 = vmatprep.mubr.bf16.mxu0 %v750
    %1168 = vmatmul.mubr.bf16.gmra.mrb[0].mxu0 %v749
    %v1169 = vpop.f32.mrb[0].mxu0
    %v1170 = vadd.f32 0.0, %v1169
    %v1171 = vpop.f32.mrb[0].mxu0
    %v1172 = vadd.f32 0.0, %v1171
    %v1173 = vpop.f32.mrb[0].mxu0
    %v1174 = vpop.f32.mrb[0].mxu0
    %1175 = vdwg.mxu0
    %1176 = vmatprep.subr.bf16.mxu0 %v1010
    %1177 = vmatpush1.bf16.msra.mxu0 %v1009
    %1178 = vmatprep.subr.bf16.mxu0 %v1014
    %1179 = vmatpush1.bf16.msra.mxu0 %v1013
    %1180 = vmatprep.subr.bf16.mxu0 %v1018
    %1181 = vmatpush1.bf16.msra.mxu0 %v1017
    %1182 = vmatprep.subr.bf16.mxu0 %v1022
    %1183 = vmatpush1.bf16.msra.mxu0 %v1021
    %1184 = vmatprep.subr.bf16.mxu0 %v1026
    %1185 = vmatpush1.bf16.msra.mxu0 %v1025
    %1186 = vmatprep.subr.bf16.mxu0 %v1030
    %1187 = vmatpush1.bf16.msra.mxu0 %v1029
    %1188 = vmatprep.subr.bf16.mxu0 %v1034
    %1189 = vmatpush1.bf16.msra.mxu0 %v1033
    %1190 = vmatprep.subr.bf16.mxu0 %v1038
    %1191 = vmatpush1.bf16.msra.mxu0 %v1037
    %1192 = vmatprep.subr.bf16.mxu0 %v1042
    %1193 = vmatpush1.bf16.msra.mxu0 %v1041
    %1194 = vmatprep.subr.bf16.mxu0 %v1046
    %1195 = vmatpush1.bf16.msra.mxu0 %v1045
    %1196 = vmatprep.subr.bf16.mxu0 %v1050
    %1197 = vmatpush1.bf16.msra.mxu0 %v1049
    %1198 = vmatprep.subr.bf16.mxu0 %v1054
    %1199 = vmatpush1.bf16.msra.mxu0 %v1053
    %1200 = vmatprep.subr.bf16.mxu0 %v1058
    %1201 = vmatpush1.bf16.msra.mxu0 %v1057
    %1202 = vmatprep.subr.bf16.mxu0 %v1062
    %1203 = vmatpush1.bf16.msra.mxu0 %v1061
    %1204 = vmatprep.subr.bf16.mxu0 %v1066
    %1205 = vmatpush1.bf16.msra.mxu0 %v1065
    %1206 = vmatprep.subr.bf16.mxu0 %v1070
    %1207 = vmatpush1.bf16.msra.mxu0 %v1069
    %1208 = vmatprep.mubr.bf16.mxu0 %v750
    %1209 = vmatmul.mubr.bf16.gmra.mrb[0].mxu0 %v749
    %v1210 = vpop.f32.mrb[0].mxu0
    %v1211 = vadd.f32 0.0, %v1210
    %v1212 = vpop.f32.mrb[0].mxu0
    %v1213 = vadd.f32 0.0, %v1212
    %v1214 = vpop.f32.mrb[0].mxu0
    %v1215 = vpop.f32.mrb[0].mxu0
    %1216 = vdwg.mxu0
    %v1217 = vld [vmem:[#allocation17] sm:$0xf]
    %v1218 = vld [vmem:[#allocation19] sm:$0xf]
    %1219 = vmatprep.subr.mxu0 %v1172
    %1220 = vmatpush1.msra.mxu0 %v1170
    %1221 = vmatprep.subr.mxu0 0.0
    %1222 = vmatpush1.msra.mxu0 0.0
    %1223 = vmatprep.subr.mxu0 0.0
    %1224 = vmatpush1.msra.mxu0 0.0
    %1225 = vmatprep.subr.mxu0 0.0
    %1226 = vmatpush1.msra.mxu0 0.0
    %1227 = vmatprep.subr.mxu0 0.0
    %1228 = vmatpush1.msra.mxu0 0.0
    %1229 = vmatprep.subr.mxu0 0.0
    %1230 = vmatpush1.msra.mxu0 0.0
    %1231 = vmatprep.subr.mxu0 0.0
    %1232 = vmatpush1.msra.mxu0 0.0
    %1233 = vmatprep.subr.mxu0 0.0
    %1234 = vmatpush1.msra.mxu0 0.0
    %1235 = vmatprep.subr.mxu0 0.0
    %1236 = vmatpush1.msra.mxu0 0.0
    %1237 = vmatprep.subr.mxu0 0.0
    %1238 = vmatpush1.msra.mxu0 0.0
    %1239 = vmatprep.subr.mxu0 0.0
    %1240 = vmatpush1.msra.mxu0 0.0
    %1241 = vmatprep.subr.mxu0 0.0
    %1242 = vmatpush1.msra.mxu0 0.0
    %1243 = vmatprep.subr.mxu0 0.0
    %1244 = vmatpush1.msra.mxu0 0.0
    %1245 = vmatprep.subr.mxu0 0.0
    %1246 = vmatpush1.msra.mxu0 0.0
    %1247 = vmatprep.subr.mxu0 0.0
    %1248 = vmatpush1.msra.mxu0 0.0
    %1249 = vmatprep.subr.mxu0 0.0
    %1250 = vmatpush1.msra.mxu0 0.0
    %1251 = vmatprep.subr.mxu0 0.0
    %1252 = vmatpush1.msra.mxu0 0.0
    %1253 = vmatprep.subr.mxu0 0.0
    %1254 = vmatpush1.msra.mxu0 0.0
    %1255 = vmatprep.subr.mxu0 0.0
    %1256 = vmatpush1.msra.mxu0 0.0
    %1257 = vmatprep.subr.mxu0 0.0
    %1258 = vmatpush1.msra.mxu0 0.0
    %1259 = vmatprep.subr.mxu0 0.0
    %1260 = vmatpush1.msra.mxu0 0.0
    %1261 = vmatprep.subr.mxu0 0.0
    %1262 = vmatpush1.msra.mxu0 0.0
    %1263 = vmatprep.subr.mxu0 0.0
    %1264 = vmatpush1.msra.mxu0 0.0
    %1265 = vmatprep.subr.mxu0 0.0
    %1266 = vmatpush1.msra.mxu0 0.0
    %1267 = vmatprep.subr.mxu0 0.0
    %1268 = vmatpush1.msra.mxu0 0.0
    %1269 = vmatprep.subr.mxu0 0.0
    %1270 = vmatpush1.msra.mxu0 0.0
    %1271 = vmatprep.subr.mxu0 0.0
    %1272 = vmatpush1.msra.mxu0 0.0
    %1273 = vmatprep.subr.mxu0 0.0
    %1274 = vmatpush1.msra.mxu0 0.0
    %1275 = vmatprep.subr.mxu0 0.0
    %1276 = vmatpush1.msra.mxu0 0.0
    %1277 = vmatprep.subr.mxu0 0.0
    %1278 = vmatpush1.msra.mxu0 0.0
    %1279 = vmatprep.subr.mxu0 0.0
    %1280 = vmatpush1.msra.mxu0 0.0
    %1281 = vmatprep.subr.mxu0 0.0
    %1282 = vmatpush1.msra.mxu0 0.0
    %1283 = vmatprep.mubr.f32.mxu0 0.0
    %1284 = vmatmul.mubr.f32.gmra.mrb[0].mxu0 %v521
    %v1285 = vpop.f32.mrb[0].mxu0
    %v1286 = vadd.f32 0.0, %v1285
    %v1287 = vpop.f32.mrb[0].mxu0
    %v1288 = vadd.f32 0.0, %v1287
    %1289 = vdwg.mxu0
    %1290 = vmatprep.subr.mxu0 %v1213
    %1291 = vmatpush1.msra.mxu0 %v1211
    %1292 = vmatprep.subr.mxu0 0.0
    %1293 = vmatpush1.msra.mxu0 0.0
    %1294 = vmatprep.subr.mxu0 0.0
    %1295 = vmatpush1.msra.mxu0 0.0
    %1296 = vmatprep.subr.mxu0 0.0
    %1297 = vmatpush1.msra.mxu0 0.0
    %1298 = vmatprep.subr.mxu0 0.0
    %1299 = vmatpush1.msra.mxu0 0.0
    %1300 = vmatprep.subr.mxu0 0.0
    %1301 = vmatpush1.msra.mxu0 0.0
    %1302 = vmatprep.subr.mxu0 0.0
    %1303 = vmatpush1.msra.mxu0 0.0
    %1304 = vmatprep.subr.mxu0 0.0
    %1305 = vmatpush1.msra.mxu0 0.0
    %1306 = vmatprep.subr.mxu0 0.0
    %1307 = vmatpush1.msra.mxu0 0.0
    %1308 = vmatprep.subr.mxu0 0.0
    %1309 = vmatpush1.msra.mxu0 0.0
    %1310 = vmatprep.subr.mxu0 0.0
    %1311 = vmatpush1.msra.mxu0 0.0
    %1312 = vmatprep.subr.mxu0 0.0
    %1313 = vmatpush1.msra.mxu0 0.0
    %1314 = vmatprep.subr.mxu0 0.0
    %1315 = vmatpush1.msra.mxu0 0.0
    %1316 = vmatprep.subr.mxu0 0.0
    %1317 = vmatpush1.msra.mxu0 0.0
    %1318 = vmatprep.subr.mxu0 0.0
    %1319 = vmatpush1.msra.mxu0 0.0
    %1320 = vmatprep.subr.mxu0 0.0
    %1321 = vmatpush1.msra.mxu0 0.0
    %1322 = vmatprep.subr.mxu0 0.0
    %1323 = vmatpush1.msra.mxu0 0.0
    %1324 = vmatprep.subr.mxu0 0.0
    %1325 = vmatpush1.msra.mxu0 0.0
    %1326 = vmatprep.subr.mxu0 0.0
    %1327 = vmatpush1.msra.mxu0 0.0
    %1328 = vmatprep.subr.mxu0 0.0
    %1329 = vmatpush1.msra.mxu0 0.0
    %1330 = vmatprep.subr.mxu0 0.0
    %1331 = vmatpush1.msra.mxu0 0.0
    %1332 = vmatprep.subr.mxu0 0.0
    %1333 = vmatpush1.msra.mxu0 0.0
    %1334 = vmatprep.subr.mxu0 0.0
    %1335 = vmatpush1.msra.mxu0 0.0
    %1336 = vmatprep.subr.mxu0 0.0
    %1337 = vmatpush1.msra.mxu0 0.0
    %1338 = vmatprep.subr.mxu0 0.0
    %1339 = vmatpush1.msra.mxu0 0.0
    %1340 = vmatprep.subr.mxu0 0.0
    %1341 = vmatpush1.msra.mxu0 0.0
    %1342 = vmatprep.subr.mxu0 0.0
    %1343 = vmatpush1.msra.mxu0 0.0
    %1344 = vmatprep.subr.mxu0 0.0
    %1345 = vmatpush1.msra.mxu0 0.0
    %1346 = vmatprep.subr.mxu0 0.0
    %1347 = vmatpush1.msra.mxu0 0.0
    %1348 = vmatprep.subr.mxu0 0.0
    %1349 = vmatpush1.msra.mxu0 0.0
    %1350 = vmatprep.subr.mxu0 0.0
    %1351 = vmatpush1.msra.mxu0 0.0
    %1352 = vmatprep.subr.mxu0 0.0
    %1353 = vmatpush1.msra.mxu0 0.0
    %1354 = vmatprep.mubr.f32.mxu0 0.0
    %1355 = vmatmul.mubr.f32.gmra.mrb[0].mxu0 %v521
    %v1356 = vpop.f32.mrb[0].mxu0
    %v1357 = vadd.f32 0.0, %v1356
    %v1358 = vpop.f32.mrb[0].mxu0
    %v1359 = vadd.f32 0.0, %v1358
    %1360 = vdwg.mxu0
    %v1361 = vmul.f32 %v1170, %v1170
    %v1362 = vmul.f32 %v1172, %v1172
    %v1363 = vmul.f32 %v1211, %v1211
    %v1364 = vmul.f32 %v1213, %v1213
    %1365 = vmatprep.subr.mxu0 %v1362
    %1366 = vmatpush1.msra.mxu0 %v1361
    %1367 = vmatprep.subr.mxu0 0.0
    %1368 = vmatpush1.msra.mxu0 0.0
    %1369 = vmatprep.subr.mxu0 0.0
    %1370 = vmatpush1.msra.mxu0 0.0
    %1371 = vmatprep.subr.mxu0 0.0
    %1372 = vmatpush1.msra.mxu0 0.0
    %1373 = vmatprep.subr.mxu0 0.0
    %1374 = vmatpush1.msra.mxu0 0.0
    %1375 = vmatprep.subr.mxu0 0.0
    %1376 = vmatpush1.msra.mxu0 0.0
    %1377 = vmatprep.subr.mxu0 0.0
    %1378 = vmatpush1.msra.mxu0 0.0
    %1379 = vmatprep.subr.mxu0 0.0
    %1380 = vmatpush1.msra.mxu0 0.0
    %1381 = vmatprep.subr.mxu0 0.0
    %1382 = vmatpush1.msra.mxu0 0.0
    %1383 = vmatprep.subr.mxu0 0.0
    %1384 = vmatpush1.msra.mxu0 0.0
    %1385 = vmatprep.subr.mxu0 0.0
    %1386 = vmatpush1.msra.mxu0 0.0
    %1387 = vmatprep.subr.mxu0 0.0
    %1388 = vmatpush1.msra.mxu0 0.0
    %1389 = vmatprep.subr.mxu0 0.0
    %1390 = vmatpush1.msra.mxu0 0.0
    %1391 = vmatprep.subr.mxu0 0.0
    %1392 = vmatpush1.msra.mxu0 0.0
    %1393 = vmatprep.subr.mxu0 0.0
    %1394 = vmatpush1.msra.mxu0 0.0
    %1395 = vmatprep.subr.mxu0 0.0
    %1396 = vmatpush1.msra.mxu0 0.0
    %1397 = vmatprep.subr.mxu0 0.0
    %1398 = vmatpush1.msra.mxu0 0.0
    %1399 = vmatprep.subr.mxu0 0.0
    %1400 = vmatpush1.msra.mxu0 0.0
    %1401 = vmatprep.subr.mxu0 0.0
    %1402 = vmatpush1.msra.mxu0 0.0
    %1403 = vmatprep.subr.mxu0 0.0
    %1404 = vmatpush1.msra.mxu0 0.0
    %1405 = vmatprep.subr.mxu0 0.0
    %1406 = vmatpush1.msra.mxu0 0.0
    %1407 = vmatprep.subr.mxu0 0.0
    %1408 = vmatpush1.msra.mxu0 0.0
    %1409 = vmatprep.subr.mxu0 0.0
    %1410 = vmatpush1.msra.mxu0 0.0
    %1411 = vmatprep.subr.mxu0 0.0
    %1412 = vmatpush1.msra.mxu0 0.0
    %1413 = vmatprep.subr.mxu0 0.0
    %1414 = vmatpush1.msra.mxu0 0.0
    %1415 = vmatprep.subr.mxu0 0.0
    %1416 = vmatpush1.msra.mxu0 0.0
    %1417 = vmatprep.subr.mxu0 0.0
    %1418 = vmatpush1.msra.mxu0 0.0
    %1419 = vmatprep.subr.mxu0 0.0
    %1420 = vmatpush1.msra.mxu0 0.0
    %1421 = vmatprep.subr.mxu0 0.0
    %1422 = vmatpush1.msra.mxu0 0.0
    %1423 = vmatprep.subr.mxu0 0.0
    %1424 = vmatpush1.msra.mxu0 0.0
    %1425 = vmatprep.subr.mxu0 0.0
    %1426 = vmatpush1.msra.mxu0 0.0
    %1427 = vmatprep.subr.mxu0 0.0
    %1428 = vmatpush1.msra.mxu0 0.0
    %1429 = vmatprep.mubr.f32.mxu0 0.0
    %1430 = vmatmul.mubr.f32.gmra.mrb[0].mxu0 %v521
    %v1431 = vpop.f32.mrb[0].mxu0
    %v1432 = vadd.f32 0.0, %v1431
    %v1433 = vpop.f32.mrb[0].mxu0
    %v1434 = vadd.f32 0.0, %v1433
    %1435 = vdwg.mxu0
    %1436 = vmatprep.subr.mxu0 %v1364
    %1437 = vmatpush1.msra.mxu0 %v1363
    %1438 = vmatprep.subr.mxu0 0.0
    %1439 = vmatpush1.msra.mxu0 0.0
    %1440 = vmatprep.subr.mxu0 0.0
    %1441 = vmatpush1.msra.mxu0 0.0
    %1442 = vmatprep.subr.mxu0 0.0
    %1443 = vmatpush1.msra.mxu0 0.0
    %1444 = vmatprep.subr.mxu0 0.0
    %1445 = vmatpush1.msra.mxu0 0.0
    %1446 = vmatprep.subr.mxu0 0.0
    %1447 = vmatpush1.msra.mxu0 0.0
    %1448 = vmatprep.subr.mxu0 0.0
    %1449 = vmatpush1.msra.mxu0 0.0
    %1450 = vmatprep.subr.mxu0 0.0
    %1451 = vmatpush1.msra.mxu0 0.0
    %1452 = vmatprep.subr.mxu0 0.0
    %1453 = vmatpush1.msra.mxu0 0.0
    %1454 = vmatprep.subr.mxu0 0.0
    %1455 = vmatpush1.msra.mxu0 0.0
    %1456 = vmatprep.subr.mxu0 0.0
    %1457 = vmatpush1.msra.mxu0 0.0
    %1458 = vmatprep.subr.mxu0 0.0
    %1459 = vmatpush1.msra.mxu0 0.0
    %1460 = vmatprep.subr.mxu0 0.0
    %1461 = vmatpush1.msra.mxu0 0.0
    %1462 = vmatprep.subr.mxu0 0.0
    %1463 = vmatpush1.msra.mxu0 0.0
    %1464 = vmatprep.subr.mxu0 0.0
    %1465 = vmatpush1.msra.mxu0 0.0
    %1466 = vmatprep.subr.mxu0 0.0
    %1467 = vmatpush1.msra.mxu0 0.0
    %1468 = vmatprep.subr.mxu0 0.0
    %1469 = vmatpush1.msra.mxu0 0.0
    %1470 = vmatprep.subr.mxu0 0.0
    %1471 = vmatpush1.msra.mxu0 0.0
    %1472 = vmatprep.subr.mxu0 0.0
    %1473 = vmatpush1.msra.mxu0 0.0
    %1474 = vmatprep.subr.mxu0 0.0
    %1475 = vmatpush1.msra.mxu0 0.0
    %1476 = vmatprep.subr.mxu0 0.0
    %1477 = vmatpush1.msra.mxu0 0.0
    %1478 = vmatprep.subr.mxu0 0.0
    %1479 = vmatpush1.msra.mxu0 0.0
    %1480 = vmatprep.subr.mxu0 0.0
    %1481 = vmatpush1.msra.mxu0 0.0
    %1482 = vmatprep.subr.mxu0 0.0
    %1483 = vmatpush1.msra.mxu0 0.0
    %1484 = vmatprep.subr.mxu0 0.0
    %1485 = vmatpush1.msra.mxu0 0.0
    %1486 = vmatprep.subr.mxu0 0.0
    %1487 = vmatpush1.msra.mxu0 0.0
    %1488 = vmatprep.subr.mxu0 0.0
    %1489 = vmatpush1.msra.mxu0 0.0
    %1490 = vmatprep.subr.mxu0 0.0
    %1491 = vmatpush1.msra.mxu0 0.0
    %1492 = vmatprep.subr.mxu0 0.0
    %1493 = vmatpush1.msra.mxu0 0.0
    %1494 = vmatprep.subr.mxu0 0.0
    %1495 = vmatpush1.msra.mxu0 0.0
    %1496 = vmatprep.subr.mxu0 0.0
    %1497 = vmatpush1.msra.mxu0 0.0
    %1498 = vmatprep.subr.mxu0 0.0
    %1499 = vmatpush1.msra.mxu0 0.0
    %1500 = vmatprep.mubr.f32.mxu0 0.0
    %1501 = vmatmul.mubr.f32.gmra.mrb[0].mxu0 %v521
    %v1502 = vpop.f32.mrb[0].mxu0
    %v1503 = vadd.f32 0.0, %v1502
    %v1504 = vpop.f32.mrb[0].mxu0
    %v1505 = vadd.f32 0.0, %v1504
    %1506 = vdwg.mxu0
    %v1507 = vmul.f32 %v1286, 0.125
    %v1508 = vmul.f32 %v1288, 0.125
    %v1509 = vmul.f32 %v1357, 0.125
    %v1510 = vmul.f32 %v1359, 0.125
    %v1511 = vmul.f32 %v1432, 0.125
    %v1512 = vmul.f32 %v1434, 0.125
    %v1513 = vmul.f32 %v1503, 0.125
    %v1514 = vmul.f32 %v1505, 0.125
    %v1515 = vmul.f32 %v1507, %v1507
    %v1516 = vmul.f32 %v1508, %v1508
    %v1517 = vmul.f32 %v1509, %v1509
    %v1518 = vmul.f32 %v1510, %v1510
    %v1519 = vsub.f32 %v1511, %v1515
    %v1520 = vsub.f32 %v1512, %v1516
    %v1521 = vsub.f32 %v1513, %v1517
    %v1522 = vsub.f32 %v1514, %v1518
    %v1523 = vadd.f32 %v1519, 0.8
    %v1524 = vadd.f32 %v1520, 0.8
    %v1525 = vadd.f32 %v1521, 0.8
    %v1526 = vadd.f32 %v1522, 0.8
    %v1527 = vrsqrt.pop %v1523
    %v1528 = vrsqrt.pop %v1524
    %v1529 = vrsqrt.pop %v1525
    %v1530 = vrsqrt.pop %v1526
    %v1535 = vcombine.low %v1527, %v1528
    %v1536 = vcombine.low %v1529, %v1530
    %v1538 = vunpack.c.l.s4 1966171168
    %v1539 = vunpack.c.0.s8 %v1538
    %v1540 = vlaneseq
    %v1541 = vshrl.u32 %v1540, 7
    %v1542 = vsub.s32 %v1539, %v1541
    %v1543 = vrot.slane %v1535, %v1542
    %v1545 = vunpack.c.l.s4 1966171168
    %v1546 = vunpack.c.0.s8 %v1545
    %v1547 = vlaneseq
    %v1548 = vshrl.u32 %v1547, 7
    %v1549 = vsub.s32 %v1546, %v1548
    %v1550 = vrot.slane %v1536, %v1549
    %v1551 = vcombine.low %v1543, %v1550
    %v1553 = vunpack.c.l.s4 1966171168
    %v1554 = vunpack.c.0.s8 %v1553
    %v1555 = vlaneseq
    %v1556 = vshrl.u32 %v1555, 7
    %v1557 = vsub.s32 %v1554, %v1556
    %v1558 = vrot.slane %v1551, %v1557
    %v1560 = vmul.f32 %v1217, %v1558
    %v1562 = vlaneseq
    %v1563 = vshrl.u32 %v1562, 7
    %v1564 = vsub.s32 0, %v1563
    %v1565 = vrot.slane %v1560, %v1564
    %v1566 = vlaneseq
    %v1567 = vshrl.u32 %v1566, 7
    %v1568 = vsub.s32 1, %v1567
    %v1569 = vrot.slane %v1560, %v1568
    %v1570 = vlaneseq
    %v1571 = vshrl.u32 %v1570, 7
    %v1572 = vsub.s32 2, %v1571
    %v1573 = vrot.slane %v1560, %v1572
    %v1574 = vlaneseq
    %v1575 = vshrl.u32 %v1574, 7
    %v1576 = vsub.s32 3, %v1575
    %v1577 = vrot.slane %v1560, %v1576
    %v1582 = vmul.f32 %v1507, %v1565
    %v1583 = vmul.f32 %v1508, %v1569
    %v1584 = vmul.f32 %v1509, %v1573
    %v1585 = vmul.f32 %v1510, %v1577
    %v1590 = vcombine.low %v1582, %v1583
    %v1591 = vcombine.low %v1584, %v1585
    %v1593 = vunpack.c.l.s4 1966171168
    %v1594 = vunpack.c.0.s8 %v1593
    %v1595 = vlaneseq
    %v1596 = vshrl.u32 %v1595, 7
    %v1597 = vsub.s32 %v1594, %v1596
    %v1598 = vrot.slane %v1590, %v1597
    %v1600 = vunpack.c.l.s4 1966171168
    %v1601 = vunpack.c.0.s8 %v1600
    %v1602 = vlaneseq
    %v1603 = vshrl.u32 %v1602, 7
    %v1604 = vsub.s32 %v1601, %v1603
    %v1605 = vrot.slane %v1591, %v1604
    %v1606 = vcombine.low %v1598, %v1605
    %v1608 = vunpack.c.l.s4 1966171168
    %v1609 = vunpack.c.0.s8 %v1608
    %v1610 = vlaneseq
    %v1611 = vshrl.u32 %v1610, 7
    %v1612 = vsub.s32 %v1609, %v1611
    %v1613 = vrot.slane %v1606, %v1612
    %v1615 = vsub.f32 %v1218, %v1613
    %v1616 = vmul.f32 %v1170, %v1565
    %v1617 = vmul.f32 %v1172, %v1569
    %v1618 = vmul.f32 %v1211, %v1573
    %v1619 = vmul.f32 %v1213, %v1577
    %v1621 = vlaneseq
    %v1622 = vshrl.u32 %v1621, 7
    %v1623 = vsub.s32 0, %v1622
    %v1624 = vrot.slane %v1615, %v1623
    %v1625 = vlaneseq
    %v1626 = vshrl.u32 %v1625, 7
    %v1627 = vsub.s32 1, %v1626
    %v1628 = vrot.slane %v1615, %v1627
    %v1629 = vlaneseq
    %v1630 = vshrl.u32 %v1629, 7
    %v1631 = vsub.s32 2, %v1630
    %v1632 = vrot.slane %v1615, %v1631
    %v1633 = vlaneseq
    %v1634 = vshrl.u32 %v1633, 7
    %v1635 = vsub.s32 3, %v1634
    %v1636 = vrot.slane %v1615, %v1635
    %v1641 = vadd.f32 %v1616, %v1624
    %v1642 = vadd.f32 %v1617, %v1628
    %v1643 = vadd.f32 %v1618, %v1632
    %v1644 = vadd.f32 %v1619, %v1636
    %v1645 = vmul.f32 %v1641, 0.2
    %v1646 = vmul.f32 %v1642, 0.2
    %v1647 = vmul.f32 %v1643, 0.2
    %v1648 = vmul.f32 %v1644, 0.2
    %v1649 = vmax.f32 %v1641, %v1645
    %v1650 = vmax.f32 %v1642, %v1646
    %v1651 = vmax.f32 %v1643, %v1647
    %v1652 = vmax.f32 %v1644, %v1648
    %s1653 = smul.u32 4, 64
    %s1654 = smul.u32 %s1653, 8
    %s1655 = sshll.u32 %s1654, 4
    %1656 = dma.done [#allocation4], %s1655
    %v1657 = vpack.c.bf16 %v1649, %v1649
    %v1658 = vpack.c.bf16 %v1650, %v1650
    %v1659 = vpack.c.bf16 %v1651, %v1651
    %v1660 = vpack.c.bf16 %v1652, %v1652
    %v1661 = vld [vmem:[#allocation2] sm:$0xff]
    %v1662 = vld [vmem:[#allocation2 + $0x8] sm:$0xff]
    %v1663 = vld [vmem:[#allocation2 + $0x10] sm:$0xff]
    %v1664 = vld [vmem:[#allocation2 + $0x18] sm:$0xff]
    %v1665 = vld [vmem:[#allocation2 + $0x20] sm:$0xff]
    %v1666 = vld [vmem:[#allocation2 + $0x28] sm:$0xff]
    %v1667 = vld [vmem:[#allocation2 + $0x30] sm:$0xff]
    %v1668 = vld [vmem:[#allocation2 + $0x38] sm:$0xff]
    %v1669 = vld [vmem:[#allocation2 + $0x40] sm:$0xff]
    %v1670 = vld [vmem:[#allocation2 + $0x48] sm:$0xff]
    %v1671 = vld [vmem:[#allocation2 + $0x50] sm:$0xff]
    %v1672 = vld [vmem:[#allocation2 + $0x58] sm:$0xff]
    %v1673 = vld [vmem:[#allocation2 + $0x60] sm:$0xff]
    %v1674 = vld [vmem:[#allocation2 + $0x68] sm:$0xff]
    %v1675 = vld [vmem:[#allocation2 + $0x70] sm:$0xff]
    %v1676 = vld [vmem:[#allocation2 + $0x78] sm:$0xff]
    %v1677 = vld [vmem:[#allocation2 + $0x80] sm:$0xff]
    %v1678 = vld [vmem:[#allocation2 + $0x88] sm:$0xff]
    %v1679 = vld [vmem:[#allocation2 + $0x90] sm:$0xff]
    %v1680 = vld [vmem:[#allocation2 + $0x98] sm:$0xff]
    %v1681 = vld [vmem:[#allocation2 + $0xa0] sm:$0xff]
    %v1682 = vld [vmem:[#allocation2 + $0xa8] sm:$0xff]
    %v1683 = vld [vmem:[#allocation2 + $0xb0] sm:$0xff]
    %v1684 = vld [vmem:[#allocation2 + $0xb8] sm:$0xff]
    %v1685 = vld [vmem:[#allocation2 + $0xc0] sm:$0xff]
    %v1686 = vld [vmem:[#allocation2 + $0xc8] sm:$0xff]
    %v1687 = vld [vmem:[#allocation2 + $0xd0] sm:$0xff]
    %v1688 = vld [vmem:[#allocation2 + $0xd8] sm:$0xff]
    %v1689 = vld [vmem:[#allocation2 + $0xe0] sm:$0xff]
    %v1690 = vld [vmem:[#allocation2 + $0xe8] sm:$0xff]
    %v1691 = vld [vmem:[#allocation2 + $0xf0] sm:$0xff]
    %v1692 = vld [vmem:[#allocation2 + $0xf8] sm:$0xff]
    %v1693 = vld [vmem:[#allocation2 + $0x100] sm:$0xff]
    %v1694 = vld [vmem:[#allocation2 + $0x108] sm:$0xff]
    %v1695 = vld [vmem:[#allocation2 + $0x110] sm:$0xff]
    %v1696 = vld [vmem:[#allocation2 + $0x118] sm:$0xff]
    %v1697 = vld [vmem:[#allocation2 + $0x120] sm:$0xff]
    %v1698 = vld [vmem:[#allocation2 + $0x128] sm:$0xff]
    %v1699 = vld [vmem:[#allocation2 + $0x130] sm:$0xff]
    %v1700 = vld [vmem:[#allocation2 + $0x138] sm:$0xff]
    %v1701 = vld [vmem:[#allocation2 + $0x140] sm:$0xff]
    %v1702 = vld [vmem:[#allocation2 + $0x148] sm:$0xff]
    %v1703 = vld [vmem:[#allocation2 + $0x150] sm:$0xff]
    %v1704 = vld [vmem:[#allocation2 + $0x158] sm:$0xff]
    %v1705 = vld [vmem:[#allocation2 + $0x160] sm:$0xff]
    %v1706 = vld [vmem:[#allocation2 + $0x168] sm:$0xff]
    %v1707 = vld [vmem:[#allocation2 + $0x170] sm:$0xff]
    %v1708 = vld [vmem:[#allocation2 + $0x178] sm:$0xff]
    %v1709 = vld [vmem:[#allocation2 + $0x180] sm:$0xff]
    %v1710 = vld [vmem:[#allocation2 + $0x188] sm:$0xff]
    %v1711 = vld [vmem:[#allocation2 + $0x190] sm:$0xff]
    %v1712 = vld [vmem:[#allocation2 + $0x198] sm:$0xff]
    %v1713 = vld [vmem:[#allocation2 + $0x1a0] sm:$0xff]
    %v1714 = vld [vmem:[#allocation2 + $0x1a8] sm:$0xff]
    %v1715 = vld [vmem:[#allocation2 + $0x1b0] sm:$0xff]
    %v1716 = vld [vmem:[#allocation2 + $0x1b8] sm:$0xff]
    %v1717 = vld [vmem:[#allocation2 + $0x1c0] sm:$0xff]
    %v1718 = vld [vmem:[#allocation2 + $0x1c8] sm:$0xff]
    %v1719 = vld [vmem:[#allocation2 + $0x1d0] sm:$0xff]
    %v1720 = vld [vmem:[#allocation2 + $0x1d8] sm:$0xff]
    %v1721 = vld [vmem:[#allocation2 + $0x1e0] sm:$0xff]
    %v1722 = vld [vmem:[#allocation2 + $0x1e8] sm:$0xff]
    %v1723 = vld [vmem:[#allocation2 + $0x1f0] sm:$0xff]
    %v1724 = vld [vmem:[#allocation2 + $0x1f8] sm:$0xff]
    %v1725 = vld [vmem:[#allocation2 + $0x200] sm:$0xff]
    %v1726 = vld [vmem:[#allocation2 + $0x208] sm:$0xff]
    %v1727 = vld [vmem:[#allocation2 + $0x210] sm:$0xff]
    %v1728 = vld [vmem:[#allocation2 + $0x218] sm:$0xff]
    %v1729 = vld [vmem:[#allocation2 + $0x220] sm:$0xff]
    %v1730 = vld [vmem:[#allocation2 + $0x228] sm:$0xff]
    %v1731 = vld [vmem:[#allocation2 + $0x230] sm:$0xff]
    %v1732 = vld [vmem:[#allocation2 + $0x238] sm:$0xff]
    %v1733 = vld [vmem:[#allocation2 + $0x240] sm:$0xff]
    %v1734 = vld [vmem:[#allocation2 + $0x248] sm:$0xff]
    %v1735 = vld [vmem:[#allocation2 + $0x250] sm:$0xff]
    %v1736 = vld [vmem:[#allocation2 + $0x258] sm:$0xff]
    %v1737 = vld [vmem:[#allocation2 + $0x260] sm:$0xff]
    %v1738 = vld [vmem:[#allocation2 + $0x268] sm:$0xff]
    %v1739 = vld [vmem:[#allocation2 + $0x270] sm:$0xff]
    %v1740 = vld [vmem:[#allocation2 + $0x278] sm:$0xff]
    %v1741 = vld [vmem:[#allocation2 + $0x280] sm:$0xff]
    %v1742 = vld [vmem:[#allocation2 + $0x288] sm:$0xff]
    %v1743 = vld [vmem:[#allocation2 + $0x290] sm:$0xff]
    %v1744 = vld [vmem:[#allocation2 + $0x298] sm:$0xff]
    %v1745 = vld [vmem:[#allocation2 + $0x2a0] sm:$0xff]
    %v1746 = vld [vmem:[#allocation2 + $0x2a8] sm:$0xff]
    %v1747 = vld [vmem:[#allocation2 + $0x2b0] sm:$0xff]
    %v1748 = vld [vmem:[#allocation2 + $0x2b8] sm:$0xff]
    %v1749 = vld [vmem:[#allocation2 + $0x2c0] sm:$0xff]
    %v1750 = vld [vmem:[#allocation2 + $0x2c8] sm:$0xff]
    %v1751 = vld [vmem:[#allocation2 + $0x2d0] sm:$0xff]
    %v1752 = vld [vmem:[#allocation2 + $0x2d8] sm:$0xff]
    %v1753 = vld [vmem:[#allocation2 + $0x2e0] sm:$0xff]
    %v1754 = vld [vmem:[#allocation2 + $0x2e8] sm:$0xff]
    %v1755 = vld [vmem:[#allocation2 + $0x2f0] sm:$0xff]
    %v1756 = vld [vmem:[#allocation2 + $0x2f8] sm:$0xff]
    %v1757 = vld [vmem:[#allocation2 + $0x300] sm:$0xff]
    %v1758 = vld [vmem:[#allocation2 + $0x308] sm:$0xff]
    %v1759 = vld [vmem:[#allocation2 + $0x310] sm:$0xff]
    %v1760 = vld [vmem:[#allocation2 + $0x318] sm:$0xff]
    %v1761 = vld [vmem:[#allocation2 + $0x320] sm:$0xff]
    %v1762 = vld [vmem:[#allocation2 + $0x328] sm:$0xff]
    %v1763 = vld [vmem:[#allocation2 + $0x330] sm:$0xff]
    %v1764 = vld [vmem:[#allocation2 + $0x338] sm:$0xff]
    %v1765 = vld [vmem:[#allocation2 + $0x340] sm:$0xff]
    %v1766 = vld [vmem:[#allocation2 + $0x348] sm:$0xff]
    %v1767 = vld [vmem:[#allocation2 + $0x350] sm:$0xff]
    %v1768 = vld [vmem:[#allocation2 + $0x358] sm:$0xff]
    %v1769 = vld [vmem:[#allocation2 + $0x360] sm:$0xff]
    %v1770 = vld [vmem:[#allocation2 + $0x368] sm:$0xff]
    %v1771 = vld [vmem:[#allocation2 + $0x370] sm:$0xff]
    %v1772 = vld [vmem:[#allocation2 + $0x378] sm:$0xff]
    %v1773 = vld [vmem:[#allocation2 + $0x380] sm:$0xff]
    %v1774 = vld [vmem:[#allocation2 + $0x388] sm:$0xff]
    %v1775 = vld [vmem:[#allocation2 + $0x390] sm:$0xff]
    %v1776 = vld [vmem:[#allocation2 + $0x398] sm:$0xff]
    %v1777 = vld [vmem:[#allocation2 + $0x3a0] sm:$0xff]
    %v1778 = vld [vmem:[#allocation2 + $0x3a8] sm:$0xff]
    %v1779 = vld [vmem:[#allocation2 + $0x3b0] sm:$0xff]
    %v1780 = vld [vmem:[#allocation2 + $0x3b8] sm:$0xff]
    %v1781 = vld [vmem:[#allocation2 + $0x3c0] sm:$0xff]
    %v1782 = vld [vmem:[#allocation2 + $0x3c8] sm:$0xff]
    %v1783 = vld [vmem:[#allocation2 + $0x3d0] sm:$0xff]
    %v1784 = vld [vmem:[#allocation2 + $0x3d8] sm:$0xff]
    %v1785 = vld [vmem:[#allocation2 + $0x3e0] sm:$0xff]
    %v1786 = vld [vmem:[#allocation2 + $0x3e8] sm:$0xff]
    %v1787 = vld [vmem:[#allocation2 + $0x3f0] sm:$0xff]
    %v1788 = vld [vmem:[#allocation2 + $0x3f8] sm:$0xff]
    %v1789 = vld [vmem:[#allocation2 + $0x400] sm:$0xff]
    %v1790 = vld [vmem:[#allocation2 + $0x408] sm:$0xff]
    %v1791 = vld [vmem:[#allocation2 + $0x410] sm:$0xff]
    %v1792 = vld [vmem:[#allocation2 + $0x418] sm:$0xff]
    %v1793 = vld [vmem:[#allocation2 + $0x420] sm:$0xff]
    %v1794 = vld [vmem:[#allocation2 + $0x428] sm:$0xff]
    %v1795 = vld [vmem:[#allocation2 + $0x430] sm:$0xff]
    %v1796 = vld [vmem:[#allocation2 + $0x438] sm:$0xff]
    %v1797 = vld [vmem:[#allocation2 + $0x440] sm:$0xff]
    %v1798 = vld [vmem:[#allocation2 + $0x448] sm:$0xff]
    %v1799 = vld [vmem:[#allocation2 + $0x450] sm:$0xff]
    %v1800 = vld [vmem:[#allocation2 + $0x458] sm:$0xff]
    %v1801 = vld [vmem:[#allocation2 + $0x460] sm:$0xff]
    %v1802 = vld [vmem:[#allocation2 + $0x468] sm:$0xff]
    %v1803 = vld [vmem:[#allocation2 + $0x470] sm:$0xff]
    %v1804 = vld [vmem:[#allocation2 + $0x478] sm:$0xff]
    %v1805 = vld [vmem:[#allocation2 + $0x480] sm:$0xff]
    %v1806 = vld [vmem:[#allocation2 + $0x488] sm:$0xff]
    %v1807 = vld [vmem:[#allocation2 + $0x490] sm:$0xff]
    %v1808 = vld [vmem:[#allocation2 + $0x498] sm:$0xff]
    %v1809 = vld [vmem:[#allocation2 + $0x4a0] sm:$0xff]
    %v1810 = vld [vmem:[#allocation2 + $0x4a8] sm:$0xff]
    %v1811 = vld [vmem:[#allocation2 + $0x4b0] sm:$0xff]
    %v1812 = vld [vmem:[#allocation2 + $0x4b8] sm:$0xff]
    %v1813 = vld [vmem:[#allocation2 + $0x4c0] sm:$0xff]
    %v1814 = vld [vmem:[#allocation2 + $0x4c8] sm:$0xff]
    %v1815 = vld [vmem:[#allocation2 + $0x4d0] sm:$0xff]
    %v1816 = vld [vmem:[#allocation2 + $0x4d8] sm:$0xff]
    %v1817 = vld [vmem:[#allocation2 + $0x4e0] sm:$0xff]
    %v1818 = vld [vmem:[#allocation2 + $0x4e8] sm:$0xff]
    %v1819 = vld [vmem:[#allocation2 + $0x4f0] sm:$0xff]
    %v1820 = vld [vmem:[#allocation2 + $0x4f8] sm:$0xff]
    %v1821 = vld [vmem:[#allocation2 + $0x500] sm:$0xff]
    %v1822 = vld [vmem:[#allocation2 + $0x508] sm:$0xff]
    %v1823 = vld [vmem:[#allocation2 + $0x510] sm:$0xff]
    %v1824 = vld [vmem:[#allocation2 + $0x518] sm:$0xff]
    %v1825 = vld [vmem:[#allocation2 + $0x520] sm:$0xff]
    %v1826 = vld [vmem:[#allocation2 + $0x528] sm:$0xff]
    %v1827 = vld [vmem:[#allocation2 + $0x530] sm:$0xff]
    %v1828 = vld [vmem:[#allocation2 + $0x538] sm:$0xff]
    %v1829 = vld [vmem:[#allocation2 + $0x540] sm:$0xff]
    %v1830 = vld [vmem:[#allocation2 + $0x548] sm:$0xff]
    %v1831 = vld [vmem:[#allocation2 + $0x550] sm:$0xff]
    %v1832 = vld [vmem:[#allocation2 + $0x558] sm:$0xff]
    %v1833 = vld [vmem:[#allocation2 + $0x560] sm:$0xff]
    %v1834 = vld [vmem:[#allocation2 + $0x568] sm:$0xff]
    %v1835 = vld [vmem:[#allocation2 + $0x570] sm:$0xff]
    %v1836 = vld [vmem:[#allocation2 + $0x578] sm:$0xff]
    %v1837 = vld [vmem:[#allocation2 + $0x580] sm:$0xff]
    %v1838 = vld [vmem:[#allocation2 + $0x588] sm:$0xff]
    %v1839 = vld [vmem:[#allocation2 + $0x590] sm:$0xff]
    %v1840 = vld [vmem:[#allocation2 + $0x598] sm:$0xff]
    %v1841 = vld [vmem:[#allocation2 + $0x5a0] sm:$0xff]
    %v1842 = vld [vmem:[#allocation2 + $0x5a8] sm:$0xff]
    %v1843 = vld [vmem:[#allocation2 + $0x5b0] sm:$0xff]
    %v1844 = vld [vmem:[#allocation2 + $0x5b8] sm:$0xff]
    %v1845 = vld [vmem:[#allocation2 + $0x5c0] sm:$0xff]
    %v1846 = vld [vmem:[#allocation2 + $0x5c8] sm:$0xff]
    %v1847 = vld [vmem:[#allocation2 + $0x5d0] sm:$0xff]
    %v1848 = vld [vmem:[#allocation2 + $0x5d8] sm:$0xff]
    %v1849 = vld [vmem:[#allocation2 + $0x5e0] sm:$0xff]
    %v1850 = vld [vmem:[#allocation2 + $0x5e8] sm:$0xff]
    %v1851 = vld [vmem:[#allocation2 + $0x5f0] sm:$0xff]
    %v1852 = vld [vmem:[#allocation2 + $0x5f8] sm:$0xff]
    %v1853 = vld [vmem:[#allocation2 + $0x600] sm:$0xff]
    %v1854 = vld [vmem:[#allocation2 + $0x608] sm:$0xff]
    %v1855 = vld [vmem:[#allocation2 + $0x610] sm:$0xff]
    %v1856 = vld [vmem:[#allocation2 + $0x618] sm:$0xff]
    %v1857 = vld [vmem:[#allocation2 + $0x620] sm:$0xff]
    %v1858 = vld [vmem:[#allocation2 + $0x628] sm:$0xff]
    %v1859 = vld [vmem:[#allocation2 + $0x630] sm:$0xff]
    %v1860 = vld [vmem:[#allocation2 + $0x638] sm:$0xff]
    %v1861 = vld [vmem:[#allocation2 + $0x640] sm:$0xff]
    %v1862 = vld [vmem:[#allocation2 + $0x648] sm:$0xff]
    %v1863 = vld [vmem:[#allocation2 + $0x650] sm:$0xff]
    %v1864 = vld [vmem:[#allocation2 + $0x658] sm:$0xff]
    %v1865 = vld [vmem:[#allocation2 + $0x660] sm:$0xff]
    %v1866 = vld [vmem:[#allocation2 + $0x668] sm:$0xff]
    %v1867 = vld [vmem:[#allocation2 + $0x670] sm:$0xff]
    %v1868 = vld [vmem:[#allocation2 + $0x678] sm:$0xff]
    %v1869 = vld [vmem:[#allocation2 + $0x680] sm:$0xff]
    %v1870 = vld [vmem:[#allocation2 + $0x688] sm:$0xff]
    %v1871 = vld [vmem:[#allocation2 + $0x690] sm:$0xff]
    %v1872 = vld [vmem:[#allocation2 + $0x698] sm:$0xff]
    %v1873 = vld [vmem:[#allocation2 + $0x6a0] sm:$0xff]
    %v1874 = vld [vmem:[#allocation2 + $0x6a8] sm:$0xff]
    %v1875 = vld [vmem:[#allocation2 + $0x6b0] sm:$0xff]
    %v1876 = vld [vmem:[#allocation2 + $0x6b8] sm:$0xff]
    %v1877 = vld [vmem:[#allocation2 + $0x6c0] sm:$0xff]
    %v1878 = vld [vmem:[#allocation2 + $0x6c8] sm:$0xff]
    %v1879 = vld [vmem:[#allocation2 + $0x6d0] sm:$0xff]
    %v1880 = vld [vmem:[#allocation2 + $0x6d8] sm:$0xff]
    %v1881 = vld [vmem:[#allocation2 + $0x6e0] sm:$0xff]
    %v1882 = vld [vmem:[#allocation2 + $0x6e8] sm:$0xff]
    %v1883 = vld [vmem:[#allocation2 + $0x6f0] sm:$0xff]
    %v1884 = vld [vmem:[#allocation2 + $0x6f8] sm:$0xff]
    %v1885 = vld [vmem:[#allocation2 + $0x700] sm:$0xff]
    %v1886 = vld [vmem:[#allocation2 + $0x708] sm:$0xff]
    %v1887 = vld [vmem:[#allocation2 + $0x710] sm:$0xff]
    %v1888 = vld [vmem:[#allocation2 + $0x718] sm:$0xff]
    %v1889 = vld [vmem:[#allocation2 + $0x720] sm:$0xff]
    %v1890 = vld [vmem:[#allocation2 + $0x728] sm:$0xff]
    %v1891 = vld [vmem:[#allocation2 + $0x730] sm:$0xff]
    %v1892 = vld [vmem:[#allocation2 + $0x738] sm:$0xff]
    %v1893 = vld [vmem:[#allocation2 + $0x740] sm:$0xff]
    %v1894 = vld [vmem:[#allocation2 + $0x748] sm:$0xff]
    %v1895 = vld [vmem:[#allocation2 + $0x750] sm:$0xff]
    %v1896 = vld [vmem:[#allocation2 + $0x758] sm:$0xff]
    %v1897 = vld [vmem:[#allocation2 + $0x760] sm:$0xff]
    %v1898 = vld [vmem:[#allocation2 + $0x768] sm:$0xff]
    %v1899 = vld [vmem:[#allocation2 + $0x770] sm:$0xff]
    %v1900 = vld [vmem:[#allocation2 + $0x778] sm:$0xff]
    %v1901 = vld [vmem:[#allocation2 + $0x780] sm:$0xff]
    %v1902 = vld [vmem:[#allocation2 + $0x788] sm:$0xff]
    %v1903 = vld [vmem:[#allocation2 + $0x790] sm:$0xff]
    %v1904 = vld [vmem:[#allocation2 + $0x798] sm:$0xff]
    %v1905 = vld [vmem:[#allocation2 + $0x7a0] sm:$0xff]
    %v1906 = vld [vmem:[#allocation2 + $0x7a8] sm:$0xff]
    %v1907 = vld [vmem:[#allocation2 + $0x7b0] sm:$0xff]
    %v1908 = vld [vmem:[#allocation2 + $0x7b8] sm:$0xff]
    %v1909 = vld [vmem:[#allocation2 + $0x7c0] sm:$0xff]
    %v1910 = vld [vmem:[#allocation2 + $0x7c8] sm:$0xff]
    %v1911 = vld [vmem:[#allocation2 + $0x7d0] sm:$0xff]
    %v1912 = vld [vmem:[#allocation2 + $0x7d8] sm:$0xff]
    %v1913 = vld [vmem:[#allocation2 + $0x7e0] sm:$0xff]
    %v1914 = vld [vmem:[#allocation2 + $0x7e8] sm:$0xff]
    %v1915 = vld [vmem:[#allocation2 + $0x7f0] sm:$0xff]
    %v1916 = vld [vmem:[#allocation2 + $0x7f8] sm:$0xff]
    %1917 = vmatprep.subr.bf16.mxu0 %v1662
    %1918 = vmatpush1.bf16.msra.mxu0 %v1661
    %1919 = vmatprep.subr.bf16.mxu0 %v1670
    %1920 = vmatpush1.bf16.msra.mxu0 %v1669
    %1921 = vmatprep.subr.bf16.mxu0 %v1678
    %1922 = vmatpush1.bf16.msra.mxu0 %v1677
    %1923 = vmatprep.subr.bf16.mxu0 %v1686
    %1924 = vmatpush1.bf16.msra.mxu0 %v1685
    %1925 = vmatprep.subr.bf16.mxu0 %v1694
    %1926 = vmatpush1.bf16.msra.mxu0 %v1693
    %1927 = vmatprep.subr.bf16.mxu0 %v1702
    %1928 = vmatpush1.bf16.msra.mxu0 %v1701
    %1929 = vmatprep.subr.bf16.mxu0 %v1710
    %1930 = vmatpush1.bf16.msra.mxu0 %v1709
    %1931 = vmatprep.subr.bf16.mxu0 %v1718
    %1932 = vmatpush1.bf16.msra.mxu0 %v1717
    %1933 = vmatprep.subr.bf16.mxu0 %v1726
    %1934 = vmatpush1.bf16.msra.mxu0 %v1725
    %1935 = vmatprep.subr.bf16.mxu0 %v1734
    %1936 = vmatpush1.bf16.msra.mxu0 %v1733
    %1937 = vmatprep.subr.bf16.mxu0 %v1742
    %1938 = vmatpush1.bf16.msra.mxu0 %v1741
    %1939 = vmatprep.subr.bf16.mxu0 %v1750
    %1940 = vmatpush1.bf16.msra.mxu0 %v1749
    %1941 = vmatprep.subr.bf16.mxu0 %v1758
    %1942 = vmatpush1.bf16.msra.mxu0 %v1757
    %1943 = vmatprep.subr.bf16.mxu0 %v1766
    %1944 = vmatpush1.bf16.msra.mxu0 %v1765
    %1945 = vmatprep.subr.bf16.mxu0 %v1774
    %1946 = vmatpush1.bf16.msra.mxu0 %v1773
    %1947 = vmatprep.subr.bf16.mxu0 %v1782
    %1948 = vmatpush1.bf16.msra.mxu0 %v1781
    %1949 = vmatprep.mubr.bf16.mxu0 %v1658
    %1950 = vmatmul.mubr.bf16.gmra.mrb[0].mxu0 %v1657
    %v1951 = vpop.f32.mrb[0].mxu0
    %v1952 = vadd.f32 0.0, %v1951
    %v1953 = vpop.f32.mrb[0].mxu0
    %v1954 = vadd.f32 0.0, %v1953
    %v1955 = vpop.f32.mrb[0].mxu0
    %v1956 = vpop.f32.mrb[0].mxu0
    %1957 = vdwg.mxu0
    %1958 = vmatprep.subr.bf16.mxu0 %v1790
    %1959 = vmatpush1.bf16.msra.mxu0 %v1789
    %1960 = vmatprep.subr.bf16.mxu0 %v1798
    %1961 = vmatpush1.bf16.msra.mxu0 %v1797
    %1962 = vmatprep.subr.bf16.mxu0 %v1806
    %1963 = vmatpush1.bf16.msra.mxu0 %v1805
    %1964 = vmatprep.subr.bf16.mxu0 %v1814
    %1965 = vmatpush1.bf16.msra.mxu0 %v1813
    %1966 = vmatprep.subr.bf16.mxu0 %v1822
    %1967 = vmatpush1.bf16.msra.mxu0 %v1821
    %1968 = vmatprep.subr.bf16.mxu0 %v1830
    %1969 = vmatpush1.bf16.msra.mxu0 %v1829
    %1970 = vmatprep.subr.bf16.mxu0 %v1838
    %1971 = vmatpush1.bf16.msra.mxu0 %v1837
    %1972 = vmatprep.subr.bf16.mxu0 %v1846
    %1973 = vmatpush1.bf16.msra.mxu0 %v1845
    %1974 = vmatprep.subr.bf16.mxu0 %v1854
    %1975 = vmatpush1.bf16.msra.mxu0 %v1853
    %1976 = vmatprep.subr.bf16.mxu0 %v1862
    %1977 = vmatpush1.bf16.msra.mxu0 %v1861
    %1978 = vmatprep.subr.bf16.mxu0 %v1870
    %1979 = vmatpush1.bf16.msra.mxu0 %v1869
    %1980 = vmatprep.subr.bf16.mxu0 %v1878
    %1981 = vmatpush1.bf16.msra.mxu0 %v1877
    %1982 = vmatprep.subr.bf16.mxu0 %v1886
    %1983 = vmatpush1.bf16.msra.mxu0 %v1885
    %1984 = vmatprep.subr.bf16.mxu0 %v1894
    %1985 = vmatpush1.bf16.msra.mxu0 %v1893
    %1986 = vmatprep.subr.bf16.mxu0 %v1902
    %1987 = vmatpush1.bf16.msra.mxu0 %v1901
    %1988 = vmatprep.subr.bf16.mxu0 %v1910
    %1989 = vmatpush1.bf16.msra.mxu0 %v1909
    %1990 = vmatprep.mubr.bf16.mxu0 %v1660
    %1991 = vmatmul.mubr.bf16.gmra.mrb[0].mxu0 %v1659
    %v1992 = vpop.f32.mrb[0].mxu0
    %v1993 = vadd.f32 %v1952, %v1992
    %v1994 = vpop.f32.mrb[0].mxu0
    %v1995 = vadd.f32 %v1954, %v1994
    %v1996 = vpop.f32.mrb[0].mxu0
    %v1997 = vpop.f32.mrb[0].mxu0
    %1998 = vdwg.mxu0
    %1999 = vmatprep.subr.bf16.mxu0 %v1664
    %2000 = vmatpush1.bf16.msra.mxu0 %v1663
    %2001 = vmatprep.subr.bf16.mxu0 %v1672
    %2002 = vmatpush1.bf16.msra.mxu0 %v1671
    %2003 = vmatprep.subr.bf16.mxu0 %v1680
    %2004 = vmatpush1.bf16.msra.mxu0 %v1679
    %2005 = vmatprep.subr.bf16.mxu0 %v1688
    %2006 = vmatpush1.bf16.msra.mxu0 %v1687
    %2007 = vmatprep.subr.bf16.mxu0 %v1696
    %2008 = vmatpush1.bf16.msra.mxu0 %v1695
    %2009 = vmatprep.subr.bf16.mxu0 %v1704
    %2010 = vmatpush1.bf16.msra.mxu0 %v1703
    %2011 = vmatprep.subr.bf16.mxu0 %v1712
    %2012 = vmatpush1.bf16.msra.mxu0 %v1711
    %2013 = vmatprep.subr.bf16.mxu0 %v1720
    %2014 = vmatpush1.bf16.msra.mxu0 %v1719
    %2015 = vmatprep.subr.bf16.mxu0 %v1728
    %2016 = vmatpush1.bf16.msra.mxu0 %v1727
    %2017 = vmatprep.subr.bf16.mxu0 %v1736
    %2018 = vmatpush1.bf16.msra.mxu0 %v1735
    %2019 = vmatprep.subr.bf16.mxu0 %v1744
    %2020 = vmatpush1.bf16.msra.mxu0 %v1743
    %2021 = vmatprep.subr.bf16.mxu0 %v1752
    %2022 = vmatpush1.bf16.msra.mxu0 %v1751
    %2023 = vmatprep.subr.bf16.mxu0 %v1760
    %2024 = vmatpush1.bf16.msra.mxu0 %v1759
    %2025 = vmatprep.subr.bf16.mxu0 %v1768
    %2026 = vmatpush1.bf16.msra.mxu0 %v1767
    %2027 = vmatprep.subr.bf16.mxu0 %v1776
    %2028 = vmatpush1.bf16.msra.mxu0 %v1775
    %2029 = vmatprep.subr.bf16.mxu0 %v1784
    %2030 = vmatpush1.bf16.msra.mxu0 %v1783
    %2031 = vmatprep.mubr.bf16.mxu0 %v1658
    %2032 = vmatmul.mubr.bf16.gmra.mrb[0].mxu0 %v1657
    %v2033 = vpop.f32.mrb[0].mxu0
    %v2034 = vadd.f32 0.0, %v2033
    %v2035 = vpop.f32.mrb[0].mxu0
    %v2036 = vadd.f32 0.0, %v2035
    %v2037 = vpop.f32.mrb[0].mxu0
    %v2038 = vpop.f32.mrb[0].mxu0
    %2039 = vdwg.mxu0
    %2040 = vmatprep.subr.bf16.mxu0 %v1792
    %2041 = vmatpush1.bf16.msra.mxu0 %v1791
    %2042 = vmatprep.subr.bf16.mxu0 %v1800
    %2043 = vmatpush1.bf16.msra.mxu0 %v1799
    %2044 = vmatprep.subr.bf16.mxu0 %v1808
    %2045 = vmatpush1.bf16.msra.mxu0 %v1807
    %2046 = vmatprep.subr.bf16.mxu0 %v1816
    %2047 = vmatpush1.bf16.msra.mxu0 %v1815
    %2048 = vmatprep.subr.bf16.mxu0 %v1824
    %2049 = vmatpush1.bf16.msra.mxu0 %v1823
    %2050 = vmatprep.subr.bf16.mxu0 %v1832
    %2051 = vmatpush1.bf16.msra.mxu0 %v1831
    %2052 = vmatprep.subr.bf16.mxu0 %v1840
    %2053 = vmatpush1.bf16.msra.mxu0 %v1839
    %2054 = vmatprep.subr.bf16.mxu0 %v1848
    %2055 = vmatpush1.bf16.msra.mxu0 %v1847
    %2056 = vmatprep.subr.bf16.mxu0 %v1856
    %2057 = vmatpush1.bf16.msra.mxu0 %v1855
    %2058 = vmatprep.subr.bf16.mxu0 %v1864
    %2059 = vmatpush1.bf16.msra.mxu0 %v1863
    %2060 = vmatprep.subr.bf16.mxu0 %v1872
    %2061 = vmatpush1.bf16.msra.mxu0 %v1871
    %2062 = vmatprep.subr.bf16.mxu0 %v1880
    %2063 = vmatpush1.bf16.msra.mxu0 %v1879
    %2064 = vmatprep.subr.bf16.mxu0 %v1888
    %2065 = vmatpush1.bf16.msra.mxu0 %v1887
    %2066 = vmatprep.subr.bf16.mxu0 %v1896
    %2067 = vmatpush1.bf16.msra.mxu0 %v1895
    %2068 = vmatprep.subr.bf16.mxu0 %v1904
    %2069 = vmatpush1.bf16.msra.mxu0 %v1903
    %2070 = vmatprep.subr.bf16.mxu0 %v1912
    %2071 = vmatpush1.bf16.msra.mxu0 %v1911
    %2072 = vmatprep.mubr.bf16.mxu0 %v1660
    %2073 = vmatmul.mubr.bf16.gmra.mrb[0].mxu0 %v1659
    %v2074 = vpop.f32.mrb[0].mxu0
    %v2075 = vadd.f32 %v2034, %v2074
    %v2076 = vpop.f32.mrb[0].mxu0
    %v2077 = vadd.f32 %v2036, %v2076
    %v2078 = vpop.f32.mrb[0].mxu0
    %v2079 = vpop.f32.mrb[0].mxu0
    %2080 = vdwg.mxu0
    %2081 = vmatprep.subr.bf16.mxu0 %v1666
    %2082 = vmatpush1.bf16.msra.mxu0 %v1665
    %2083 = vmatprep.subr.bf16.mxu0 %v1674
    %2084 = vmatpush1.bf16.msra.mxu0 %v1673
    %2085 = vmatprep.subr.bf16.mxu0 %v1682
    %2086 = vmatpush1.bf16.msra.mxu0 %v1681
    %2087 = vmatprep.subr.bf16.mxu0 %v1690
    %2088 = vmatpush1.bf16.msra.mxu0 %v1689
    %2089 = vmatprep.subr.bf16.mxu0 %v1698
    %2090 = vmatpush1.bf16.msra.mxu0 %v1697
    %2091 = vmatprep.subr.bf16.mxu0 %v1706
    %2092 = vmatpush1.bf16.msra.mxu0 %v1705
    %2093 = vmatprep.subr.bf16.mxu0 %v1714
    %2094 = vmatpush1.bf16.msra.mxu0 %v1713
    %2095 = vmatprep.subr.bf16.mxu0 %v1722
    %2096 = vmatpush1.bf16.msra.mxu0 %v1721
    %2097 = vmatprep.subr.bf16.mxu0 %v1730
    %2098 = vmatpush1.bf16.msra.mxu0 %v1729
    %2099 = vmatprep.subr.bf16.mxu0 %v1738
    %2100 = vmatpush1.bf16.msra.mxu0 %v1737
    %2101 = vmatprep.subr.bf16.mxu0 %v1746
    %2102 = vmatpush1.bf16.msra.mxu0 %v1745
    %2103 = vmatprep.subr.bf16.mxu0 %v1754
    %2104 = vmatpush1.bf16.msra.mxu0 %v1753
    %2105 = vmatprep.subr.bf16.mxu0 %v1762
    %2106 = vmatpush1.bf16.msra.mxu0 %v1761
    %2107 = vmatprep.subr.bf16.mxu0 %v1770
    %2108 = vmatpush1.bf16.msra.mxu0 %v1769
    %2109 = vmatprep.subr.bf16.mxu0 %v1778
    %2110 = vmatpush1.bf16.msra.mxu0 %v1777
    %2111 = vmatprep.subr.bf16.mxu0 %v1786
    %2112 = vmatpush1.bf16.msra.mxu0 %v1785
    %2113 = vmatprep.mubr.bf16.mxu0 %v1658
    %2114 = vmatmul.mubr.bf16.gmra.mrb[0].mxu0 %v1657
    %v2115 = vpop.f32.mrb[0].mxu0
    %v2116 = vadd.f32 0.0, %v2115
    %v2117 = vpop.f32.mrb[0].mxu0
    %v2118 = vadd.f32 0.0, %v2117
    %v2119 = vpop.f32.mrb[0].mxu0
    %v2120 = vpop.f32.mrb[0].mxu0
    %2121 = vdwg.mxu0
    %2122 = vmatprep.subr.bf16.mxu0 %v1794
    %2123 = vmatpush1.bf16.msra.mxu0 %v1793
    %2124 = vmatprep.subr.bf16.mxu0 %v1802
    %2125 = vmatpush1.bf16.msra.mxu0 %v1801
    %2126 = vmatprep.subr.bf16.mxu0 %v1810
    %2127 = vmatpush1.bf16.msra.mxu0 %v1809
    %2128 = vmatprep.subr.bf16.mxu0 %v1818
    %2129 = vmatpush1.bf16.msra.mxu0 %v1817
    %2130 = vmatprep.subr.bf16.mxu0 %v1826
    %2131 = vmatpush1.bf16.msra.mxu0 %v1825
    %2132 = vmatprep.subr.bf16.mxu0 %v1834
    %2133 = vmatpush1.bf16.msra.mxu0 %v1833
    %2134 = vmatprep.subr.bf16.mxu0 %v1842
    %2135 = vmatpush1.bf16.msra.mxu0 %v1841
    %2136 = vmatprep.subr.bf16.mxu0 %v1850
    %2137 = vmatpush1.bf16.msra.mxu0 %v1849
    %2138 = vmatprep.subr.bf16.mxu0 %v1858
    %2139 = vmatpush1.bf16.msra.mxu0 %v1857
    %2140 = vmatprep.subr.bf16.mxu0 %v1866
    %2141 = vmatpush1.bf16.msra.mxu0 %v1865
    %2142 = vmatprep.subr.bf16.mxu0 %v1874
    %2143 = vmatpush1.bf16.msra.mxu0 %v1873
    %2144 = vmatprep.subr.bf16.mxu0 %v1882
    %2145 = vmatpush1.bf16.msra.mxu0 %v1881
    %2146 = vmatprep.subr.bf16.mxu0 %v1890
    %2147 = vmatpush1.bf16.msra.mxu0 %v1889
    %2148 = vmatprep.subr.bf16.mxu0 %v1898
    %2149 = vmatpush1.bf16.msra.mxu0 %v1897
    %2150 = vmatprep.subr.bf16.mxu0 %v1906
    %2151 = vmatpush1.bf16.msra.mxu0 %v1905
    %2152 = vmatprep.subr.bf16.mxu0 %v1914
    %2153 = vmatpush1.bf16.msra.mxu0 %v1913
    %2154 = vmatprep.mubr.bf16.mxu0 %v1660
    %2155 = vmatmul.mubr.bf16.gmra.mrb[0].mxu0 %v1659
    %v2156 = vpop.f32.mrb[0].mxu0
    %v2157 = vadd.f32 %v2116, %v2156
    %v2158 = vpop.f32.mrb[0].mxu0
    %v2159 = vadd.f32 %v2118, %v2158
    %v2160 = vpop.f32.mrb[0].mxu0
    %v2161 = vpop.f32.mrb[0].mxu0
    %2162 = vdwg.mxu0
    %2163 = vmatprep.subr.bf16.mxu0 %v1668
    %2164 = vmatpush1.bf16.msra.mxu0 %v1667
    %2165 = vmatprep.subr.bf16.mxu0 %v1676
    %2166 = vmatpush1.bf16.msra.mxu0 %v1675
    %2167 = vmatprep.subr.bf16.mxu0 %v1684
    %2168 = vmatpush1.bf16.msra.mxu0 %v1683
    %2169 = vmatprep.subr.bf16.mxu0 %v1692
    %2170 = vmatpush1.bf16.msra.mxu0 %v1691
    %2171 = vmatprep.subr.bf16.mxu0 %v1700
    %2172 = vmatpush1.bf16.msra.mxu0 %v1699
    %2173 = vmatprep.subr.bf16.mxu0 %v1708
    %2174 = vmatpush1.bf16.msra.mxu0 %v1707
    %2175 = vmatprep.subr.bf16.mxu0 %v1716
    %2176 = vmatpush1.bf16.msra.mxu0 %v1715
    %2177 = vmatprep.subr.bf16.mxu0 %v1724
    %2178 = vmatpush1.bf16.msra.mxu0 %v1723
    %2179 = vmatprep.subr.bf16.mxu0 %v1732
    %2180 = vmatpush1.bf16.msra.mxu0 %v1731
    %2181 = vmatprep.subr.bf16.mxu0 %v1740
    %2182 = vmatpush1.bf16.msra.mxu0 %v1739
    %2183 = vmatprep.subr.bf16.mxu0 %v1748
    %2184 = vmatpush1.bf16.msra.mxu0 %v1747
    %2185 = vmatprep.subr.bf16.mxu0 %v1756
    %2186 = vmatpush1.bf16.msra.mxu0 %v1755
    %2187 = vmatprep.subr.bf16.mxu0 %v1764
    %2188 = vmatpush1.bf16.msra.mxu0 %v1763
    %2189 = vmatprep.subr.bf16.mxu0 %v1772
    %2190 = vmatpush1.bf16.msra.mxu0 %v1771
    %2191 = vmatprep.subr.bf16.mxu0 %v1780
    %2192 = vmatpush1.bf16.msra.mxu0 %v1779
    %2193 = vmatprep.subr.bf16.mxu0 %v1788
    %2194 = vmatpush1.bf16.msra.mxu0 %v1787
    %2195 = vmatprep.mubr.bf16.mxu0 %v1658
    %2196 = vmatmul.mubr.bf16.gmra.mrb[0].mxu0 %v1657
    %v2197 = vpop.f32.mrb[0].mxu0
    %v2198 = vadd.f32 0.0, %v2197
    %v2199 = vpop.f32.mrb[0].mxu0
    %v2200 = vadd.f32 0.0, %v2199
    %v2201 = vpop.f32.mrb[0].mxu0
    %v2202 = vpop.f32.mrb[0].mxu0
    %2203 = vdwg.mxu0
    %2204 = vmatprep.subr.bf16.mxu0 %v1796
    %2205 = vmatpush1.bf16.msra.mxu0 %v1795
    %2206 = vmatprep.subr.bf16.mxu0 %v1804
    %2207 = vmatpush1.bf16.msra.mxu0 %v1803
    %2208 = vmatprep.subr.bf16.mxu0 %v1812
    %2209 = vmatpush1.bf16.msra.mxu0 %v1811
    %2210 = vmatprep.subr.bf16.mxu0 %v1820
    %2211 = vmatpush1.bf16.msra.mxu0 %v1819
    %2212 = vmatprep.subr.bf16.mxu0 %v1828
    %2213 = vmatpush1.bf16.msra.mxu0 %v1827
    %2214 = vmatprep.subr.bf16.mxu0 %v1836
    %2215 = vmatpush1.bf16.msra.mxu0 %v1835
    %2216 = vmatprep.subr.bf16.mxu0 %v1844
    %2217 = vmatpush1.bf16.msra.mxu0 %v1843
    %2218 = vmatprep.subr.bf16.mxu0 %v1852
    %2219 = vmatpush1.bf16.msra.mxu0 %v1851
    %2220 = vmatprep.subr.bf16.mxu0 %v1860
    %2221 = vmatpush1.bf16.msra.mxu0 %v1859
    %2222 = vmatprep.subr.bf16.mxu0 %v1868
    %2223 = vmatpush1.bf16.msra.mxu0 %v1867
    %2224 = vmatprep.subr.bf16.mxu0 %v1876
    %2225 = vmatpush1.bf16.msra.mxu0 %v1875
    %2226 = vmatprep.subr.bf16.mxu0 %v1884
    %2227 = vmatpush1.bf16.msra.mxu0 %v1883
    %2228 = vmatprep.subr.bf16.mxu0 %v1892
    %2229 = vmatpush1.bf16.msra.mxu0 %v1891
    %2230 = vmatprep.subr.bf16.mxu0 %v1900
    %2231 = vmatpush1.bf16.msra.mxu0 %v1899
    %2232 = vmatprep.subr.bf16.mxu0 %v1908
    %2233 = vmatpush1.bf16.msra.mxu0 %v1907
    %2234 = vmatprep.subr.bf16.mxu0 %v1916
    %2235 = vmatpush1.bf16.msra.mxu0 %v1915
    %2236 = vmatprep.mubr.bf16.mxu0 %v1660
    %2237 = vmatmul.mubr.bf16.gmra.mrb[0].mxu0 %v1659
    %v2238 = vpop.f32.mrb[0].mxu0
    %v2239 = vadd.f32 %v2198, %v2238
    %v2240 = vpop.f32.mrb[0].mxu0
    %v2241 = vadd.f32 %v2200, %v2240
    %v2242 = vpop.f32.mrb[0].mxu0
    %v2243 = vpop.f32.mrb[0].mxu0
    %2244 = vdwg.mxu0
    %v2245 = vld [vmem:[#allocation20] sm:$0xff]
    %v2246 = vld [vmem:[#allocation22] sm:$0xff]
    %2247 = vmatprep.subr.mxu0 %v1995
    %2248 = vmatpush1.msra.mxu0 %v1993
    %2249 = vmatprep.subr.mxu0 0.0
    %2250 = vmatpush1.msra.mxu0 0.0
    %2251 = vmatprep.subr.mxu0 0.0
    %2252 = vmatpush1.msra.mxu0 0.0
    %2253 = vmatprep.subr.mxu0 0.0
    %2254 = vmatpush1.msra.mxu0 0.0
    %2255 = vmatprep.subr.mxu0 0.0
    %2256 = vmatpush1.msra.mxu0 0.0
    %2257 = vmatprep.subr.mxu0 0.0
    %2258 = vmatpush1.msra.mxu0 0.0
    %2259 = vmatprep.subr.mxu0 0.0
    %2260 = vmatpush1.msra.mxu0 0.0
    %2261 = vmatprep.subr.mxu0 0.0
    %2262 = vmatpush1.msra.mxu0 0.0
    %2263 = vmatprep.subr.mxu0 0.0
    %2264 = vmatpush1.msra.mxu0 0.0
    %2265 = vmatprep.subr.mxu0 0.0
    %2266 = vmatpush1.msra.mxu0 0.0
    %2267 = vmatprep.subr.mxu0 0.0
    %2268 = vmatpush1.msra.mxu0 0.0
    %2269 = vmatprep.subr.mxu0 0.0
    %2270 = vmatpush1.msra.mxu0 0.0
    %2271 = vmatprep.subr.mxu0 0.0
    %2272 = vmatpush1.msra.mxu0 0.0
    %2273 = vmatprep.subr.mxu0 0.0
    %2274 = vmatpush1.msra.mxu0 0.0
    %2275 = vmatprep.subr.mxu0 0.0
    %2276 = vmatpush1.msra.mxu0 0.0
    %2277 = vmatprep.subr.mxu0 0.0
    %2278 = vmatpush1.msra.mxu0 0.0
    %2279 = vmatprep.subr.mxu0 0.0
    %2280 = vmatpush1.msra.mxu0 0.0
    %2281 = vmatprep.subr.mxu0 0.0
    %2282 = vmatpush1.msra.mxu0 0.0
    %2283 = vmatprep.subr.mxu0 0.0
    %2284 = vmatpush1.msra.mxu0 0.0
    %2285 = vmatprep.subr.mxu0 0.0
    %2286 = vmatpush1.msra.mxu0 0.0
    %2287 = vmatprep.subr.mxu0 0.0
    %2288 = vmatpush1.msra.mxu0 0.0
    %2289 = vmatprep.subr.mxu0 0.0
    %2290 = vmatpush1.msra.mxu0 0.0
    %2291 = vmatprep.subr.mxu0 0.0
    %2292 = vmatpush1.msra.mxu0 0.0
    %2293 = vmatprep.subr.mxu0 0.0
    %2294 = vmatpush1.msra.mxu0 0.0
    %2295 = vmatprep.subr.mxu0 0.0
    %2296 = vmatpush1.msra.mxu0 0.0
    %2297 = vmatprep.subr.mxu0 0.0
    %2298 = vmatpush1.msra.mxu0 0.0
    %2299 = vmatprep.subr.mxu0 0.0
    %2300 = vmatpush1.msra.mxu0 0.0
    %2301 = vmatprep.subr.mxu0 0.0
    %2302 = vmatpush1.msra.mxu0 0.0
    %2303 = vmatprep.subr.mxu0 0.0
    %2304 = vmatpush1.msra.mxu0 0.0
    %2305 = vmatprep.subr.mxu0 0.0
    %2306 = vmatpush1.msra.mxu0 0.0
    %2307 = vmatprep.subr.mxu0 0.0
    %2308 = vmatpush1.msra.mxu0 0.0
    %2309 = vmatprep.subr.mxu0 0.0
    %2310 = vmatpush1.msra.mxu0 0.0
    %2311 = vmatprep.mubr.f32.mxu0 0.0
    %2312 = vmatmul.mubr.f32.gmra.mrb[0].mxu0 %v521
    %v2313 = vpop.f32.mrb[0].mxu0
    %v2314 = vadd.f32 0.0, %v2313
    %v2315 = vpop.f32.mrb[0].mxu0
    %v2316 = vadd.f32 0.0, %v2315
    %2317 = vdwg.mxu0
    %2318 = vmatprep.subr.mxu0 %v2077
    %2319 = vmatpush1.msra.mxu0 %v2075
    %2320 = vmatprep.subr.mxu0 0.0
    %2321 = vmatpush1.msra.mxu0 0.0
    %2322 = vmatprep.subr.mxu0 0.0
    %2323 = vmatpush1.msra.mxu0 0.0
    %2324 = vmatprep.subr.mxu0 0.0
    %2325 = vmatpush1.msra.mxu0 0.0
    %2326 = vmatprep.subr.mxu0 0.0
    %2327 = vmatpush1.msra.mxu0 0.0
    %2328 = vmatprep.subr.mxu0 0.0
    %2329 = vmatpush1.msra.mxu0 0.0
    %2330 = vmatprep.subr.mxu0 0.0
    %2331 = vmatpush1.msra.mxu0 0.0
    %2332 = vmatprep.subr.mxu0 0.0
    %2333 = vmatpush1.msra.mxu0 0.0
    %2334 = vmatprep.subr.mxu0 0.0
    %2335 = vmatpush1.msra.mxu0 0.0
    %2336 = vmatprep.subr.mxu0 0.0
    %2337 = vmatpush1.msra.mxu0 0.0
    %2338 = vmatprep.subr.mxu0 0.0
    %2339 = vmatpush1.msra.mxu0 0.0
    %2340 = vmatprep.subr.mxu0 0.0
    %2341 = vmatpush1.msra.mxu0 0.0
    %2342 = vmatprep.subr.mxu0 0.0
    %2343 = vmatpush1.msra.mxu0 0.0
    %2344 = vmatprep.subr.mxu0 0.0
    %2345 = vmatpush1.msra.mxu0 0.0
    %2346 = vmatprep.subr.mxu0 0.0
    %2347 = vmatpush1.msra.mxu0 0.0
    %2348 = vmatprep.subr.mxu0 0.0
    %2349 = vmatpush1.msra.mxu0 0.0
    %2350 = vmatprep.subr.mxu0 0.0
    %2351 = vmatpush1.msra.mxu0 0.0
    %2352 = vmatprep.subr.mxu0 0.0
    %2353 = vmatpush1.msra.mxu0 0.0
    %2354 = vmatprep.subr.mxu0 0.0
    %2355 = vmatpush1.msra.mxu0 0.0
    %2356 = vmatprep.subr.mxu0 0.0
    %2357 = vmatpush1.msra.mxu0 0.0
    %2358 = vmatprep.subr.mxu0 0.0
    %2359 = vmatpush1.msra.mxu0 0.0
    %2360 = vmatprep.subr.mxu0 0.0
    %2361 = vmatpush1.msra.mxu0 0.0
    %2362 = vmatprep.subr.mxu0 0.0
    %2363 = vmatpush1.msra.mxu0 0.0
    %2364 = vmatprep.subr.mxu0 0.0
    %2365 = vmatpush1.msra.mxu0 0.0
    %2366 = vmatprep.subr.mxu0 0.0
    %2367 = vmatpush1.msra.mxu0 0.0
    %2368 = vmatprep.subr.mxu0 0.0
    %2369 = vmatpush1.msra.mxu0 0.0
    %2370 = vmatprep.subr.mxu0 0.0
    %2371 = vmatpush1.msra.mxu0 0.0
    %2372 = vmatprep.subr.mxu0 0.0
    %2373 = vmatpush1.msra.mxu0 0.0
    %2374 = vmatprep.subr.mxu0 0.0
    %2375 = vmatpush1.msra.mxu0 0.0
    %2376 = vmatprep.subr.mxu0 0.0
    %2377 = vmatpush1.msra.mxu0 0.0
    %2378 = vmatprep.subr.mxu0 0.0
    %2379 = vmatpush1.msra.mxu0 0.0
    %2380 = vmatprep.subr.mxu0 0.0
    %2381 = vmatpush1.msra.mxu0 0.0
    %2382 = vmatprep.mubr.f32.mxu0 0.0
    %2383 = vmatmul.mubr.f32.gmra.mrb[0].mxu0 %v521
    %v2384 = vpop.f32.mrb[0].mxu0
    %v2385 = vadd.f32 0.0, %v2384
    %v2386 = vpop.f32.mrb[0].mxu0
    %v2387 = vadd.f32 0.0, %v2386
    %2388 = vdwg.mxu0
    %2389 = vmatprep.subr.mxu0 %v2159
    %2390 = vmatpush1.msra.mxu0 %v2157
    %2391 = vmatprep.subr.mxu0 0.0
    %2392 = vmatpush1.msra.mxu0 0.0
    %2393 = vmatprep.subr.mxu0 0.0
    %2394 = vmatpush1.msra.mxu0 0.0
    %2395 = vmatprep.subr.mxu0 0.0
    %2396 = vmatpush1.msra.mxu0 0.0
    %2397 = vmatprep.subr.mxu0 0.0
    %2398 = vmatpush1.msra.mxu0 0.0
    %2399 = vmatprep.subr.mxu0 0.0
    %2400 = vmatpush1.msra.mxu0 0.0
    %2401 = vmatprep.subr.mxu0 0.0
    %2402 = vmatpush1.msra.mxu0 0.0
    %2403 = vmatprep.subr.mxu0 0.0
    %2404 = vmatpush1.msra.mxu0 0.0
    %2405 = vmatprep.subr.mxu0 0.0
    %2406 = vmatpush1.msra.mxu0 0.0
    %2407 = vmatprep.subr.mxu0 0.0
    %2408 = vmatpush1.msra.mxu0 0.0
    %2409 = vmatprep.subr.mxu0 0.0
    %2410 = vmatpush1.msra.mxu0 0.0
    %2411 = vmatprep.subr.mxu0 0.0
    %2412 = vmatpush1.msra.mxu0 0.0
    %2413 = vmatprep.subr.mxu0 0.0
    %2414 = vmatpush1.msra.mxu0 0.0
    %2415 = vmatprep.subr.mxu0 0.0
    %2416 = vmatpush1.msra.mxu0 0.0
    %2417 = vmatprep.subr.mxu0 0.0
    %2418 = vmatpush1.msra.mxu0 0.0
    %2419 = vmatprep.subr.mxu0 0.0
    %2420 = vmatpush1.msra.mxu0 0.0
    %2421 = vmatprep.subr.mxu0 0.0
    %2422 = vmatpush1.msra.mxu0 0.0
    %2423 = vmatprep.subr.mxu0 0.0
    %2424 = vmatpush1.msra.mxu0 0.0
    %2425 = vmatprep.subr.mxu0 0.0
    %2426 = vmatpush1.msra.mxu0 0.0
    %2427 = vmatprep.subr.mxu0 0.0
    %2428 = vmatpush1.msra.mxu0 0.0
    %2429 = vmatprep.subr.mxu0 0.0
    %2430 = vmatpush1.msra.mxu0 0.0
    %2431 = vmatprep.subr.mxu0 0.0
    %2432 = vmatpush1.msra.mxu0 0.0
    %2433 = vmatprep.subr.mxu0 0.0
    %2434 = vmatpush1.msra.mxu0 0.0
    %2435 = vmatprep.subr.mxu0 0.0
    %2436 = vmatpush1.msra.mxu0 0.0
    %2437 = vmatprep.subr.mxu0 0.0
    %2438 = vmatpush1.msra.mxu0 0.0
    %2439 = vmatprep.subr.mxu0 0.0
    %2440 = vmatpush1.msra.mxu0 0.0
    %2441 = vmatprep.subr.mxu0 0.0
    %2442 = vmatpush1.msra.mxu0 0.0
    %2443 = vmatprep.subr.mxu0 0.0
    %2444 = vmatpush1.msra.mxu0 0.0
    %2445 = vmatprep.subr.mxu0 0.0
    %2446 = vmatpush1.msra.mxu0 0.0
    %2447 = vmatprep.subr.mxu0 0.0
    %2448 = vmatpush1.msra.mxu0 0.0
    %2449 = vmatprep.subr.mxu0 0.0
    %2450 = vmatpush1.msra.mxu0 0.0
    %2451 = vmatprep.subr.mxu0 0.0
    %2452 = vmatpush1.msra.mxu0 0.0
    %2453 = vmatprep.mubr.f32.mxu0 0.0
    %2454 = vmatmul.mubr.f32.gmra.mrb[0].mxu0 %v521
    %v2455 = vpop.f32.mrb[0].mxu0
    %v2456 = vadd.f32 0.0, %v2455
    %v2457 = vpop.f32.mrb[0].mxu0
    %v2458 = vadd.f32 0.0, %v2457
    %2459 = vdwg.mxu0
    %2460 = vmatprep.subr.mxu0 %v2241
    %2461 = vmatpush1.msra.mxu0 %v2239
    %2462 = vmatprep.subr.mxu0 0.0
    %2463 = vmatpush1.msra.mxu0 0.0
    %2464 = vmatprep.subr.mxu0 0.0
    %2465 = vmatpush1.msra.mxu0 0.0
    %2466 = vmatprep.subr.mxu0 0.0
    %2467 = vmatpush1.msra.mxu0 0.0
    %2468 = vmatprep.subr.mxu0 0.0
    %2469 = vmatpush1.msra.mxu0 0.0
    %2470 = vmatprep.subr.mxu0 0.0
    %2471 = vmatpush1.msra.mxu0 0.0
    %2472 = vmatprep.subr.mxu0 0.0
    %2473 = vmatpush1.msra.mxu0 0.0
    %2474 = vmatprep.subr.mxu0 0.0
    %2475 = vmatpush1.msra.mxu0 0.0
    %2476 = vmatprep.subr.mxu0 0.0
    %2477 = vmatpush1.msra.mxu0 0.0
    %2478 = vmatprep.subr.mxu0 0.0
    %2479 = vmatpush1.msra.mxu0 0.0
    %2480 = vmatprep.subr.mxu0 0.0
    %2481 = vmatpush1.msra.mxu0 0.0
    %2482 = vmatprep.subr.mxu0 0.0
    %2483 = vmatpush1.msra.mxu0 0.0
    %2484 = vmatprep.subr.mxu0 0.0
    %2485 = vmatpush1.msra.mxu0 0.0
    %2486 = vmatprep.subr.mxu0 0.0
    %2487 = vmatpush1.msra.mxu0 0.0
    %2488 = vmatprep.subr.mxu0 0.0
    %2489 = vmatpush1.msra.mxu0 0.0
    %2490 = vmatprep.subr.mxu0 0.0
    %2491 = vmatpush1.msra.mxu0 0.0
    %2492 = vmatprep.subr.mxu0 0.0
    %2493 = vmatpush1.msra.mxu0 0.0
    %2494 = vmatprep.subr.mxu0 0.0
    %2495 = vmatpush1.msra.mxu0 0.0
    %2496 = vmatprep.subr.mxu0 0.0
    %2497 = vmatpush1.msra.mxu0 0.0
    %2498 = vmatprep.subr.mxu0 0.0
    %2499 = vmatpush1.msra.mxu0 0.0
    %2500 = vmatprep.subr.mxu0 0.0
    %2501 = vmatpush1.msra.mxu0 0.0
    %2502 = vmatprep.subr.mxu0 0.0
    %2503 = vmatpush1.msra.mxu0 0.0
    %2504 = vmatprep.subr.mxu0 0.0
    %2505 = vmatpush1.msra.mxu0 0.0
    %2506 = vmatprep.subr.mxu0 0.0
    %2507 = vmatpush1.msra.mxu0 0.0
    %2508 = vmatprep.subr.mxu0 0.0
    %2509 = vmatpush1.msra.mxu0 0.0
    %2510 = vmatprep.subr.mxu0 0.0
    %2511 = vmatpush1.msra.mxu0 0.0
    %2512 = vmatprep.subr.mxu0 0.0
    %2513 = vmatpush1.msra.mxu0 0.0
    %2514 = vmatprep.subr.mxu0 0.0
    %2515 = vmatpush1.msra.mxu0 0.0
    %2516 = vmatprep.subr.mxu0 0.0
    %2517 = vmatpush1.msra.mxu0 0.0
    %2518 = vmatprep.subr.mxu0 0.0
    %2519 = vmatpush1.msra.mxu0 0.0
    %2520 = vmatprep.subr.mxu0 0.0
    %2521 = vmatpush1.msra.mxu0 0.0
    %2522 = vmatprep.subr.mxu0 0.0
    %2523 = vmatpush1.msra.mxu0 0.0
    %2524 = vmatprep.mubr.f32.mxu0 0.0
    %2525 = vmatmul.mubr.f32.gmra.mrb[0].mxu0 %v521
    %v2526 = vpop.f32.mrb[0].mxu0
    %v2527 = vadd.f32 0.0, %v2526
    %v2528 = vpop.f32.mrb[0].mxu0
    %v2529 = vadd.f32 0.0, %v2528
    %2530 = vdwg.mxu0
    %v2531 = vmul.f32 %v1993, %v1993
    %v2532 = vmul.f32 %v1995, %v1995
    %v2533 = vmul.f32 %v2075, %v2075
    %v2534 = vmul.f32 %v2077, %v2077
    %v2535 = vmul.f32 %v2157, %v2157
    %v2536 = vmul.f32 %v2159, %v2159
    %v2537 = vmul.f32 %v2239, %v2239
    %v2538 = vmul.f32 %v2241, %v2241
    %2539 = vmatprep.subr.mxu0 %v2532
    %2540 = vmatpush1.msra.mxu0 %v2531
    %2541 = vmatprep.subr.mxu0 0.0
    %2542 = vmatpush1.msra.mxu0 0.0
    %2543 = vmatprep.subr.mxu0 0.0
    %2544 = vmatpush1.msra.mxu0 0.0
    %2545 = vmatprep.subr.mxu0 0.0
    %2546 = vmatpush1.msra.mxu0 0.0
    %2547 = vmatprep.subr.mxu0 0.0
    %2548 = vmatpush1.msra.mxu0 0.0
    %2549 = vmatprep.subr.mxu0 0.0
    %2550 = vmatpush1.msra.mxu0 0.0
    %2551 = vmatprep.subr.mxu0 0.0
    %2552 = vmatpush1.msra.mxu0 0.0
    %2553 = vmatprep.subr.mxu0 0.0
    %2554 = vmatpush1.msra.mxu0 0.0
    %2555 = vmatprep.subr.mxu0 0.0
    %2556 = vmatpush1.msra.mxu0 0.0
    %2557 = vmatprep.subr.mxu0 0.0
    %2558 = vmatpush1.msra.mxu0 0.0
    %2559 = vmatprep.subr.mxu0 0.0
    %2560 = vmatpush1.msra.mxu0 0.0
    %2561 = vmatprep.subr.mxu0 0.0
    %2562 = vmatpush1.msra.mxu0 0.0
    %2563 = vmatprep.subr.mxu0 0.0
    %2564 = vmatpush1.msra.mxu0 0.0
    %2565 = vmatprep.subr.mxu0 0.0
    %2566 = vmatpush1.msra.mxu0 0.0
    %2567 = vmatprep.subr.mxu0 0.0
    %2568 = vmatpush1.msra.mxu0 0.0
    %2569 = vmatprep.subr.mxu0 0.0
    %2570 = vmatpush1.msra.mxu0 0.0
    %2571 = vmatprep.subr.mxu0 0.0
    %2572 = vmatpush1.msra.mxu0 0.0
    %2573 = vmatprep.subr.mxu0 0.0
    %2574 = vmatpush1.msra.mxu0 0.0
    %2575 = vmatprep.subr.mxu0 0.0
    %2576 = vmatpush1.msra.mxu0 0.0
    %2577 = vmatprep.subr.mxu0 0.0
    %2578 = vmatpush1.msra.mxu0 0.0
    %2579 = vmatprep.subr.mxu0 0.0
    %2580 = vmatpush1.msra.mxu0 0.0
    %2581 = vmatprep.subr.mxu0 0.0
    %2582 = vmatpush1.msra.mxu0 0.0
    %2583 = vmatprep.subr.mxu0 0.0
    %2584 = vmatpush1.msra.mxu0 0.0
    %2585 = vmatprep.subr.mxu0 0.0
    %2586 = vmatpush1.msra.mxu0 0.0
    %2587 = vmatprep.subr.mxu0 0.0
    %2588 = vmatpush1.msra.mxu0 0.0
    %2589 = vmatprep.subr.mxu0 0.0
    %2590 = vmatpush1.msra.mxu0 0.0
    %2591 = vmatprep.subr.mxu0 0.0
    %2592 = vmatpush1.msra.mxu0 0.0
    %2593 = vmatprep.subr.mxu0 0.0
    %2594 = vmatpush1.msra.mxu0 0.0
    %2595 = vmatprep.subr.mxu0 0.0
    %2596 = vmatpush1.msra.mxu0 0.0
    %2597 = vmatprep.subr.mxu0 0.0
    %2598 = vmatpush1.msra.mxu0 0.0
    %2599 = vmatprep.subr.mxu0 0.0
    %2600 = vmatpush1.msra.mxu0 0.0
    %2601 = vmatprep.subr.mxu0 0.0
    %2602 = vmatpush1.msra.mxu0 0.0
    %2603 = vmatprep.mubr.f32.mxu0 0.0
    %2604 = vmatmul.mubr.f32.gmra.mrb[0].mxu0 %v521
    %v2605 = vpop.f32.mrb[0].mxu0
    %v2606 = vadd.f32 0.0, %v2605
    %v2607 = vpop.f32.mrb[0].mxu0
    %v2608 = vadd.f32 0.0, %v2607
    %2609 = vdwg.mxu0
    %2610 = vmatprep.subr.mxu0 %v2534
    %2611 = vmatpush1.msra.mxu0 %v2533
    %2612 = vmatprep.subr.mxu0 0.0
    %2613 = vmatpush1.msra.mxu0 0.0
    %2614 = vmatprep.subr.mxu0 0.0
    %2615 = vmatpush1.msra.mxu0 0.0
    %2616 = vmatprep.subr.mxu0 0.0
    %2617 = vmatpush1.msra.mxu0 0.0
    %2618 = vmatprep.subr.mxu0 0.0
    %2619 = vmatpush1.msra.mxu0 0.0
    %2620 = vmatprep.subr.mxu0 0.0
    %2621 = vmatpush1.msra.mxu0 0.0
    %2622 = vmatprep.subr.mxu0 0.0
    %2623 = vmatpush1.msra.mxu0 0.0
    %2624 = vmatprep.subr.mxu0 0.0
    %2625 = vmatpush1.msra.mxu0 0.0
    %2626 = vmatprep.subr.mxu0 0.0
    %2627 = vmatpush1.msra.mxu0 0.0
    %2628 = vmatprep.subr.mxu0 0.0
    %2629 = vmatpush1.msra.mxu0 0.0
    %2630 = vmatprep.subr.mxu0 0.0
    %2631 = vmatpush1.msra.mxu0 0.0
    %2632 = vmatprep.subr.mxu0 0.0
    %2633 = vmatpush1.msra.mxu0 0.0
    %2634 = vmatprep.subr.mxu0 0.0
    %2635 = vmatpush1.msra.mxu0 0.0
    %2636 = vmatprep.subr.mxu0 0.0
    %2637 = vmatpush1.msra.mxu0 0.0
    %2638 = vmatprep.subr.mxu0 0.0
    %2639 = vmatpush1.msra.mxu0 0.0
    %2640 = vmatprep.subr.mxu0 0.0
    %2641 = vmatpush1.msra.mxu0 0.0
    %2642 = vmatprep.subr.mxu0 0.0
    %2643 = vmatpush1.msra.mxu0 0.0
    %2644 = vmatprep.subr.mxu0 0.0
    %2645 = vmatpush1.msra.mxu0 0.0
    %2646 = vmatprep.subr.mxu0 0.0
    %2647 = vmatpush1.msra.mxu0 0.0
    %2648 = vmatprep.subr.mxu0 0.0
    %2649 = vmatpush1.msra.mxu0 0.0
    %2650 = vmatprep.subr.mxu0 0.0
    %2651 = vmatpush1.msra.mxu0 0.0
    %2652 = vmatprep.subr.mxu0 0.0
    %2653 = vmatpush1.msra.mxu0 0.0
    %2654 = vmatprep.subr.mxu0 0.0
    %2655 = vmatpush1.msra.mxu0 0.0
    %2656 = vmatprep.subr.mxu0 0.0
    %2657 = vmatpush1.msra.mxu0 0.0
    %2658 = vmatprep.subr.mxu0 0.0
    %2659 = vmatpush1.msra.mxu0 0.0
    %2660 = vmatprep.subr.mxu0 0.0
    %2661 = vmatpush1.msra.mxu0 0.0
    %2662 = vmatprep.subr.mxu0 0.0
    %2663 = vmatpush1.msra.mxu0 0.0
    %2664 = vmatprep.subr.mxu0 0.0
    %2665 = vmatpush1.msra.mxu0 0.0
    %2666 = vmatprep.subr.mxu0 0.0
    %2667 = vmatpush1.msra.mxu0 0.0
    %2668 = vmatprep.subr.mxu0 0.0
    %2669 = vmatpush1.msra.mxu0 0.0
    %2670 = vmatprep.subr.mxu0 0.0
    %2671 = vmatpush1.msra.mxu0 0.0
    %2672 = vmatprep.subr.mxu0 0.0
    %2673 = vmatpush1.msra.mxu0 0.0
    %2674 = vmatprep.mubr.f32.mxu0 0.0
    %2675 = vmatmul.mubr.f32.gmra.mrb[0].mxu0 %v521
    %v2676 = vpop.f32.mrb[0].mxu0
    %v2677 = vadd.f32 0.0, %v2676
    %v2678 = vpop.f32.mrb[0].mxu0
    %v2679 = vadd.f32 0.0, %v2678
    %2680 = vdwg.mxu0
    %2681 = vmatprep.subr.mxu0 %v2536
    %2682 = vmatpush1.msra.mxu0 %v2535
    %2683 = vmatprep.subr.mxu0 0.0
    %2684 = vmatpush1.msra.mxu0 0.0
    %2685 = vmatprep.subr.mxu0 0.0
    %2686 = vmatpush1.msra.mxu0 0.0
    %2687 = vmatprep.subr.mxu0 0.0
    %2688 = vmatpush1.msra.mxu0 0.0
    %2689 = vmatprep.subr.mxu0 0.0
    %2690 = vmatpush1.msra.mxu0 0.0
    %2691 = vmatprep.subr.mxu0 0.0
    %2692 = vmatpush1.msra.mxu0 0.0
    %2693 = vmatprep.subr.mxu0 0.0
    %2694 = vmatpush1.msra.mxu0 0.0
    %2695 = vmatprep.subr.mxu0 0.0
    %2696 = vmatpush1.msra.mxu0 0.0
    %2697 = vmatprep.subr.mxu0 0.0
    %2698 = vmatpush1.msra.mxu0 0.0
    %2699 = vmatprep.subr.mxu0 0.0
    %2700 = vmatpush1.msra.mxu0 0.0
    %2701 = vmatprep.subr.mxu0 0.0
    %2702 = vmatpush1.msra.mxu0 0.0
    %2703 = vmatprep.subr.mxu0 0.0
    %2704 = vmatpush1.msra.mxu0 0.0
    %2705 = vmatprep.subr.mxu0 0.0
    %2706 = vmatpush1.msra.mxu0 0.0
    %2707 = vmatprep.subr.mxu0 0.0
    %2708 = vmatpush1.msra.mxu0 0.0
    %2709 = vmatprep.subr.mxu0 0.0
    %2710 = vmatpush1.msra.mxu0 0.0
    %2711 = vmatprep.subr.mxu0 0.0
    %2712 = vmatpush1.msra.mxu0 0.0
    %2713 = vmatprep.subr.mxu0 0.0
    %2714 = vmatpush1.msra.mxu0 0.0
    %2715 = vmatprep.subr.mxu0 0.0
    %2716 = vmatpush1.msra.mxu0 0.0
    %2717 = vmatprep.subr.mxu0 0.0
    %2718 = vmatpush1.msra.mxu0 0.0
    %2719 = vmatprep.subr.mxu0 0.0
    %2720 = vmatpush1.msra.mxu0 0.0
    %2721 = vmatprep.subr.mxu0 0.0
    %2722 = vmatpush1.msra.mxu0 0.0
    %2723 = vmatprep.subr.mxu0 0.0
    %2724 = vmatpush1.msra.mxu0 0.0
    %2725 = vmatprep.subr.mxu0 0.0
    %2726 = vmatpush1.msra.mxu0 0.0
    %2727 = vmatprep.subr.mxu0 0.0
    %2728 = vmatpush1.msra.mxu0 0.0
    %2729 = vmatprep.subr.mxu0 0.0
    %2730 = vmatpush1.msra.mxu0 0.0
    %2731 = vmatprep.subr.mxu0 0.0
    %2732 = vmatpush1.msra.mxu0 0.0
    %2733 = vmatprep.subr.mxu0 0.0
    %2734 = vmatpush1.msra.mxu0 0.0
    %2735 = vmatprep.subr.mxu0 0.0
    %2736 = vmatpush1.msra.mxu0 0.0
    %2737 = vmatprep.subr.mxu0 0.0
    %2738 = vmatpush1.msra.mxu0 0.0
    %2739 = vmatprep.subr.mxu0 0.0
    %2740 = vmatpush1.msra.mxu0 0.0
    %2741 = vmatprep.subr.mxu0 0.0
    %2742 = vmatpush1.msra.mxu0 0.0
    %2743 = vmatprep.subr.mxu0 0.0
    %2744 = vmatpush1.msra.mxu0 0.0
    %2745 = vmatprep.mubr.f32.mxu0 0.0
    %2746 = vmatmul.mubr.f32.gmra.mrb[0].mxu0 %v521
    %v2747 = vpop.f32.mrb[0].mxu0
    %v2748 = vadd.f32 0.0, %v2747
    %v2749 = vpop.f32.mrb[0].mxu0
    %v2750 = vadd.f32 0.0, %v2749
    %2751 = vdwg.mxu0
    %2752 = vmatprep.subr.mxu0 %v2538
    %2753 = vmatpush1.msra.mxu0 %v2537
    %2754 = vmatprep.subr.mxu0 0.0
    %2755 = vmatpush1.msra.mxu0 0.0
    %2756 = vmatprep.subr.mxu0 0.0
    %2757 = vmatpush1.msra.mxu0 0.0
    %2758 = vmatprep.subr.mxu0 0.0
    %2759 = vmatpush1.msra.mxu0 0.0
    %2760 = vmatprep.subr.mxu0 0.0
    %2761 = vmatpush1.msra.mxu0 0.0
    %2762 = vmatprep.subr.mxu0 0.0
    %2763 = vmatpush1.msra.mxu0 0.0
    %2764 = vmatprep.subr.mxu0 0.0
    %2765 = vmatpush1.msra.mxu0 0.0
    %2766 = vmatprep.subr.mxu0 0.0
    %2767 = vmatpush1.msra.mxu0 0.0
    %2768 = vmatprep.subr.mxu0 0.0
    %2769 = vmatpush1.msra.mxu0 0.0
    %2770 = vmatprep.subr.mxu0 0.0
    %2771 = vmatpush1.msra.mxu0 0.0
    %2772 = vmatprep.subr.mxu0 0.0
    %2773 = vmatpush1.msra.mxu0 0.0
    %2774 = vmatprep.subr.mxu0 0.0
    %2775 = vmatpush1.msra.mxu0 0.0
    %2776 = vmatprep.subr.mxu0 0.0
    %2777 = vmatpush1.msra.mxu0 0.0
    %2778 = vmatprep.subr.mxu0 0.0
    %2779 = vmatpush1.msra.mxu0 0.0
    %2780 = vmatprep.subr.mxu0 0.0
    %2781 = vmatpush1.msra.mxu0 0.0
    %2782 = vmatprep.subr.mxu0 0.0
    %2783 = vmatpush1.msra.mxu0 0.0
    %2784 = vmatprep.subr.mxu0 0.0
    %2785 = vmatpush1.msra.mxu0 0.0
    %2786 = vmatprep.subr.mxu0 0.0
    %2787 = vmatpush1.msra.mxu0 0.0
    %2788 = vmatprep.subr.mxu0 0.0
    %2789 = vmatpush1.msra.mxu0 0.0
    %2790 = vmatprep.subr.mxu0 0.0
    %2791 = vmatpush1.msra.mxu0 0.0
    %2792 = vmatprep.subr.mxu0 0.0
    %2793 = vmatpush1.msra.mxu0 0.0
    %2794 = vmatprep.subr.mxu0 0.0
    %2795 = vmatpush1.msra.mxu0 0.0
    %2796 = vmatprep.subr.mxu0 0.0
    %2797 = vmatpush1.msra.mxu0 0.0
    %2798 = vmatprep.subr.mxu0 0.0
    %2799 = vmatpush1.msra.mxu0 0.0
    %2800 = vmatprep.subr.mxu0 0.0
    %2801 = vmatpush1.msra.mxu0 0.0
    %2802 = vmatprep.subr.mxu0 0.0
    %2803 = vmatpush1.msra.mxu0 0.0
    %2804 = vmatprep.subr.mxu0 0.0
    %2805 = vmatpush1.msra.mxu0 0.0
    %2806 = vmatprep.subr.mxu0 0.0
    %2807 = vmatpush1.msra.mxu0 0.0
    %2808 = vmatprep.subr.mxu0 0.0
    %2809 = vmatpush1.msra.mxu0 0.0
    %2810 = vmatprep.subr.mxu0 0.0
    %2811 = vmatpush1.msra.mxu0 0.0
    %2812 = vmatprep.subr.mxu0 0.0
    %2813 = vmatpush1.msra.mxu0 0.0
    %2814 = vmatprep.subr.mxu0 0.0
    %2815 = vmatpush1.msra.mxu0 0.0
    %2816 = vmatprep.mubr.f32.mxu0 0.0
    %2817 = vmatmul.mubr.f32.gmra.mrb[0].mxu0 %v521
    %v2818 = vpop.f32.mrb[0].mxu0
    %v2819 = vadd.f32 0.0, %v2818
    %v2820 = vpop.f32.mrb[0].mxu0
    %v2821 = vadd.f32 0.0, %v2820
    %2822 = vdwg.mxu0
    %v2823 = vmul.f32 %v2314, 0.125
    %v2824 = vmul.f32 %v2316, 0.125
    %v2825 = vmul.f32 %v2385, 0.125
    %v2826 = vmul.f32 %v2387, 0.125
    %v2827 = vmul.f32 %v2456, 0.125
    %v2828 = vmul.f32 %v2458, 0.125
    %v2829 = vmul.f32 %v2527, 0.125
    %v2830 = vmul.f32 %v2529, 0.125
    %v2831 = vmul.f32 %v2606, 0.125
    %v2832 = vmul.f32 %v2608, 0.125
    %v2833 = vmul.f32 %v2677, 0.125
    %v2834 = vmul.f32 %v2679, 0.125
    %v2835 = vmul.f32 %v2748, 0.125
    %v2836 = vmul.f32 %v2750, 0.125
    %v2837 = vmul.f32 %v2819, 0.125
    %v2838 = vmul.f32 %v2821, 0.125
    %v2839 = vmul.f32 %v2823, %v2823
    %v2840 = vmul.f32 %v2824, %v2824
    %v2841 = vmul.f32 %v2825, %v2825
    %v2842 = vmul.f32 %v2826, %v2826
    %v2843 = vmul.f32 %v2827, %v2827
    %v2844 = vmul.f32 %v2828, %v2828
    %v2845 = vmul.f32 %v2829, %v2829
    %v2846 = vmul.f32 %v2830, %v2830
    %v2847 = vsub.f32 %v2831, %v2839
    %v2848 = vsub.f32 %v2832, %v2840
    %v2849 = vsub.f32 %v2833, %v2841
    %v2850 = vsub.f32 %v2834, %v2842
    %v2851 = vsub.f32 %v2835, %v2843
    %v2852 = vsub.f32 %v2836, %v2844
    %v2853 = vsub.f32 %v2837, %v2845
    %v2854 = vsub.f32 %v2838, %v2846
    %v2855 = vadd.f32 %v2847, 0.8
    %v2856 = vadd.f32 %v2848, 0.8
    %v2857 = vadd.f32 %v2849, 0.8
    %v2858 = vadd.f32 %v2850, 0.8
    %v2859 = vadd.f32 %v2851, 0.8
    %v2860 = vadd.f32 %v2852, 0.8
    %v2861 = vadd.f32 %v2853, 0.8
    %v2862 = vadd.f32 %v2854, 0.8
    %v2863 = vrsqrt.pop %v2855
    %v2864 = vrsqrt.pop %v2856
    %v2865 = vrsqrt.pop %v2857
    %v2866 = vrsqrt.pop %v2858
    %v2867 = vrsqrt.pop %v2859
    %v2868 = vrsqrt.pop %v2860
    %v2869 = vrsqrt.pop %v2861
    %v2870 = vrsqrt.pop %v2862
    %v2879 = vcombine.low %v2863, %v2864
    %v2880 = vcombine.low %v2865, %v2866
    %v2881 = vcombine.low %v2867, %v2868
    %v2882 = vcombine.low %v2869, %v2870
    %v2884 = vunpack.c.l.s4 1966171168
    %v2885 = vunpack.c.0.s8 %v2884
    %v2886 = vlaneseq
    %v2887 = vshrl.u32 %v2886, 7
    %v2888 = vsub.s32 %v2885, %v2887
    %v2889 = vrot.slane %v2879, %v2888
    %v2891 = vunpack.c.l.s4 1966171168
    %v2892 = vunpack.c.0.s8 %v2891
    %v2893 = vlaneseq
    %v2894 = vshrl.u32 %v2893, 7
    %v2895 = vsub.s32 %v2892, %v2894
    %v2896 = vrot.slane %v2880, %v2895
    %v2898 = vunpack.c.l.s4 1966171168
    %v2899 = vunpack.c.0.s8 %v2898
    %v2900 = vlaneseq
    %v2901 = vshrl.u32 %v2900, 7
    %v2902 = vsub.s32 %v2899, %v2901
    %v2903 = vrot.slane %v2881, %v2902
    %v2905 = vunpack.c.l.s4 1966171168
    %v2906 = vunpack.c.0.s8 %v2905
    %v2907 = vlaneseq
    %v2908 = vshrl.u32 %v2907, 7
    %v2909 = vsub.s32 %v2906, %v2908
    %v2910 = vrot.slane %v2882, %v2909
    %v2911 = vcombine.low %v2889, %v2896
    %v2912 = vcombine.low %v2903, %v2910
    %v2914 = vunpack.c.l.s4 1966171168
    %v2915 = vunpack.c.0.s8 %v2914
    %v2916 = vlaneseq
    %v2917 = vshrl.u32 %v2916, 7
    %v2918 = vsub.s32 %v2915, %v2917
    %v2919 = vrot.slane %v2911, %v2918
    %v2921 = vunpack.c.l.s4 1966171168
    %v2922 = vunpack.c.0.s8 %v2921
    %v2923 = vlaneseq
    %v2924 = vshrl.u32 %v2923, 7
    %v2925 = vsub.s32 %v2922, %v2924
    %v2926 = vrot.slane %v2912, %v2925
    %v2927 = vcombine.low %v2919, %v2926
    %v2929 = vmul.f32 %v2245, %v2927
    %v2931 = vlaneseq
    %v2932 = vshrl.u32 %v2931, 7
    %v2933 = vsub.s32 0, %v2932
    %v2934 = vrot.slane %v2929, %v2933
    %v2935 = vlaneseq
    %v2936 = vshrl.u32 %v2935, 7
    %v2937 = vsub.s32 1, %v2936
    %v2938 = vrot.slane %v2929, %v2937
    %v2939 = vlaneseq
    %v2940 = vshrl.u32 %v2939, 7
    %v2941 = vsub.s32 2, %v2940
    %v2942 = vrot.slane %v2929, %v2941
    %v2943 = vlaneseq
    %v2944 = vshrl.u32 %v2943, 7
    %v2945 = vsub.s32 3, %v2944
    %v2946 = vrot.slane %v2929, %v2945
    %v2947 = vlaneseq
    %v2948 = vshrl.u32 %v2947, 7
    %v2949 = vsub.s32 4, %v2948
    %v2950 = vrot.slane %v2929, %v2949
    %v2951 = vlaneseq
    %v2952 = vshrl.u32 %v2951, 7
    %v2953 = vsub.s32 5, %v2952
    %v2954 = vrot.slane %v2929, %v2953
    %v2955 = vlaneseq
    %v2956 = vshrl.u32 %v2955, 7
    %v2957 = vsub.s32 6, %v2956
    %v2958 = vrot.slane %v2929, %v2957
    %v2959 = vlaneseq
    %v2960 = vshrl.u32 %v2959, 7
    %v2961 = vsub.s32 7, %v2960
    %v2962 = vrot.slane %v2929, %v2961
    %v2971 = vmul.f32 %v2823, %v2934
    %v2972 = vmul.f32 %v2824, %v2938
    %v2973 = vmul.f32 %v2825, %v2942
    %v2974 = vmul.f32 %v2826, %v2946
    %v2975 = vmul.f32 %v2827, %v2950
    %v2976 = vmul.f32 %v2828, %v2954
    %v2977 = vmul.f32 %v2829, %v2958
    %v2978 = vmul.f32 %v2830, %v2962
    %v2987 = vcombine.low %v2971, %v2972
    %v2988 = vcombine.low %v2973, %v2974
    %v2989 = vcombine.low %v2975, %v2976
    %v2990 = vcombine.low %v2977, %v2978
    %v2992 = vunpack.c.l.s4 1966171168
    %v2993 = vunpack.c.0.s8 %v2992
    %v2994 = vlaneseq
    %v2995 = vshrl.u32 %v2994, 7
    %v2996 = vsub.s32 %v2993, %v2995
    %v2997 = vrot.slane %v2987, %v2996
    %v2999 = vunpack.c.l.s4 1966171168
    %v3000 = vunpack.c.0.s8 %v2999
    %v3001 = vlaneseq
    %v3002 = vshrl.u32 %v3001, 7
    %v3003 = vsub.s32 %v3000, %v3002
    %v3004 = vrot.slane %v2988, %v3003
    %v3006 = vunpack.c.l.s4 1966171168
    %v3007 = vunpack.c.0.s8 %v3006
    %v3008 = vlaneseq
    %v3009 = vshrl.u32 %v3008, 7
    %v3010 = vsub.s32 %v3007, %v3009
    %v3011 = vrot.slane %v2989, %v3010
    %v3013 = vunpack.c.l.s4 1966171168
    %v3014 = vunpack.c.0.s8 %v3013
    %v3015 = vlaneseq
    %v3016 = vshrl.u32 %v3015, 7
    %v3017 = vsub.s32 %v3014, %v3016
    %v3018 = vrot.slane %v2990, %v3017
    %v3019 = vcombine.low %v2997, %v3004
    %v3020 = vcombine.low %v3011, %v3018
    %v3022 = vunpack.c.l.s4 1966171168
    %v3023 = vunpack.c.0.s8 %v3022
    %v3024 = vlaneseq
    %v3025 = vshrl.u32 %v3024, 7
    %v3026 = vsub.s32 %v3023, %v3025
    %v3027 = vrot.slane %v3019, %v3026
    %v3029 = vunpack.c.l.s4 1966171168
    %v3030 = vunpack.c.0.s8 %v3029
    %v3031 = vlaneseq
    %v3032 = vshrl.u32 %v3031, 7
    %v3033 = vsub.s32 %v3030, %v3032
    %v3034 = vrot.slane %v3020, %v3033
    %v3035 = vcombine.low %v3027, %v3034
    %v3037 = vsub.f32 %v2246, %v3035
    %v3038 = vmul.f32 %v1993, %v2934
    %v3039 = vmul.f32 %v1995, %v2938
    %v3040 = vmul.f32 %v2075, %v2942
    %v3041 = vmul.f32 %v2077, %v2946
    %v3042 = vmul.f32 %v2157, %v2950
    %v3043 = vmul.f32 %v2159, %v2954
    %v3044 = vmul.f32 %v2239, %v2958
    %v3045 = vmul.f32 %v2241, %v2962
    %v3047 = vlaneseq
    %v3048 = vshrl.u32 %v3047, 7
    %v3049 = vsub.s32 0, %v3048
    %v3050 = vrot.slane %v3037, %v3049
    %v3051 = vlaneseq
    %v3052 = vshrl.u32 %v3051, 7
    %v3053 = vsub.s32 1, %v3052
    %v3054 = vrot.slane %v3037, %v3053
    %v3055 = vlaneseq
    %v3056 = vshrl.u32 %v3055, 7
    %v3057 = vsub.s32 2, %v3056
    %v3058 = vrot.slane %v3037, %v3057
    %v3059 = vlaneseq
    %v3060 = vshrl.u32 %v3059, 7
    %v3061 = vsub.s32 3, %v3060
    %v3062 = vrot.slane %v3037, %v3061
    %v3063 = vlaneseq
    %v3064 = vshrl.u32 %v3063, 7
    %v3065 = vsub.s32 4, %v3064
    %v3066 = vrot.slane %v3037, %v3065
    %v3067 = vlaneseq
    %v3068 = vshrl.u32 %v3067, 7
    %v3069 = vsub.s32 5, %v3068
    %v3070 = vrot.slane %v3037, %v3069
    %v3071 = vlaneseq
    %v3072 = vshrl.u32 %v3071, 7
    %v3073 = vsub.s32 6, %v3072
    %v3074 = vrot.slane %v3037, %v3073
    %v3075 = vlaneseq
    %v3076 = vshrl.u32 %v3075, 7
    %v3077 = vsub.s32 7, %v3076
    %v3078 = vrot.slane %v3037, %v3077
    %v3087 = vadd.f32 %v3038, %v3050
    %v3088 = vadd.f32 %v3039, %v3054
    %v3089 = vadd.f32 %v3040, %v3058
    %v3090 = vadd.f32 %v3041, %v3062
    %v3091 = vadd.f32 %v3042, %v3066
    %v3092 = vadd.f32 %v3043, %v3070
    %v3093 = vadd.f32 %v3044, %v3074
    %v3094 = vadd.f32 %v3045, %v3078
    %v3095 = vmul.f32 %v3087, 0.2
    %v3096 = vmul.f32 %v3088, 0.2
    %v3097 = vmul.f32 %v3089, 0.2
    %v3098 = vmul.f32 %v3090, 0.2
    %v3099 = vmul.f32 %v3091, 0.2
    %v3100 = vmul.f32 %v3092, 0.2
    %v3101 = vmul.f32 %v3093, 0.2
    %v3102 = vmul.f32 %v3094, 0.2
    %v3103 = vmax.f32 %v3087, %v3095
    %v3104 = vmax.f32 %v3088, %v3096
    %v3105 = vmax.f32 %v3089, %v3097
    %v3106 = vmax.f32 %v3090, %v3098
    %v3107 = vmax.f32 %v3091, %v3099
    %v3108 = vmax.f32 %v3092, %v3100
    %v3109 = vmax.f32 %v3093, %v3101
    %v3110 = vmax.f32 %v3094, %v3102
    %s3111 = smul.u32 4, 128
    %s3112 = smul.u32 %s3111, 7
    %s3113 = sshll.u32 %s3112, 4
    %3114 = dma.done %s225, %s3113
    %v3115 = vpack.c.bf16 %v3103, %v3103
    %v3116 = vpack.c.bf16 %v3104, %v3104
    %v3117 = vpack.c.bf16 %v3105, %v3105
    %v3118 = vpack.c.bf16 %v3106, %v3106
    %v3119 = vpack.c.bf16 %v3107, %v3107
    %v3120 = vpack.c.bf16 %v3108, %v3108
    %v3121 = vpack.c.bf16 %v3109, %v3109
    %v3122 = vpack.c.bf16 %v3110, %v3110
    %v3123 = vld [vmem:[#allocation3] sm:$0xff]
    %v3124 = vld [vmem:[#allocation3 + $0x8] sm:$0xff]
    %v3125 = vld [vmem:[#allocation3 + $0x10] sm:$0xff]
    %v3126 = vld [vmem:[#allocation3 + $0x18] sm:$0xff]
    %v3127 = vld [vmem:[#allocation3 + $0x20] sm:$0xff]
    %v3128 = vld [vmem:[#allocation3 + $0x28] sm:$0xff]
    %v3129 = vld [vmem:[#allocation3 + $0x30] sm:$0xff]
    %v3130 = vld [vmem:[#allocation3 + $0x38] sm:$0xff]
    %v3131 = vld [vmem:[#allocation3 + $0x40] sm:$0xff]
    %v3132 = vld [vmem:[#allocation3 + $0x48] sm:$0xff]
    %v3133 = vld [vmem:[#allocation3 + $0x50] sm:$0xff]
    %v3134 = vld [vmem:[#allocation3 + $0x58] sm:$0xff]
    %v3135 = vld [vmem:[#allocation3 + $0x60] sm:$0xff]
    %v3136 = vld [vmem:[#allocation3 + $0x68] sm:$0xff]
    %v3137 = vld [vmem:[#allocation3 + $0x70] sm:$0xff]
    %v3138 = vld [vmem:[#allocation3 + $0x78] sm:$0xff]
    %v3139 = vld [vmem:[#allocation3 + $0x80] sm:$0xff]
    %v3140 = vld [vmem:[#allocation3 + $0x88] sm:$0xff]
    %v3141 = vld [vmem:[#allocation3 + $0x90] sm:$0xff]
    %v3142 = vld [vmem:[#allocation3 + $0x98] sm:$0xff]
    %v3143 = vld [vmem:[#allocation3 + $0xa0] sm:$0xff]
    %v3144 = vld [vmem:[#allocation3 + $0xa8] sm:$0xff]
    %v3145 = vld [vmem:[#allocation3 + $0xb0] sm:$0xff]
    %v3146 = vld [vmem:[#allocation3 + $0xb8] sm:$0xff]
    %v3147 = vld [vmem:[#allocation3 + $0xc0] sm:$0xff]
    %v3148 = vld [vmem:[#allocation3 + $0xc8] sm:$0xff]
    %v3149 = vld [vmem:[#allocation3 + $0xd0] sm:$0xff]
    %v3150 = vld [vmem:[#allocation3 + $0xd8] sm:$0xff]
    %v3151 = vld [vmem:[#allocation3 + $0xe0] sm:$0xff]
    %v3152 = vld [vmem:[#allocation3 + $0xe8] sm:$0xff]
    %v3153 = vld [vmem:[#allocation3 + $0xf0] sm:$0xff]
    %v3154 = vld [vmem:[#allocation3 + $0xf8] sm:$0xff]
    %v3155 = vld [vmem:[#allocation3 + $0x100] sm:$0xff]
    %v3156 = vld [vmem:[#allocation3 + $0x108] sm:$0xff]
    %v3157 = vld [vmem:[#allocation3 + $0x110] sm:$0xff]
    %v3158 = vld [vmem:[#allocation3 + $0x118] sm:$0xff]
    %v3159 = vld [vmem:[#allocation3 + $0x120] sm:$0xff]
    %v3160 = vld [vmem:[#allocation3 + $0x128] sm:$0xff]
    %v3161 = vld [vmem:[#allocation3 + $0x130] sm:$0xff]
    %v3162 = vld [vmem:[#allocation3 + $0x138] sm:$0xff]
    %v3163 = vld [vmem:[#allocation3 + $0x140] sm:$0xff]
    %v3164 = vld [vmem:[#allocation3 + $0x148] sm:$0xff]
    %v3165 = vld [vmem:[#allocation3 + $0x150] sm:$0xff]
    %v3166 = vld [vmem:[#allocation3 + $0x158] sm:$0xff]
    %v3167 = vld [vmem:[#allocation3 + $0x160] sm:$0xff]
    %v3168 = vld [vmem:[#allocation3 + $0x168] sm:$0xff]
    %v3169 = vld [vmem:[#allocation3 + $0x170] sm:$0xff]
    %v3170 = vld [vmem:[#allocation3 + $0x178] sm:$0xff]
    %v3171 = vld [vmem:[#allocation3 + $0x180] sm:$0xff]
    %v3172 = vld [vmem:[#allocation3 + $0x188] sm:$0xff]
    %v3173 = vld [vmem:[#allocation3 + $0x190] sm:$0xff]
    %v3174 = vld [vmem:[#allocation3 + $0x198] sm:$0xff]
    %v3175 = vld [vmem:[#allocation3 + $0x1a0] sm:$0xff]
    %v3176 = vld [vmem:[#allocation3 + $0x1a8] sm:$0xff]
    %v3177 = vld [vmem:[#allocation3 + $0x1b0] sm:$0xff]
    %v3178 = vld [vmem:[#allocation3 + $0x1b8] sm:$0xff]
    %v3179 = vld [vmem:[#allocation3 + $0x1c0] sm:$0xff]
    %v3180 = vld [vmem:[#allocation3 + $0x1c8] sm:$0xff]
    %v3181 = vld [vmem:[#allocation3 + $0x1d0] sm:$0xff]
    %v3182 = vld [vmem:[#allocation3 + $0x1d8] sm:$0xff]
    %v3183 = vld [vmem:[#allocation3 + $0x1e0] sm:$0xff]
    %v3184 = vld [vmem:[#allocation3 + $0x1e8] sm:$0xff]
    %v3185 = vld [vmem:[#allocation3 + $0x1f0] sm:$0xff]
    %v3186 = vld [vmem:[#allocation3 + $0x1f8] sm:$0xff]
    %v3187 = vld [vmem:[#allocation3 + $0x200] sm:$0xff]
    %v3188 = vld [vmem:[#allocation3 + $0x208] sm:$0xff]
    %v3189 = vld [vmem:[#allocation3 + $0x210] sm:$0xff]
    %v3190 = vld [vmem:[#allocation3 + $0x218] sm:$0xff]
    %v3191 = vld [vmem:[#allocation3 + $0x220] sm:$0xff]
    %v3192 = vld [vmem:[#allocation3 + $0x228] sm:$0xff]
    %v3193 = vld [vmem:[#allocation3 + $0x230] sm:$0xff]
    %v3194 = vld [vmem:[#allocation3 + $0x238] sm:$0xff]
    %v3195 = vld [vmem:[#allocation3 + $0x240] sm:$0xff]
    %v3196 = vld [vmem:[#allocation3 + $0x248] sm:$0xff]
    %v3197 = vld [vmem:[#allocation3 + $0x250] sm:$0xff]
    %v3198 = vld [vmem:[#allocation3 + $0x258] sm:$0xff]
    %v3199 = vld [vmem:[#allocation3 + $0x260] sm:$0xff]
    %v3200 = vld [vmem:[#allocation3 + $0x268] sm:$0xff]
    %v3201 = vld [vmem:[#allocation3 + $0x270] sm:$0xff]
    %v3202 = vld [vmem:[#allocation3 + $0x278] sm:$0xff]
    %v3203 = vld [vmem:[#allocation3 + $0x280] sm:$0xff]
    %v3204 = vld [vmem:[#allocation3 + $0x288] sm:$0xff]
    %v3205 = vld [vmem:[#allocation3 + $0x290] sm:$0xff]
    %v3206 = vld [vmem:[#allocation3 + $0x298] sm:$0xff]
    %v3207 = vld [vmem:[#allocation3 + $0x2a0] sm:$0xff]
    %v3208 = vld [vmem:[#allocation3 + $0x2a8] sm:$0xff]
    %v3209 = vld [vmem:[#allocation3 + $0x2b0] sm:$0xff]
    %v3210 = vld [vmem:[#allocation3 + $0x2b8] sm:$0xff]
    %v3211 = vld [vmem:[#allocation3 + $0x2c0] sm:$0xff]
    %v3212 = vld [vmem:[#allocation3 + $0x2c8] sm:$0xff]
    %v3213 = vld [vmem:[#allocation3 + $0x2d0] sm:$0xff]
    %v3214 = vld [vmem:[#allocation3 + $0x2d8] sm:$0xff]
    %v3215 = vld [vmem:[#allocation3 + $0x2e0] sm:$0xff]
    %v3216 = vld [vmem:[#allocation3 + $0x2e8] sm:$0xff]
    %v3217 = vld [vmem:[#allocation3 + $0x2f0] sm:$0xff]
    %v3218 = vld [vmem:[#allocation3 + $0x2f8] sm:$0xff]
    %v3219 = vld [vmem:[#allocation3 + $0x300] sm:$0xff]
    %v3220 = vld [vmem:[#allocation3 + $0x308] sm:$0xff]
    %v3221 = vld [vmem:[#allocation3 + $0x310] sm:$0xff]
    %v3222 = vld [vmem:[#allocation3 + $0x318] sm:$0xff]
    %v3223 = vld [vmem:[#allocation3 + $0x320] sm:$0xff]
    %v3224 = vld [vmem:[#allocation3 + $0x328] sm:$0xff]
    %v3225 = vld [vmem:[#allocation3 + $0x330] sm:$0xff]
    %v3226 = vld [vmem:[#allocation3 + $0x338] sm:$0xff]
    %v3227 = vld [vmem:[#allocation3 + $0x340] sm:$0xff]
    %v3228 = vld [vmem:[#allocation3 + $0x348] sm:$0xff]
    %v3229 = vld [vmem:[#allocation3 + $0x350] sm:$0xff]
    %v3230 = vld [vmem:[#allocation3 + $0x358] sm:$0xff]
    %v3231 = vld [vmem:[#allocation3 + $0x360] sm:$0xff]
    %v3232 = vld [vmem:[#allocation3 + $0x368] sm:$0xff]
    %v3233 = vld [vmem:[#allocation3 + $0x370] sm:$0xff]
    %v3234 = vld [vmem:[#allocation3 + $0x378] sm:$0xff]
    %v3235 = vld [vmem:[#allocation3 + $0x380] sm:$0xff]
    %v3236 = vld [vmem:[#allocation3 + $0x388] sm:$0xff]
    %v3237 = vld [vmem:[#allocation3 + $0x390] sm:$0xff]
    %v3238 = vld [vmem:[#allocation3 + $0x398] sm:$0xff]
    %v3239 = vld [vmem:[#allocation3 + $0x3a0] sm:$0xff]
    %v3240 = vld [vmem:[#allocation3 + $0x3a8] sm:$0xff]
    %v3241 = vld [vmem:[#allocation3 + $0x3b0] sm:$0xff]
    %v3242 = vld [vmem:[#allocation3 + $0x3b8] sm:$0xff]
    %v3243 = vld [vmem:[#allocation3 + $0x3c0] sm:$0xff]
    %v3244 = vld [vmem:[#allocation3 + $0x3c8] sm:$0xff]
    %v3245 = vld [vmem:[#allocation3 + $0x3d0] sm:$0xff]
    %v3246 = vld [vmem:[#allocation3 + $0x3d8] sm:$0xff]
    %v3247 = vld [vmem:[#allocation3 + $0x3e0] sm:$0xff]
    %v3248 = vld [vmem:[#allocation3 + $0x3e8] sm:$0xff]
    %v3249 = vld [vmem:[#allocation3 + $0x3f0] sm:$0xff]
    %v3250 = vld [vmem:[#allocation3 + $0x3f8] sm:$0xff]
    %v3251 = vld [vmem:[#allocation3 + $0x400] sm:$0xff]
    %v3252 = vld [vmem:[#allocation3 + $0x408] sm:$0xff]
    %v3253 = vld [vmem:[#allocation3 + $0x410] sm:$0xff]
    %v3254 = vld [vmem:[#allocation3 + $0x418] sm:$0xff]
    %v3255 = vld [vmem:[#allocation3 + $0x420] sm:$0xff]
    %v3256 = vld [vmem:[#allocation3 + $0x428] sm:$0xff]
    %v3257 = vld [vmem:[#allocation3 + $0x430] sm:$0xff]
    %v3258 = vld [vmem:[#allocation3 + $0x438] sm:$0xff]
    %v3259 = vld [vmem:[#allocation3 + $0x440] sm:$0xff]
    %v3260 = vld [vmem:[#allocation3 + $0x448] sm:$0xff]
    %v3261 = vld [vmem:[#allocation3 + $0x450] sm:$0xff]
    %v3262 = vld [vmem:[#allocation3 + $0x458] sm:$0xff]
    %v3263 = vld [vmem:[#allocation3 + $0x460] sm:$0xff]
    %v3264 = vld [vmem:[#allocation3 + $0x468] sm:$0xff]
    %v3265 = vld [vmem:[#allocation3 + $0x470] sm:$0xff]
    %v3266 = vld [vmem:[#allocation3 + $0x478] sm:$0xff]
    %v3267 = vld [vmem:[#allocation3 + $0x480] sm:$0xff]
    %v3268 = vld [vmem:[#allocation3 + $0x488] sm:$0xff]
    %v3269 = vld [vmem:[#allocation3 + $0x490] sm:$0xff]
    %v3270 = vld [vmem:[#allocation3 + $0x498] sm:$0xff]
    %v3271 = vld [vmem:[#allocation3 + $0x4a0] sm:$0xff]
    %v3272 = vld [vmem:[#allocation3 + $0x4a8] sm:$0xff]
    %v3273 = vld [vmem:[#allocation3 + $0x4b0] sm:$0xff]
    %v3274 = vld [vmem:[#allocation3 + $0x4b8] sm:$0xff]
    %v3275 = vld [vmem:[#allocation3 + $0x4c0] sm:$0xff]
    %v3276 = vld [vmem:[#allocation3 + $0x4c8] sm:$0xff]
    %v3277 = vld [vmem:[#allocation3 + $0x4d0] sm:$0xff]
    %v3278 = vld [vmem:[#allocation3 + $0x4d8] sm:$0xff]
    %v3279 = vld [vmem:[#allocation3 + $0x4e0] sm:$0xff]
    %v3280 = vld [vmem:[#allocation3 + $0x4e8] sm:$0xff]
    %v3281 = vld [vmem:[#allocation3 + $0x4f0] sm:$0xff]
    %v3282 = vld [vmem:[#allocation3 + $0x4f8] sm:$0xff]
    %v3283 = vld [vmem:[#allocation3 + $0x500] sm:$0xff]
    %v3284 = vld [vmem:[#allocation3 + $0x508] sm:$0xff]
    %v3285 = vld [vmem:[#allocation3 + $0x510] sm:$0xff]
    %v3286 = vld [vmem:[#allocation3 + $0x518] sm:$0xff]
    %v3287 = vld [vmem:[#allocation3 + $0x520] sm:$0xff]
    %v3288 = vld [vmem:[#allocation3 + $0x528] sm:$0xff]
    %v3289 = vld [vmem:[#allocation3 + $0x530] sm:$0xff]
    %v3290 = vld [vmem:[#allocation3 + $0x538] sm:$0xff]
    %v3291 = vld [vmem:[#allocation3 + $0x540] sm:$0xff]
    %v3292 = vld [vmem:[#allocation3 + $0x548] sm:$0xff]
    %v3293 = vld [vmem:[#allocation3 + $0x550] sm:$0xff]
    %v3294 = vld [vmem:[#allocation3 + $0x558] sm:$0xff]
    %v3295 = vld [vmem:[#allocation3 + $0x560] sm:$0xff]
    %v3296 = vld [vmem:[#allocation3 + $0x568] sm:$0xff]
    %v3297 = vld [vmem:[#allocation3 + $0x570] sm:$0xff]
    %v3298 = vld [vmem:[#allocation3 + $0x578] sm:$0xff]
    %v3299 = vld [vmem:[#allocation3 + $0x580] sm:$0xff]
    %v3300 = vld [vmem:[#allocation3 + $0x588] sm:$0xff]
    %v3301 = vld [vmem:[#allocation3 + $0x590] sm:$0xff]
    %v3302 = vld [vmem:[#allocation3 + $0x598] sm:$0xff]
    %v3303 = vld [vmem:[#allocation3 + $0x5a0] sm:$0xff]
    %v3304 = vld [vmem:[#allocation3 + $0x5a8] sm:$0xff]
    %v3305 = vld [vmem:[#allocation3 + $0x5b0] sm:$0xff]
    %v3306 = vld [vmem:[#allocation3 + $0x5b8] sm:$0xff]
    %v3307 = vld [vmem:[#allocation3 + $0x5c0] sm:$0xff]
    %v3308 = vld [vmem:[#allocation3 + $0x5c8] sm:$0xff]
    %v3309 = vld [vmem:[#allocation3 + $0x5d0] sm:$0xff]
    %v3310 = vld [vmem:[#allocation3 + $0x5d8] sm:$0xff]
    %v3311 = vld [vmem:[#allocation3 + $0x5e0] sm:$0xff]
    %v3312 = vld [vmem:[#allocation3 + $0x5e8] sm:$0xff]
    %v3313 = vld [vmem:[#allocation3 + $0x5f0] sm:$0xff]
    %v3314 = vld [vmem:[#allocation3 + $0x5f8] sm:$0xff]
    %v3315 = vld [vmem:[#allocation3 + $0x600] sm:$0xff]
    %v3316 = vld [vmem:[#allocation3 + $0x608] sm:$0xff]
    %v3317 = vld [vmem:[#allocation3 + $0x610] sm:$0xff]
    %v3318 = vld [vmem:[#allocation3 + $0x618] sm:$0xff]
    %v3319 = vld [vmem:[#allocation3 + $0x620] sm:$0xff]
    %v3320 = vld [vmem:[#allocation3 + $0x628] sm:$0xff]
    %v3321 = vld [vmem:[#allocation3 + $0x630] sm:$0xff]
    %v3322 = vld [vmem:[#allocation3 + $0x638] sm:$0xff]
    %v3323 = vld [vmem:[#allocation3 + $0x640] sm:$0xff]
    %v3324 = vld [vmem:[#allocation3 + $0x648] sm:$0xff]
    %v3325 = vld [vmem:[#allocation3 + $0x650] sm:$0xff]
    %v3326 = vld [vmem:[#allocation3 + $0x658] sm:$0xff]
    %v3327 = vld [vmem:[#allocation3 + $0x660] sm:$0xff]
    %v3328 = vld [vmem:[#allocation3 + $0x668] sm:$0xff]
    %v3329 = vld [vmem:[#allocation3 + $0x670] sm:$0xff]
    %v3330 = vld [vmem:[#allocation3 + $0x678] sm:$0xff]
    %v3331 = vld [vmem:[#allocation3 + $0x680] sm:$0xff]
    %v3332 = vld [vmem:[#allocation3 + $0x688] sm:$0xff]
    %v3333 = vld [vmem:[#allocation3 + $0x690] sm:$0xff]
    %v3334 = vld [vmem:[#allocation3 + $0x698] sm:$0xff]
    %v3335 = vld [vmem:[#allocation3 + $0x6a0] sm:$0xff]
    %v3336 = vld [vmem:[#allocation3 + $0x6a8] sm:$0xff]
    %v3337 = vld [vmem:[#allocation3 + $0x6b0] sm:$0xff]
    %v3338 = vld [vmem:[#allocation3 + $0x6b8] sm:$0xff]
    %v3339 = vld [vmem:[#allocation3 + $0x6c0] sm:$0xff]
    %v3340 = vld [vmem:[#allocation3 + $0x6c8] sm:$0xff]
    %v3341 = vld [vmem:[#allocation3 + $0x6d0] sm:$0xff]
    %v3342 = vld [vmem:[#allocation3 + $0x6d8] sm:$0xff]
    %v3343 = vld [vmem:[#allocation3 + $0x6e0] sm:$0xff]
    %v3344 = vld [vmem:[#allocation3 + $0x6e8] sm:$0xff]
    %v3345 = vld [vmem:[#allocation3 + $0x6f0] sm:$0xff]
    %v3346 = vld [vmem:[#allocation3 + $0x6f8] sm:$0xff]
    %v3347 = vld [vmem:[#allocation3 + $0x700] sm:$0xff]
    %v3348 = vld [vmem:[#allocation3 + $0x708] sm:$0xff]
    %v3349 = vld [vmem:[#allocation3 + $0x710] sm:$0xff]
    %v3350 = vld [vmem:[#allocation3 + $0x718] sm:$0xff]
    %v3351 = vld [vmem:[#allocation3 + $0x720] sm:$0xff]
    %v3352 = vld [vmem:[#allocation3 + $0x728] sm:$0xff]
    %v3353 = vld [vmem:[#allocation3 + $0x730] sm:$0xff]
    %v3354 = vld [vmem:[#allocation3 + $0x738] sm:$0xff]
    %v3355 = vld [vmem:[#allocation3 + $0x740] sm:$0xff]
    %v3356 = vld [vmem:[#allocation3 + $0x748] sm:$0xff]
    %v3357 = vld [vmem:[#allocation3 + $0x750] sm:$0xff]
    %v3358 = vld [vmem:[#allocation3 + $0x758] sm:$0xff]
    %v3359 = vld [vmem:[#allocation3 + $0x760] sm:$0xff]
    %v3360 = vld [vmem:[#allocation3 + $0x768] sm:$0xff]
    %v3361 = vld [vmem:[#allocation3 + $0x770] sm:$0xff]
    %v3362 = vld [vmem:[#allocation3 + $0x778] sm:$0xff]
    %v3363 = vld [vmem:[#allocation3 + $0x780] sm:$0xff]
    %v3364 = vld [vmem:[#allocation3 + $0x788] sm:$0xff]
    %v3365 = vld [vmem:[#allocation3 + $0x790] sm:$0xff]
    %v3366 = vld [vmem:[#allocation3 + $0x798] sm:$0xff]
    %v3367 = vld [vmem:[#allocation3 + $0x7a0] sm:$0xff]
    %v3368 = vld [vmem:[#allocation3 + $0x7a8] sm:$0xff]
    %v3369 = vld [vmem:[#allocation3 + $0x7b0] sm:$0xff]
    %v3370 = vld [vmem:[#allocation3 + $0x7b8] sm:$0xff]
    %v3371 = vld [vmem:[#allocation3 + $0x7c0] sm:$0xff]
    %v3372 = vld [vmem:[#allocation3 + $0x7c8] sm:$0xff]
    %v3373 = vld [vmem:[#allocation3 + $0x7d0] sm:$0xff]
    %v3374 = vld [vmem:[#allocation3 + $0x7d8] sm:$0xff]
    %v3375 = vld [vmem:[#allocation3 + $0x7e0] sm:$0xff]
    %v3376 = vld [vmem:[#allocation3 + $0x7e8] sm:$0xff]
    %v3377 = vld [vmem:[#allocation3 + $0x7f0] sm:$0xff]
    %v3378 = vld [vmem:[#allocation3 + $0x7f8] sm:$0xff]
    %v3379 = vld [vmem:[#allocation3 + $0x800] sm:$0xff]
    %v3380 = vld [vmem:[#allocation3 + $0x808] sm:$0xff]
    %v3381 = vld [vmem:[#allocation3 + $0x810] sm:$0xff]
    %v3382 = vld [vmem:[#allocation3 + $0x818] sm:$0xff]
    %v3383 = vld [vmem:[#allocation3 + $0x820] sm:$0xff]
    %v3384 = vld [vmem:[#allocation3 + $0x828] sm:$0xff]
    %v3385 = vld [vmem:[#allocation3 + $0x830] sm:$0xff]
    %v3386 = vld [vmem:[#allocation3 + $0x838] sm:$0xff]
    %v3387 = vld [vmem:[#allocation3 + $0x840] sm:$0xff]
    %v3388 = vld [vmem:[#allocation3 + $0x848] sm:$0xff]
    %v3389 = vld [vmem:[#allocation3 + $0x850] sm:$0xff]
    %v3390 = vld [vmem:[#allocation3 + $0x858] sm:$0xff]
    %v3391 = vld [vmem:[#allocation3 + $0x860] sm:$0xff]
    %v3392 = vld [vmem:[#allocation3 + $0x868] sm:$0xff]
    %v3393 = vld [vmem:[#allocation3 + $0x870] sm:$0xff]
    %v3394 = vld [vmem:[#allocation3 + $0x878] sm:$0xff]
    %v3395 = vld [vmem:[#allocation3 + $0x880] sm:$0xff]
    %v3396 = vld [vmem:[#allocation3 + $0x888] sm:$0xff]
    %v3397 = vld [vmem:[#allocation3 + $0x890] sm:$0xff]
    %v3398 = vld [vmem:[#allocation3 + $0x898] sm:$0xff]
    %v3399 = vld [vmem:[#allocation3 + $0x8a0] sm:$0xff]
    %v3400 = vld [vmem:[#allocation3 + $0x8a8] sm:$0xff]
    %v3401 = vld [vmem:[#allocation3 + $0x8b0] sm:$0xff]
    %v3402 = vld [vmem:[#allocation3 + $0x8b8] sm:$0xff]
    %v3403 = vld [vmem:[#allocation3 + $0x8c0] sm:$0xff]
    %v3404 = vld [vmem:[#allocation3 + $0x8c8] sm:$0xff]
    %v3405 = vld [vmem:[#allocation3 + $0x8d0] sm:$0xff]
    %v3406 = vld [vmem:[#allocation3 + $0x8d8] sm:$0xff]
    %v3407 = vld [vmem:[#allocation3 + $0x8e0] sm:$0xff]
    %v3408 = vld [vmem:[#allocation3 + $0x8e8] sm:$0xff]
    %v3409 = vld [vmem:[#allocation3 + $0x8f0] sm:$0xff]
    %v3410 = vld [vmem:[#allocation3 + $0x8f8] sm:$0xff]
    %v3411 = vld [vmem:[#allocation3 + $0x900] sm:$0xff]
    %v3412 = vld [vmem:[#allocation3 + $0x908] sm:$0xff]
    %v3413 = vld [vmem:[#allocation3 + $0x910] sm:$0xff]
    %v3414 = vld [vmem:[#allocation3 + $0x918] sm:$0xff]
    %v3415 = vld [vmem:[#allocation3 + $0x920] sm:$0xff]
    %v3416 = vld [vmem:[#allocation3 + $0x928] sm:$0xff]
    %v3417 = vld [vmem:[#allocation3 + $0x930] sm:$0xff]
    %v3418 = vld [vmem:[#allocation3 + $0x938] sm:$0xff]
    %v3419 = vld [vmem:[#allocation3 + $0x940] sm:$0xff]
    %v3420 = vld [vmem:[#allocation3 + $0x948] sm:$0xff]
    %v3421 = vld [vmem:[#allocation3 + $0x950] sm:$0xff]
    %v3422 = vld [vmem:[#allocation3 + $0x958] sm:$0xff]
    %v3423 = vld [vmem:[#allocation3 + $0x960] sm:$0xff]
    %v3424 = vld [vmem:[#allocation3 + $0x968] sm:$0xff]
    %v3425 = vld [vmem:[#allocation3 + $0x970] sm:$0xff]
    %v3426 = vld [vmem:[#allocation3 + $0x978] sm:$0xff]
    %v3427 = vld [vmem:[#allocation3 + $0x980] sm:$0xff]
    %v3428 = vld [vmem:[#allocation3 + $0x988] sm:$0xff]
    %v3429 = vld [vmem:[#allocation3 + $0x990] sm:$0xff]
    %v3430 = vld [vmem:[#allocation3 + $0x998] sm:$0xff]
    %v3431 = vld [vmem:[#allocation3 + $0x9a0] sm:$0xff]
    %v3432 = vld [vmem:[#allocation3 + $0x9a8] sm:$0xff]
    %v3433 = vld [vmem:[#allocation3 + $0x9b0] sm:$0xff]
    %v3434 = vld [vmem:[#allocation3 + $0x9b8] sm:$0xff]
    %v3435 = vld [vmem:[#allocation3 + $0x9c0] sm:$0xff]
    %v3436 = vld [vmem:[#allocation3 + $0x9c8] sm:$0xff]
    %v3437 = vld [vmem:[#allocation3 + $0x9d0] sm:$0xff]
    %v3438 = vld [vmem:[#allocation3 + $0x9d8] sm:$0xff]
    %v3439 = vld [vmem:[#allocation3 + $0x9e0] sm:$0xff]
    %v3440 = vld [vmem:[#allocation3 + $0x9e8] sm:$0xff]
    %v3441 = vld [vmem:[#allocation3 + $0x9f0] sm:$0xff]
    %v3442 = vld [vmem:[#allocation3 + $0x9f8] sm:$0xff]
    %v3443 = vld [vmem:[#allocation3 + $0xa00] sm:$0xff]
    %v3444 = vld [vmem:[#allocation3 + $0xa08] sm:$0xff]
    %v3445 = vld [vmem:[#allocation3 + $0xa10] sm:$0xff]
    %v3446 = vld [vmem:[#allocation3 + $0xa18] sm:$0xff]
    %v3447 = vld [vmem:[#allocation3 + $0xa20] sm:$0xff]
    %v3448 = vld [vmem:[#allocation3 + $0xa28] sm:$0xff]
    %v3449 = vld [vmem:[#allocation3 + $0xa30] sm:$0xff]
    %v3450 = vld [vmem:[#allocation3 + $0xa38] sm:$0xff]
    %v3451 = vld [vmem:[#allocation3 + $0xa40] sm:$0xff]
    %v3452 = vld [vmem:[#allocation3 + $0xa48] sm:$0xff]
    %v3453 = vld [vmem:[#allocation3 + $0xa50] sm:$0xff]
    %v3454 = vld [vmem:[#allocation3 + $0xa58] sm:$0xff]
    %v3455 = vld [vmem:[#allocation3 + $0xa60] sm:$0xff]
    %v3456 = vld [vmem:[#allocation3 + $0xa68] sm:$0xff]
    %v3457 = vld [vmem:[#allocation3 + $0xa70] sm:$0xff]
    %v3458 = vld [vmem:[#allocation3 + $0xa78] sm:$0xff]
    %v3459 = vld [vmem:[#allocation3 + $0xa80] sm:$0xff]
    %v3460 = vld [vmem:[#allocation3 + $0xa88] sm:$0xff]
    %v3461 = vld [vmem:[#allocation3 + $0xa90] sm:$0xff]
    %v3462 = vld [vmem:[#allocation3 + $0xa98] sm:$0xff]
    %v3463 = vld [vmem:[#allocation3 + $0xaa0] sm:$0xff]
    %v3464 = vld [vmem:[#allocation3 + $0xaa8] sm:$0xff]
    %v3465 = vld [vmem:[#allocation3 + $0xab0] sm:$0xff]
    %v3466 = vld [vmem:[#allocation3 + $0xab8] sm:$0xff]
    %v3467 = vld [vmem:[#allocation3 + $0xac0] sm:$0xff]
    %v3468 = vld [vmem:[#allocation3 + $0xac8] sm:$0xff]
    %v3469 = vld [vmem:[#allocation3 + $0xad0] sm:$0xff]
    %v3470 = vld [vmem:[#allocation3 + $0xad8] sm:$0xff]
    %v3471 = vld [vmem:[#allocation3 + $0xae0] sm:$0xff]
    %v3472 = vld [vmem:[#allocation3 + $0xae8] sm:$0xff]
    %v3473 = vld [vmem:[#allocation3 + $0xaf0] sm:$0xff]
    %v3474 = vld [vmem:[#allocation3 + $0xaf8] sm:$0xff]
    %v3475 = vld [vmem:[#allocation3 + $0xb00] sm:$0xff]
    %v3476 = vld [vmem:[#allocation3 + $0xb08] sm:$0xff]
    %v3477 = vld [vmem:[#allocation3 + $0xb10] sm:$0xff]
    %v3478 = vld [vmem:[#allocation3 + $0xb18] sm:$0xff]
    %v3479 = vld [vmem:[#allocation3 + $0xb20] sm:$0xff]
    %v3480 = vld [vmem:[#allocation3 + $0xb28] sm:$0xff]
    %v3481 = vld [vmem:[#allocation3 + $0xb30] sm:$0xff]
    %v3482 = vld [vmem:[#allocation3 + $0xb38] sm:$0xff]
    %v3483 = vld [vmem:[#allocation3 + $0xb40] sm:$0xff]
    %v3484 = vld [vmem:[#allocation3 + $0xb48] sm:$0xff]
    %v3485 = vld [vmem:[#allocation3 + $0xb50] sm:$0xff]
    %v3486 = vld [vmem:[#allocation3 + $0xb58] sm:$0xff]
    %v3487 = vld [vmem:[#allocation3 + $0xb60] sm:$0xff]
    %v3488 = vld [vmem:[#allocation3 + $0xb68] sm:$0xff]
    %v3489 = vld [vmem:[#allocation3 + $0xb70] sm:$0xff]
    %v3490 = vld [vmem:[#allocation3 + $0xb78] sm:$0xff]
    %v3491 = vld [vmem:[#allocation3 + $0xb80] sm:$0xff]
    %v3492 = vld [vmem:[#allocation3 + $0xb88] sm:$0xff]
    %v3493 = vld [vmem:[#allocation3 + $0xb90] sm:$0xff]
    %v3494 = vld [vmem:[#allocation3 + $0xb98] sm:$0xff]
    %v3495 = vld [vmem:[#allocation3 + $0xba0] sm:$0xff]
    %v3496 = vld [vmem:[#allocation3 + $0xba8] sm:$0xff]
    %v3497 = vld [vmem:[#allocation3 + $0xbb0] sm:$0xff]
    %v3498 = vld [vmem:[#allocation3 + $0xbb8] sm:$0xff]
    %v3499 = vld [vmem:[#allocation3 + $0xbc0] sm:$0xff]
    %v3500 = vld [vmem:[#allocation3 + $0xbc8] sm:$0xff]
    %v3501 = vld [vmem:[#allocation3 + $0xbd0] sm:$0xff]
    %v3502 = vld [vmem:[#allocation3 + $0xbd8] sm:$0xff]
    %v3503 = vld [vmem:[#allocation3 + $0xbe0] sm:$0xff]
    %v3504 = vld [vmem:[#allocation3 + $0xbe8] sm:$0xff]
    %v3505 = vld [vmem:[#allocation3 + $0xbf0] sm:$0xff]
    %v3506 = vld [vmem:[#allocation3 + $0xbf8] sm:$0xff]
    %v3507 = vld [vmem:[#allocation3 + $0xc00] sm:$0xff]
    %v3508 = vld [vmem:[#allocation3 + $0xc08] sm:$0xff]
    %v3509 = vld [vmem:[#allocation3 + $0xc10] sm:$0xff]
    %v3510 = vld [vmem:[#allocation3 + $0xc18] sm:$0xff]
    %v3511 = vld [vmem:[#allocation3 + $0xc20] sm:$0xff]
    %v3512 = vld [vmem:[#allocation3 + $0xc28] sm:$0xff]
    %v3513 = vld [vmem:[#allocation3 + $0xc30] sm:$0xff]
    %v3514 = vld [vmem:[#allocation3 + $0xc38] sm:$0xff]
    %v3515 = vld [vmem:[#allocation3 + $0xc40] sm:$0xff]
    %v3516 = vld [vmem:[#allocation3 + $0xc48] sm:$0xff]
    %v3517 = vld [vmem:[#allocation3 + $0xc50] sm:$0xff]
    %v3518 = vld [vmem:[#allocation3 + $0xc58] sm:$0xff]
    %v3519 = vld [vmem:[#allocation3 + $0xc60] sm:$0xff]
    %v3520 = vld [vmem:[#allocation3 + $0xc68] sm:$0xff]
    %v3521 = vld [vmem:[#allocation3 + $0xc70] sm:$0xff]
    %v3522 = vld [vmem:[#allocation3 + $0xc78] sm:$0xff]
    %v3523 = vld [vmem:[#allocation3 + $0xc80] sm:$0xff]
    %v3524 = vld [vmem:[#allocation3 + $0xc88] sm:$0xff]
    %v3525 = vld [vmem:[#allocation3 + $0xc90] sm:$0xff]
    %v3526 = vld [vmem:[#allocation3 + $0xc98] sm:$0xff]
    %v3527 = vld [vmem:[#allocation3 + $0xca0] sm:$0xff]
    %v3528 = vld [vmem:[#allocation3 + $0xca8] sm:$0xff]
    %v3529 = vld [vmem:[#allocation3 + $0xcb0] sm:$0xff]
    %v3530 = vld [vmem:[#allocation3 + $0xcb8] sm:$0xff]
    %v3531 = vld [vmem:[#allocation3 + $0xcc0] sm:$0xff]
    %v3532 = vld [vmem:[#allocation3 + $0xcc8] sm:$0xff]
    %v3533 = vld [vmem:[#allocation3 + $0xcd0] sm:$0xff]
    %v3534 = vld [vmem:[#allocation3 + $0xcd8] sm:$0xff]
    %v3535 = vld [vmem:[#allocation3 + $0xce0] sm:$0xff]
    %v3536 = vld [vmem:[#allocation3 + $0xce8] sm:$0xff]
    %v3537 = vld [vmem:[#allocation3 + $0xcf0] sm:$0xff]
    %v3538 = vld [vmem:[#allocation3 + $0xcf8] sm:$0xff]
    %v3539 = vld [vmem:[#allocation3 + $0xd00] sm:$0xff]
    %v3540 = vld [vmem:[#allocation3 + $0xd08] sm:$0xff]
    %v3541 = vld [vmem:[#allocation3 + $0xd10] sm:$0xff]
    %v3542 = vld [vmem:[#allocation3 + $0xd18] sm:$0xff]
    %v3543 = vld [vmem:[#allocation3 + $0xd20] sm:$0xff]
    %v3544 = vld [vmem:[#allocation3 + $0xd28] sm:$0xff]
    %v3545 = vld [vmem:[#allocation3 + $0xd30] sm:$0xff]
    %v3546 = vld [vmem:[#allocation3 + $0xd38] sm:$0xff]
    %v3547 = vld [vmem:[#allocation3 + $0xd40] sm:$0xff]
    %v3548 = vld [vmem:[#allocation3 + $0xd48] sm:$0xff]
    %v3549 = vld [vmem:[#allocation3 + $0xd50] sm:$0xff]
    %v3550 = vld [vmem:[#allocation3 + $0xd58] sm:$0xff]
    %v3551 = vld [vmem:[#allocation3 + $0xd60] sm:$0xff]
    %v3552 = vld [vmem:[#allocation3 + $0xd68] sm:$0xff]
    %v3553 = vld [vmem:[#allocation3 + $0xd70] sm:$0xff]
    %v3554 = vld [vmem:[#allocation3 + $0xd78] sm:$0xff]
    %v3555 = vld [vmem:[#allocation3 + $0xd80] sm:$0xff]
    %v3556 = vld [vmem:[#allocation3 + $0xd88] sm:$0xff]
    %v3557 = vld [vmem:[#allocation3 + $0xd90] sm:$0xff]
    %v3558 = vld [vmem:[#allocation3 + $0xd98] sm:$0xff]
    %v3559 = vld [vmem:[#allocation3 + $0xda0] sm:$0xff]
    %v3560 = vld [vmem:[#allocation3 + $0xda8] sm:$0xff]
    %v3561 = vld [vmem:[#allocation3 + $0xdb0] sm:$0xff]
    %v3562 = vld [vmem:[#allocation3 + $0xdb8] sm:$0xff]
    %v3563 = vld [vmem:[#allocation3 + $0xdc0] sm:$0xff]
    %v3564 = vld [vmem:[#allocation3 + $0xdc8] sm:$0xff]
    %v3565 = vld [vmem:[#allocation3 + $0xdd0] sm:$0xff]
    %v3566 = vld [vmem:[#allocation3 + $0xdd8] sm:$0xff]
    %v3567 = vld [vmem:[#allocation3 + $0xde0] sm:$0xff]
    %v3568 = vld [vmem:[#allocation3 + $0xde8] sm:$0xff]
    %v3569 = vld [vmem:[#allocation3 + $0xdf0] sm:$0xff]
    %v3570 = vld [vmem:[#allocation3 + $0xdf8] sm:$0xff]
    %v3571 = vld [vmem:[#allocation23] sm:$0xff]
    %v3573 = vlaneseq
    %v3574 = vshrl.u32 %v3573, 7
    %v3575 = vsub.s32 0, %v3574
    %v3576 = vrot.slane %v3571, %v3575
    %v3577 = vlaneseq
    %v3578 = vshrl.u32 %v3577, 7
    %v3579 = vsub.s32 1, %v3578
    %v3580 = vrot.slane %v3571, %v3579
    %v3581 = vlaneseq
    %v3582 = vshrl.u32 %v3581, 7
    %v3583 = vsub.s32 2, %v3582
    %v3584 = vrot.slane %v3571, %v3583
    %v3585 = vlaneseq
    %v3586 = vshrl.u32 %v3585, 7
    %v3587 = vsub.s32 3, %v3586
    %v3588 = vrot.slane %v3571, %v3587
    %v3589 = vlaneseq
    %v3590 = vshrl.u32 %v3589, 7
    %v3591 = vsub.s32 4, %v3590
    %v3592 = vrot.slane %v3571, %v3591
    %v3593 = vlaneseq
    %v3594 = vshrl.u32 %v3593, 7
    %v3595 = vsub.s32 5, %v3594
    %v3596 = vrot.slane %v3571, %v3595
    %v3597 = vlaneseq
    %v3598 = vshrl.u32 %v3597, 7
    %v3599 = vsub.s32 6, %v3598
    %v3600 = vrot.slane %v3571, %v3599
    %3608 = vmatprep.subr.bf16.mxu0 %v3124
    %3609 = vmatpush1.bf16.msra.mxu0 %v3123
    %3610 = vmatprep.subr.bf16.mxu0 %v3131
    %3611 = vmatpush1.bf16.msra.mxu0 %v3130
    %3612 = vmatprep.subr.bf16.mxu0 %v3138
    %3613 = vmatpush1.bf16.msra.mxu0 %v3137
    %3614 = vmatprep.subr.bf16.mxu0 %v3145
    %3615 = vmatpush1.bf16.msra.mxu0 %v3144
    %3616 = vmatprep.subr.bf16.mxu0 %v3152
    %3617 = vmatpush1.bf16.msra.mxu0 %v3151
    %3618 = vmatprep.subr.bf16.mxu0 %v3159
    %3619 = vmatpush1.bf16.msra.mxu0 %v3158
    %3620 = vmatprep.subr.bf16.mxu0 %v3166
    %3621 = vmatpush1.bf16.msra.mxu0 %v3165
    %3622 = vmatprep.subr.bf16.mxu0 %v3173
    %3623 = vmatpush1.bf16.msra.mxu0 %v3172
    %3624 = vmatprep.subr.bf16.mxu0 %v3180
    %3625 = vmatpush1.bf16.msra.mxu0 %v3179
    %3626 = vmatprep.subr.bf16.mxu0 %v3187
    %3627 = vmatpush1.bf16.msra.mxu0 %v3186
    %3628 = vmatprep.subr.bf16.mxu0 %v3194
    %3629 = vmatpush1.bf16.msra.mxu0 %v3193
    %3630 = vmatprep.subr.bf16.mxu0 %v3201
    %3631 = vmatpush1.bf16.msra.mxu0 %v3200
    %3632 = vmatprep.subr.bf16.mxu0 %v3208
    %3633 = vmatpush1.bf16.msra.mxu0 %v3207
    %3634 = vmatprep.subr.bf16.mxu0 %v3215
    %3635 = vmatpush1.bf16.msra.mxu0 %v3214
    %3636 = vmatprep.subr.bf16.mxu0 %v3222
    %3637 = vmatpush1.bf16.msra.mxu0 %v3221
    %3638 = vmatprep.subr.bf16.mxu0 %v3229
    %3639 = vmatpush1.bf16.msra.mxu0 %v3228
    %3640 = vmatprep.mubr.bf16.mxu0 %v3116
    %3641 = vmatmul.mubr.bf16.gmra.mrb[0].mxu0 %v3115
    %v3642 = vpop.f32.mrb[0].mxu0
    %v3643 = vadd.f32 %v3576, %v3642
    %v3644 = vpop.f32.mrb[0].mxu0
    %v3645 = vadd.f32 %v3580, %v3644
    %v3646 = vpop.f32.mrb[0].mxu0
    %v3647 = vpop.f32.mrb[0].mxu0
    %3648 = vdwg.mxu0
    %3649 = vmatprep.subr.bf16.mxu0 %v3236
    %3650 = vmatpush1.bf16.msra.mxu0 %v3235
    %3651 = vmatprep.subr.bf16.mxu0 %v3243
    %3652 = vmatpush1.bf16.msra.mxu0 %v3242
    %3653 = vmatprep.subr.bf16.mxu0 %v3250
    %3654 = vmatpush1.bf16.msra.mxu0 %v3249
    %3655 = vmatprep.subr.bf16.mxu0 %v3257
    %3656 = vmatpush1.bf16.msra.mxu0 %v3256
    %3657 = vmatprep.subr.bf16.mxu0 %v3264
    %3658 = vmatpush1.bf16.msra.mxu0 %v3263
    %3659 = vmatprep.subr.bf16.mxu0 %v3271
    %3660 = vmatpush1.bf16.msra.mxu0 %v3270
    %3661 = vmatprep.subr.bf16.mxu0 %v3278
    %3662 = vmatpush1.bf16.msra.mxu0 %v3277
    %3663 = vmatprep.subr.bf16.mxu0 %v3285
    %3664 = vmatpush1.bf16.msra.mxu0 %v3284
    %3665 = vmatprep.subr.bf16.mxu0 %v3292
    %3666 = vmatpush1.bf16.msra.mxu0 %v3291
    %3667 = vmatprep.subr.bf16.mxu0 %v3299
    %3668 = vmatpush1.bf16.msra.mxu0 %v3298
    %3669 = vmatprep.subr.bf16.mxu0 %v3306
    %3670 = vmatpush1.bf16.msra.mxu0 %v3305
    %3671 = vmatprep.subr.bf16.mxu0 %v3313
    %3672 = vmatpush1.bf16.msra.mxu0 %v3312
    %3673 = vmatprep.subr.bf16.mxu0 %v3320
    %3674 = vmatpush1.bf16.msra.mxu0 %v3319
    %3675 = vmatprep.subr.bf16.mxu0 %v3327
    %3676 = vmatpush1.bf16.msra.mxu0 %v3326
    %3677 = vmatprep.subr.bf16.mxu0 %v3334
    %3678 = vmatpush1.bf16.msra.mxu0 %v3333
    %3679 = vmatprep.subr.bf16.mxu0 %v3341
    %3680 = vmatpush1.bf16.msra.mxu0 %v3340
    %3681 = vmatprep.mubr.bf16.mxu0 %v3118
    %3682 = vmatmul.mubr.bf16.gmra.mrb[0].mxu0 %v3117
    %v3683 = vpop.f32.mrb[0].mxu0
    %v3684 = vadd.f32 %v3643, %v3683
    %v3685 = vpop.f32.mrb[0].mxu0
    %v3686 = vadd.f32 %v3645, %v3685
    %v3687 = vpop.f32.mrb[0].mxu0
    %v3688 = vpop.f32.mrb[0].mxu0
    %3689 = vdwg.mxu0
    %3690 = vmatprep.subr.bf16.mxu0 %v3348
    %3691 = vmatpush1.bf16.msra.mxu0 %v3347
    %3692 = vmatprep.subr.bf16.mxu0 %v3355
    %3693 = vmatpush1.bf16.msra.mxu0 %v3354
    %3694 = vmatprep.subr.bf16.mxu0 %v3362
    %3695 = vmatpush1.bf16.msra.mxu0 %v3361
    %3696 = vmatprep.subr.bf16.mxu0 %v3369
    %3697 = vmatpush1.bf16.msra.mxu0 %v3368
    %3698 = vmatprep.subr.bf16.mxu0 %v3376
    %3699 = vmatpush1.bf16.msra.mxu0 %v3375
    %3700 = vmatprep.subr.bf16.mxu0 %v3383
    %3701 = vmatpush1.bf16.msra.mxu0 %v3382
    %3702 = vmatprep.subr.bf16.mxu0 %v3390
    %3703 = vmatpush1.bf16.msra.mxu0 %v3389
    %3704 = vmatprep.subr.bf16.mxu0 %v3397
    %3705 = vmatpush1.bf16.msra.mxu0 %v3396
    %3706 = vmatprep.subr.bf16.mxu0 %v3404
    %3707 = vmatpush1.bf16.msra.mxu0 %v3403
    %3708 = vmatprep.subr.bf16.mxu0 %v3411
    %3709 = vmatpush1.bf16.msra.mxu0 %v3410
    %3710 = vmatprep.subr.bf16.mxu0 %v3418
    %3711 = vmatpush1.bf16.msra.mxu0 %v3417
    %3712 = vmatprep.subr.bf16.mxu0 %v3425
    %3713 = vmatpush1.bf16.msra.mxu0 %v3424
    %3714 = vmatprep.subr.bf16.mxu0 %v3432
    %3715 = vmatpush1.bf16.msra.mxu0 %v3431
    %3716 = vmatprep.subr.bf16.mxu0 %v3439
    %3717 = vmatpush1.bf16.msra.mxu0 %v3438
    %3718 = vmatprep.subr.bf16.mxu0 %v3446
    %3719 = vmatpush1.bf16.msra.mxu0 %v3445
    %3720 = vmatprep.subr.bf16.mxu0 %v3453
    %3721 = vmatpush1.bf16.msra.mxu0 %v3452
    %3722 = vmatprep.mubr.bf16.mxu0 %v3120
    %3723 = vmatmul.mubr.bf16.gmra.mrb[0].mxu0 %v3119
    %v3724 = vpop.f32.mrb[0].mxu0
    %v3725 = vadd.f32 %v3684, %v3724
    %v3726 = vpop.f32.mrb[0].mxu0
    %v3727 = vadd.f32 %v3686, %v3726
    %v3728 = vpop.f32.mrb[0].mxu0
    %v3729 = vpop.f32.mrb[0].mxu0
    %3730 = vdwg.mxu0
    %3731 = vmatprep.subr.bf16.mxu0 %v3460
    %3732 = vmatpush1.bf16.msra.mxu0 %v3459
    %3733 = vmatprep.subr.bf16.mxu0 %v3467
    %3734 = vmatpush1.bf16.msra.mxu0 %v3466
    %3735 = vmatprep.subr.bf16.mxu0 %v3474
    %3736 = vmatpush1.bf16.msra.mxu0 %v3473
    %3737 = vmatprep.subr.bf16.mxu0 %v3481
    %3738 = vmatpush1.bf16.msra.mxu0 %v3480
    %3739 = vmatprep.subr.bf16.mxu0 %v3488
    %3740 = vmatpush1.bf16.msra.mxu0 %v3487
    %3741 = vmatprep.subr.bf16.mxu0 %v3495
    %3742 = vmatpush1.bf16.msra.mxu0 %v3494
    %3743 = vmatprep.subr.bf16.mxu0 %v3502
    %3744 = vmatpush1.bf16.msra.mxu0 %v3501
    %3745 = vmatprep.subr.bf16.mxu0 %v3509
    %3746 = vmatpush1.bf16.msra.mxu0 %v3508
    %3747 = vmatprep.subr.bf16.mxu0 %v3516
    %3748 = vmatpush1.bf16.msra.mxu0 %v3515
    %3749 = vmatprep.subr.bf16.mxu0 %v3523
    %3750 = vmatpush1.bf16.msra.mxu0 %v3522
    %3751 = vmatprep.subr.bf16.mxu0 %v3530
    %3752 = vmatpush1.bf16.msra.mxu0 %v3529
    %3753 = vmatprep.subr.bf16.mxu0 %v3537
    %3754 = vmatpush1.bf16.msra.mxu0 %v3536
    %3755 = vmatprep.subr.bf16.mxu0 %v3544
    %3756 = vmatpush1.bf16.msra.mxu0 %v3543
    %3757 = vmatprep.subr.bf16.mxu0 %v3551
    %3758 = vmatpush1.bf16.msra.mxu0 %v3550
    %3759 = vmatprep.subr.bf16.mxu0 %v3558
    %3760 = vmatpush1.bf16.msra.mxu0 %v3557
    %3761 = vmatprep.subr.bf16.mxu0 %v3565
    %3762 = vmatpush1.bf16.msra.mxu0 %v3564
    %3763 = vmatprep.mubr.bf16.mxu0 %v3122
    %3764 = vmatmul.mubr.bf16.gmra.mrb[0].mxu0 %v3121
    %v3765 = vpop.f32.mrb[0].mxu0
    %v3766 = vadd.f32 %v3725, %v3765
    %v3767 = vpop.f32.mrb[0].mxu0
    %v3768 = vadd.f32 %v3727, %v3767
    %v3769 = vpop.f32.mrb[0].mxu0
    %v3770 = vpop.f32.mrb[0].mxu0
    %3771 = vdwg.mxu0
    %3772 = vmatprep.subr.bf16.mxu0 %v3126
    %3773 = vmatpush1.bf16.msra.mxu0 %v3125
    %3774 = vmatprep.subr.bf16.mxu0 %v3133
    %3775 = vmatpush1.bf16.msra.mxu0 %v3132
    %3776 = vmatprep.subr.bf16.mxu0 %v3140
    %3777 = vmatpush1.bf16.msra.mxu0 %v3139
    %3778 = vmatprep.subr.bf16.mxu0 %v3147
    %3779 = vmatpush1.bf16.msra.mxu0 %v3146
    %3780 = vmatprep.subr.bf16.mxu0 %v3154
    %3781 = vmatpush1.bf16.msra.mxu0 %v3153
    %3782 = vmatprep.subr.bf16.mxu0 %v3161
    %3783 = vmatpush1.bf16.msra.mxu0 %v3160
    %3784 = vmatprep.subr.bf16.mxu0 %v3168
    %3785 = vmatpush1.bf16.msra.mxu0 %v3167
    %3786 = vmatprep.subr.bf16.mxu0 %v3175
    %3787 = vmatpush1.bf16.msra.mxu0 %v3174
    %3788 = vmatprep.subr.bf16.mxu0 %v3182
    %3789 = vmatpush1.bf16.msra.mxu0 %v3181
    %3790 = vmatprep.subr.bf16.mxu0 %v3189
    %3791 = vmatpush1.bf16.msra.mxu0 %v3188
    %3792 = vmatprep.subr.bf16.mxu0 %v3196
    %3793 = vmatpush1.bf16.msra.mxu0 %v3195
    %3794 = vmatprep.subr.bf16.mxu0 %v3203
    %3795 = vmatpush1.bf16.msra.mxu0 %v3202
    %3796 = vmatprep.subr.bf16.mxu0 %v3210
    %3797 = vmatpush1.bf16.msra.mxu0 %v3209
    %3798 = vmatprep.subr.bf16.mxu0 %v3217
    %3799 = vmatpush1.bf16.msra.mxu0 %v3216
    %3800 = vmatprep.subr.bf16.mxu0 %v3224
    %3801 = vmatpush1.bf16.msra.mxu0 %v3223
    %3802 = vmatprep.subr.bf16.mxu0 %v3231
    %3803 = vmatpush1.bf16.msra.mxu0 %v3230
    %3804 = vmatprep.mubr.bf16.mxu0 %v3116
    %3805 = vmatmul.mubr.bf16.gmra.mrb[0].mxu0 %v3115
    %v3806 = vpop.f32.mrb[0].mxu0
    %v3807 = vadd.f32 %v3584, %v3806
    %v3808 = vpop.f32.mrb[0].mxu0
    %v3809 = vadd.f32 %v3588, %v3808
    %v3810 = vpop.f32.mrb[0].mxu0
    %v3811 = vpop.f32.mrb[0].mxu0
    %3812 = vdwg.mxu0
    %3813 = vmatprep.subr.bf16.mxu0 %v3238
    %3814 = vmatpush1.bf16.msra.mxu0 %v3237
    %3815 = vmatprep.subr.bf16.mxu0 %v3245
    %3816 = vmatpush1.bf16.msra.mxu0 %v3244
    %3817 = vmatprep.subr.bf16.mxu0 %v3252
    %3818 = vmatpush1.bf16.msra.mxu0 %v3251
    %3819 = vmatprep.subr.bf16.mxu0 %v3259
    %3820 = vmatpush1.bf16.msra.mxu0 %v3258
    %3821 = vmatprep.subr.bf16.mxu0 %v3266
    %3822 = vmatpush1.bf16.msra.mxu0 %v3265
    %3823 = vmatprep.subr.bf16.mxu0 %v3273
    %3824 = vmatpush1.bf16.msra.mxu0 %v3272
    %3825 = vmatprep.subr.bf16.mxu0 %v3280
    %3826 = vmatpush1.bf16.msra.mxu0 %v3279
    %3827 = vmatprep.subr.bf16.mxu0 %v3287
    %3828 = vmatpush1.bf16.msra.mxu0 %v3286
    %3829 = vmatprep.subr.bf16.mxu0 %v3294
    %3830 = vmatpush1.bf16.msra.mxu0 %v3293
    %3831 = vmatprep.subr.bf16.mxu0 %v3301
    %3832 = vmatpush1.bf16.msra.mxu0 %v3300
    %3833 = vmatprep.subr.bf16.mxu0 %v3308
    %3834 = vmatpush1.bf16.msra.mxu0 %v3307
    %3835 = vmatprep.subr.bf16.mxu0 %v3315
    %3836 = vmatpush1.bf16.msra.mxu0 %v3314
    %3837 = vmatprep.subr.bf16.mxu0 %v3322
    %3838 = vmatpush1.bf16.msra.mxu0 %v3321
    %3839 = vmatprep.subr.bf16.mxu0 %v3329
    %3840 = vmatpush1.bf16.msra.mxu0 %v3328
    %3841 = vmatprep.subr.bf16.mxu0 %v3336
    %3842 = vmatpush1.bf16.msra.mxu0 %v3335
    %3843 = vmatprep.subr.bf16.mxu0 %v3343
    %3844 = vmatpush1.bf16.msra.mxu0 %v3342
    %3845 = vmatprep.mubr.bf16.mxu0 %v3118
    %3846 = vmatmul.mubr.bf16.gmra.mrb[0].mxu0 %v3117
    %v3847 = vpop.f32.mrb[0].mxu0
    %v3848 = vadd.f32 %v3807, %v3847
    %v3849 = vpop.f32.mrb[0].mxu0
    %v3850 = vadd.f32 %v3809, %v3849
    %v3851 = vpop.f32.mrb[0].mxu0
    %v3852 = vpop.f32.mrb[0].mxu0
    %3853 = vdwg.mxu0
    %3854 = vmatprep.subr.bf16.mxu0 %v3350
    %3855 = vmatpush1.bf16.msra.mxu0 %v3349
    %3856 = vmatprep.subr.bf16.mxu0 %v3357
    %3857 = vmatpush1.bf16.msra.mxu0 %v3356
    %3858 = vmatprep.subr.bf16.mxu0 %v3364
    %3859 = vmatpush1.bf16.msra.mxu0 %v3363
    %3860 = vmatprep.subr.bf16.mxu0 %v3371
    %3861 = vmatpush1.bf16.msra.mxu0 %v3370
    %3862 = vmatprep.subr.bf16.mxu0 %v3378
    %3863 = vmatpush1.bf16.msra.mxu0 %v3377
    %3864 = vmatprep.subr.bf16.mxu0 %v3385
    %3865 = vmatpush1.bf16.msra.mxu0 %v3384
    %3866 = vmatprep.subr.bf16.mxu0 %v3392
    %3867 = vmatpush1.bf16.msra.mxu0 %v3391
    %3868 = vmatprep.subr.bf16.mxu0 %v3399
    %3869 = vmatpush1.bf16.msra.mxu0 %v3398
    %3870 = vmatprep.subr.bf16.mxu0 %v3406
    %3871 = vmatpush1.bf16.msra.mxu0 %v3405
    %3872 = vmatprep.subr.bf16.mxu0 %v3413
    %3873 = vmatpush1.bf16.msra.mxu0 %v3412
    %3874 = vmatprep.subr.bf16.mxu0 %v3420
    %3875 = vmatpush1.bf16.msra.mxu0 %v3419
    %3876 = vmatprep.subr.bf16.mxu0 %v3427
    %3877 = vmatpush1.bf16.msra.mxu0 %v3426
    %3878 = vmatprep.subr.bf16.mxu0 %v3434
    %3879 = vmatpush1.bf16.msra.mxu0 %v3433
    %3880 = vmatprep.subr.bf16.mxu0 %v3441
    %3881 = vmatpush1.bf16.msra.mxu0 %v3440
    %3882 = vmatprep.subr.bf16.mxu0 %v3448
    %3883 = vmatpush1.bf16.msra.mxu0 %v3447
    %3884 = vmatprep.subr.bf16.mxu0 %v3455
    %3885 = vmatpush1.bf16.msra.mxu0 %v3454
    %3886 = vmatprep.mubr.bf16.mxu0 %v3120
    %3887 = vmatmul.mubr.bf16.gmra.mrb[0].mxu0 %v3119
    %v3888 = vpop.f32.mrb[0].mxu0
    %v3889 = vadd.f32 %v3848, %v3888
    %v3890 = vpop.f32.mrb[0].mxu0
    %v3891 = vadd.f32 %v3850, %v3890
    %v3892 = vpop.f32.mrb[0].mxu0
    %v3893 = vpop.f32.mrb[0].mxu0
    %3894 = vdwg.mxu0
    %3895 = vmatprep.subr.bf16.mxu0 %v3462
    %3896 = vmatpush1.bf16.msra.mxu0 %v3461
    %3897 = vmatprep.subr.bf16.mxu0 %v3469
    %3898 = vmatpush1.bf16.msra.mxu0 %v3468
    %3899 = vmatprep.subr.bf16.mxu0 %v3476
    %3900 = vmatpush1.bf16.msra.mxu0 %v3475
    %3901 = vmatprep.subr.bf16.mxu0 %v3483
    %3902 = vmatpush1.bf16.msra.mxu0 %v3482
    %3903 = vmatprep.subr.bf16.mxu0 %v3490
    %3904 = vmatpush1.bf16.msra.mxu0 %v3489
    %3905 = vmatprep.subr.bf16.mxu0 %v3497
    %3906 = vmatpush1.bf16.msra.mxu0 %v3496
    %3907 = vmatprep.subr.bf16.mxu0 %v3504
    %3908 = vmatpush1.bf16.msra.mxu0 %v3503
    %3909 = vmatprep.subr.bf16.mxu0 %v3511
    %3910 = vmatpush1.bf16.msra.mxu0 %v3510
    %3911 = vmatprep.subr.bf16.mxu0 %v3518
    %3912 = vmatpush1.bf16.msra.mxu0 %v3517
    %3913 = vmatprep.subr.bf16.mxu0 %v3525
    %3914 = vmatpush1.bf16.msra.mxu0 %v3524
    %3915 = vmatprep.subr.bf16.mxu0 %v3532
    %3916 = vmatpush1.bf16.msra.mxu0 %v3531
    %3917 = vmatprep.subr.bf16.mxu0 %v3539
    %3918 = vmatpush1.bf16.msra.mxu0 %v3538
    %3919 = vmatprep.subr.bf16.mxu0 %v3546
    %3920 = vmatpush1.bf16.msra.mxu0 %v3545
    %3921 = vmatprep.subr.bf16.mxu0 %v3553
    %3922 = vmatpush1.bf16.msra.mxu0 %v3552
    %3923 = vmatprep.subr.bf16.mxu0 %v3560
    %3924 = vmatpush1.bf16.msra.mxu0 %v3559
    %3925 = vmatprep.subr.bf16.mxu0 %v3567
    %3926 = vmatpush1.bf16.msra.mxu0 %v3566
    %3927 = vmatprep.mubr.bf16.mxu0 %v3122
    %3928 = vmatmul.mubr.bf16.gmra.mrb[0].mxu0 %v3121
    %v3929 = vpop.f32.mrb[0].mxu0
    %v3930 = vadd.f32 %v3889, %v3929
    %v3931 = vpop.f32.mrb[0].mxu0
    %v3932 = vadd.f32 %v3891, %v3931
    %v3933 = vpop.f32.mrb[0].mxu0
    %v3934 = vpop.f32.mrb[0].mxu0
    %3935 = vdwg.mxu0
    %3936 = vmatprep.subr.bf16.mxu0 %v3128
    %3937 = vmatpush1.bf16.msra.mxu0 %v3127
    %3938 = vmatprep.subr.bf16.mxu0 %v3135
    %3939 = vmatpush1.bf16.msra.mxu0 %v3134
    %3940 = vmatprep.subr.bf16.mxu0 %v3142
    %3941 = vmatpush1.bf16.msra.mxu0 %v3141
    %3942 = vmatprep.subr.bf16.mxu0 %v3149
    %3943 = vmatpush1.bf16.msra.mxu0 %v3148
    %3944 = vmatprep.subr.bf16.mxu0 %v3156
    %3945 = vmatpush1.bf16.msra.mxu0 %v3155
    %3946 = vmatprep.subr.bf16.mxu0 %v3163
    %3947 = vmatpush1.bf16.msra.mxu0 %v3162
    %3948 = vmatprep.subr.bf16.mxu0 %v3170
    %3949 = vmatpush1.bf16.msra.mxu0 %v3169
    %3950 = vmatprep.subr.bf16.mxu0 %v3177
    %3951 = vmatpush1.bf16.msra.mxu0 %v3176
    %3952 = vmatprep.subr.bf16.mxu0 %v3184
    %3953 = vmatpush1.bf16.msra.mxu0 %v3183
    %3954 = vmatprep.subr.bf16.mxu0 %v3191
    %3955 = vmatpush1.bf16.msra.mxu0 %v3190
    %3956 = vmatprep.subr.bf16.mxu0 %v3198
    %3957 = vmatpush1.bf16.msra.mxu0 %v3197
    %3958 = vmatprep.subr.bf16.mxu0 %v3205
    %3959 = vmatpush1.bf16.msra.mxu0 %v3204
    %3960 = vmatprep.subr.bf16.mxu0 %v3212
    %3961 = vmatpush1.bf16.msra.mxu0 %v3211
    %3962 = vmatprep.subr.bf16.mxu0 %v3219
    %3963 = vmatpush1.bf16.msra.mxu0 %v3218
    %3964 = vmatprep.subr.bf16.mxu0 %v3226
    %3965 = vmatpush1.bf16.msra.mxu0 %v3225
    %3966 = vmatprep.subr.bf16.mxu0 %v3233
    %3967 = vmatpush1.bf16.msra.mxu0 %v3232
    %3968 = vmatprep.mubr.bf16.mxu0 %v3116
    %3969 = vmatmul.mubr.bf16.gmra.mrb[0].mxu0 %v3115
    %v3970 = vpop.f32.mrb[0].mxu0
    %v3971 = vadd.f32 %v3592, %v3970
    %v3972 = vpop.f32.mrb[0].mxu0
    %v3973 = vadd.f32 %v3596, %v3972
    %v3974 = vpop.f32.mrb[0].mxu0
    %v3975 = vpop.f32.mrb[0].mxu0
    %3976 = vdwg.mxu0
    %3977 = vmatprep.subr.bf16.mxu0 %v3240
    %3978 = vmatpush1.bf16.msra.mxu0 %v3239
    %3979 = vmatprep.subr.bf16.mxu0 %v3247
    %3980 = vmatpush1.bf16.msra.mxu0 %v3246
    %3981 = vmatprep.subr.bf16.mxu0 %v3254
    %3982 = vmatpush1.bf16.msra.mxu0 %v3253
    %3983 = vmatprep.subr.bf16.mxu0 %v3261
    %3984 = vmatpush1.bf16.msra.mxu0 %v3260
    %3985 = vmatprep.subr.bf16.mxu0 %v3268
    %3986 = vmatpush1.bf16.msra.mxu0 %v3267
    %3987 = vmatprep.subr.bf16.mxu0 %v3275
    %3988 = vmatpush1.bf16.msra.mxu0 %v3274
    %3989 = vmatprep.subr.bf16.mxu0 %v3282
    %3990 = vmatpush1.bf16.msra.mxu0 %v3281
    %3991 = vmatprep.subr.bf16.mxu0 %v3289
    %3992 = vmatpush1.bf16.msra.mxu0 %v3288
    %3993 = vmatprep.subr.bf16.mxu0 %v3296
    %3994 = vmatpush1.bf16.msra.mxu0 %v3295
    %3995 = vmatprep.subr.bf16.mxu0 %v3303
    %3996 = vmatpush1.bf16.msra.mxu0 %v3302
    %3997 = vmatprep.subr.bf16.mxu0 %v3310
    %3998 = vmatpush1.bf16.msra.mxu0 %v3309
    %3999 = vmatprep.subr.bf16.mxu0 %v3317
    %4000 = vmatpush1.bf16.msra.mxu0 %v3316
    %4001 = vmatprep.subr.bf16.mxu0 %v3324
    %4002 = vmatpush1.bf16.msra.mxu0 %v3323
    %4003 = vmatprep.subr.bf16.mxu0 %v3331
    %4004 = vmatpush1.bf16.msra.mxu0 %v3330
    %4005 = vmatprep.subr.bf16.mxu0 %v3338
    %4006 = vmatpush1.bf16.msra.mxu0 %v3337
    %4007 = vmatprep.subr.bf16.mxu0 %v3345
    %4008 = vmatpush1.bf16.msra.mxu0 %v3344
    %4009 = vmatprep.mubr.bf16.mxu0 %v3118
    %4010 = vmatmul.mubr.bf16.gmra.mrb[0].mxu0 %v3117
    %v4011 = vpop.f32.mrb[0].mxu0
    %v4012 = vadd.f32 %v3971, %v4011
    %v4013 = vpop.f32.mrb[0].mxu0
    %v4014 = vadd.f32 %v3973, %v4013
    %v4015 = vpop.f32.mrb[0].mxu0
    %v4016 = vpop.f32.mrb[0].mxu0
    %4017 = vdwg.mxu0
    %4018 = vmatprep.subr.bf16.mxu0 %v3352
    %4019 = vmatpush1.bf16.msra.mxu0 %v3351
    %4020 = vmatprep.subr.bf16.mxu0 %v3359
    %4021 = vmatpush1.bf16.msra.mxu0 %v3358
    %4022 = vmatprep.subr.bf16.mxu0 %v3366
    %4023 = vmatpush1.bf16.msra.mxu0 %v3365
    %4024 = vmatprep.subr.bf16.mxu0 %v3373
    %4025 = vmatpush1.bf16.msra.mxu0 %v3372
    %4026 = vmatprep.subr.bf16.mxu0 %v3380
    %4027 = vmatpush1.bf16.msra.mxu0 %v3379
    %4028 = vmatprep.subr.bf16.mxu0 %v3387
    %4029 = vmatpush1.bf16.msra.mxu0 %v3386
    %4030 = vmatprep.subr.bf16.mxu0 %v3394
    %4031 = vmatpush1.bf16.msra.mxu0 %v3393
    %4032 = vmatprep.subr.bf16.mxu0 %v3401
    %4033 = vmatpush1.bf16.msra.mxu0 %v3400
    %4034 = vmatprep.subr.bf16.mxu0 %v3408
    %4035 = vmatpush1.bf16.msra.mxu0 %v3407
    %4036 = vmatprep.subr.bf16.mxu0 %v3415
    %4037 = vmatpush1.bf16.msra.mxu0 %v3414
    %4038 = vmatprep.subr.bf16.mxu0 %v3422
    %4039 = vmatpush1.bf16.msra.mxu0 %v3421
    %4040 = vmatprep.subr.bf16.mxu0 %v3429
    %4041 = vmatpush1.bf16.msra.mxu0 %v3428
    %4042 = vmatprep.subr.bf16.mxu0 %v3436
    %4043 = vmatpush1.bf16.msra.mxu0 %v3435
    %4044 = vmatprep.subr.bf16.mxu0 %v3443
    %4045 = vmatpush1.bf16.msra.mxu0 %v3442
    %4046 = vmatprep.subr.bf16.mxu0 %v3450
    %4047 = vmatpush1.bf16.msra.mxu0 %v3449
    %4048 = vmatprep.subr.bf16.mxu0 %v3457
    %4049 = vmatpush1.bf16.msra.mxu0 %v3456
    %4050 = vmatprep.mubr.bf16.mxu0 %v3120
    %4051 = vmatmul.mubr.bf16.gmra.mrb[0].mxu0 %v3119
    %v4052 = vpop.f32.mrb[0].mxu0
    %v4053 = vadd.f32 %v4012, %v4052
    %v4054 = vpop.f32.mrb[0].mxu0
    %v4055 = vadd.f32 %v4014, %v4054
    %v4056 = vpop.f32.mrb[0].mxu0
    %v4057 = vpop.f32.mrb[0].mxu0
    %4058 = vdwg.mxu0
    %4059 = vmatprep.subr.bf16.mxu0 %v3464
    %4060 = vmatpush1.bf16.msra.mxu0 %v3463
    %4061 = vmatprep.subr.bf16.mxu0 %v3471
    %4062 = vmatpush1.bf16.msra.mxu0 %v3470
    %4063 = vmatprep.subr.bf16.mxu0 %v3478
    %4064 = vmatpush1.bf16.msra.mxu0 %v3477
    %4065 = vmatprep.subr.bf16.mxu0 %v3485
    %4066 = vmatpush1.bf16.msra.mxu0 %v3484
    %4067 = vmatprep.subr.bf16.mxu0 %v3492
    %4068 = vmatpush1.bf16.msra.mxu0 %v3491
    %4069 = vmatprep.subr.bf16.mxu0 %v3499
    %4070 = vmatpush1.bf16.msra.mxu0 %v3498
    %4071 = vmatprep.subr.bf16.mxu0 %v3506
    %4072 = vmatpush1.bf16.msra.mxu0 %v3505
    %4073 = vmatprep.subr.bf16.mxu0 %v3513
    %4074 = vmatpush1.bf16.msra.mxu0 %v3512
    %4075 = vmatprep.subr.bf16.mxu0 %v3520
    %4076 = vmatpush1.bf16.msra.mxu0 %v3519
    %4077 = vmatprep.subr.bf16.mxu0 %v3527
    %4078 = vmatpush1.bf16.msra.mxu0 %v3526
    %4079 = vmatprep.subr.bf16.mxu0 %v3534
    %4080 = vmatpush1.bf16.msra.mxu0 %v3533
    %4081 = vmatprep.subr.bf16.mxu0 %v3541
    %4082 = vmatpush1.bf16.msra.mxu0 %v3540
    %4083 = vmatprep.subr.bf16.mxu0 %v3548
    %4084 = vmatpush1.bf16.msra.mxu0 %v3547
    %4085 = vmatprep.subr.bf16.mxu0 %v3555
    %4086 = vmatpush1.bf16.msra.mxu0 %v3554
    %4087 = vmatprep.subr.bf16.mxu0 %v3562
    %4088 = vmatpush1.bf16.msra.mxu0 %v3561
    %4089 = vmatprep.subr.bf16.mxu0 %v3569
    %4090 = vmatpush1.bf16.msra.mxu0 %v3568
    %4091 = vmatprep.mubr.bf16.mxu0 %v3122
    %4092 = vmatmul.mubr.bf16.gmra.mrb[0].mxu0 %v3121
    %v4093 = vpop.f32.mrb[0].mxu0
    %v4094 = vadd.f32 %v4053, %v4093
    %v4095 = vpop.f32.mrb[0].mxu0
    %v4096 = vadd.f32 %v4055, %v4095
    %v4097 = vpop.f32.mrb[0].mxu0
    %v4098 = vpop.f32.mrb[0].mxu0
    %4099 = vdwg.mxu0
    %4100 = vmatprep.subr.bf16.mxu0 0
    %4101 = vmatpush1.bf16.msra.mxu0 %v3129
    %4102 = vmatprep.subr.bf16.mxu0 0
    %4103 = vmatpush1.bf16.msra.mxu0 %v3136
    %4104 = vmatprep.subr.bf16.mxu0 0
    %4105 = vmatpush1.bf16.msra.mxu0 %v3143
    %4106 = vmatprep.subr.bf16.mxu0 0
    %4107 = vmatpush1.bf16.msra.mxu0 %v3150
    %4108 = vmatprep.subr.bf16.mxu0 0
    %4109 = vmatpush1.bf16.msra.mxu0 %v3157
    %4110 = vmatprep.subr.bf16.mxu0 0
    %4111 = vmatpush1.bf16.msra.mxu0 %v3164
    %4112 = vmatprep.subr.bf16.mxu0 0
    %4113 = vmatpush1.bf16.msra.mxu0 %v3171
    %4114 = vmatprep.subr.bf16.mxu0 0
    %4115 = vmatpush1.bf16.msra.mxu0 %v3178
    %4116 = vmatprep.subr.bf16.mxu0 0
    %4117 = vmatpush1.bf16.msra.mxu0 %v3185
    %4118 = vmatprep.subr.bf16.mxu0 0
    %4119 = vmatpush1.bf16.msra.mxu0 %v3192
    %4120 = vmatprep.subr.bf16.mxu0 0
    %4121 = vmatpush1.bf16.msra.mxu0 %v3199
    %4122 = vmatprep.subr.bf16.mxu0 0
    %4123 = vmatpush1.bf16.msra.mxu0 %v3206
    %4124 = vmatprep.subr.bf16.mxu0 0
    %4125 = vmatpush1.bf16.msra.mxu0 %v3213
    %4126 = vmatprep.subr.bf16.mxu0 0
    %4127 = vmatpush1.bf16.msra.mxu0 %v3220
    %4128 = vmatprep.subr.bf16.mxu0 0
    %4129 = vmatpush1.bf16.msra.mxu0 %v3227
    %4130 = vmatprep.subr.bf16.mxu0 0
    %4131 = vmatpush1.bf16.msra.mxu0 %v3234
    %4132 = vmatprep.mubr.bf16.mxu0 %v3116
    %4133 = vmatmul.mubr.bf16.gmra.mrb[0].mxu0 %v3115
    %v4134 = vpop.f32.mrb[0].mxu0
    %v4135 = vadd.f32 %v3600, %v4134
    %v4136 = vpop.f32.mrb[0].mxu0
    %v4137 = vpop.f32.mrb[0].mxu0
    %v4138 = vpop.f32.mrb[0].mxu0
    %4139 = vdwg.mxu0
    %4140 = vmatprep.subr.bf16.mxu0 0
    %4141 = vmatpush1.bf16.msra.mxu0 %v3241
    %4142 = vmatprep.subr.bf16.mxu0 0
    %4143 = vmatpush1.bf16.msra.mxu0 %v3248
    %4144 = vmatprep.subr.bf16.mxu0 0
    %4145 = vmatpush1.bf16.msra.mxu0 %v3255
    %4146 = vmatprep.subr.bf16.mxu0 0
    %4147 = vmatpush1.bf16.msra.mxu0 %v3262
    %4148 = vmatprep.subr.bf16.mxu0 0
    %4149 = vmatpush1.bf16.msra.mxu0 %v3269
    %4150 = vmatprep.subr.bf16.mxu0 0
    %4151 = vmatpush1.bf16.msra.mxu0 %v3276
    %4152 = vmatprep.subr.bf16.mxu0 0
    %4153 = vmatpush1.bf16.msra.mxu0 %v3283
    %4154 = vmatprep.subr.bf16.mxu0 0
    %4155 = vmatpush1.bf16.msra.mxu0 %v3290
    %4156 = vmatprep.subr.bf16.mxu0 0
    %4157 = vmatpush1.bf16.msra.mxu0 %v3297
    %4158 = vmatprep.subr.bf16.mxu0 0
    %4159 = vmatpush1.bf16.msra.mxu0 %v3304
    %4160 = vmatprep.subr.bf16.mxu0 0
    %4161 = vmatpush1.bf16.msra.mxu0 %v3311
    %4162 = vmatprep.subr.bf16.mxu0 0
    %4163 = vmatpush1.bf16.msra.mxu0 %v3318
    %4164 = vmatprep.subr.bf16.mxu0 0
    %4165 = vmatpush1.bf16.msra.mxu0 %v3325
    %4166 = vmatprep.subr.bf16.mxu0 0
    %4167 = vmatpush1.bf16.msra.mxu0 %v3332
    %4168 = vmatprep.subr.bf16.mxu0 0
    %4169 = vmatpush1.bf16.msra.mxu0 %v3339
    %4170 = vmatprep.subr.bf16.mxu0 0
    %4171 = vmatpush1.bf16.msra.mxu0 %v3346
    %4172 = vmatprep.mubr.bf16.mxu0 %v3118
    %4173 = vmatmul.mubr.bf16.gmra.mrb[0].mxu0 %v3117
    %v4174 = vpop.f32.mrb[0].mxu0
    %v4175 = vadd.f32 %v4135, %v4174
    %v4176 = vpop.f32.mrb[0].mxu0
    %v4177 = vpop.f32.mrb[0].mxu0
    %v4178 = vpop.f32.mrb[0].mxu0
    %4179 = vdwg.mxu0
    %4180 = vmatprep.subr.bf16.mxu0 0
    %4181 = vmatpush1.bf16.msra.mxu0 %v3353
    %4182 = vmatprep.subr.bf16.mxu0 0
    %4183 = vmatpush1.bf16.msra.mxu0 %v3360
    %4184 = vmatprep.subr.bf16.mxu0 0
    %4185 = vmatpush1.bf16.msra.mxu0 %v3367
    %4186 = vmatprep.subr.bf16.mxu0 0
    %4187 = vmatpush1.bf16.msra.mxu0 %v3374
    %4188 = vmatprep.subr.bf16.mxu0 0
    %4189 = vmatpush1.bf16.msra.mxu0 %v3381
    %4190 = vmatprep.subr.bf16.mxu0 0
    %4191 = vmatpush1.bf16.msra.mxu0 %v3388
    %4192 = vmatprep.subr.bf16.mxu0 0
    %4193 = vmatpush1.bf16.msra.mxu0 %v3395
    %4194 = vmatprep.subr.bf16.mxu0 0
    %4195 = vmatpush1.bf16.msra.mxu0 %v3402
    %4196 = vmatprep.subr.bf16.mxu0 0
    %4197 = vmatpush1.bf16.msra.mxu0 %v3409
    %4198 = vmatprep.subr.bf16.mxu0 0
    %4199 = vmatpush1.bf16.msra.mxu0 %v3416
    %4200 = vmatprep.subr.bf16.mxu0 0
    %4201 = vmatpush1.bf16.msra.mxu0 %v3423
    %4202 = vmatprep.subr.bf16.mxu0 0
    %4203 = vmatpush1.bf16.msra.mxu0 %v3430
    %4204 = vmatprep.subr.bf16.mxu0 0
    %4205 = vmatpush1.bf16.msra.mxu0 %v3437
    %4206 = vmatprep.subr.bf16.mxu0 0
    %4207 = vmatpush1.bf16.msra.mxu0 %v3444
    %4208 = vmatprep.subr.bf16.mxu0 0
    %4209 = vmatpush1.bf16.msra.mxu0 %v3451
    %4210 = vmatprep.subr.bf16.mxu0 0
    %4211 = vmatpush1.bf16.msra.mxu0 %v3458
    %4212 = vmatprep.mubr.bf16.mxu0 %v3120
    %4213 = vmatmul.mubr.bf16.gmra.mrb[0].mxu0 %v3119
    %v4214 = vpop.f32.mrb[0].mxu0
    %v4215 = vadd.f32 %v4175, %v4214
    %v4216 = vpop.f32.mrb[0].mxu0
    %v4217 = vpop.f32.mrb[0].mxu0
    %v4218 = vpop.f32.mrb[0].mxu0
    %4219 = vdwg.mxu0
    %4220 = vmatprep.subr.bf16.mxu0 0
    %4221 = vmatpush1.bf16.msra.mxu0 %v3465
    %4222 = vmatprep.subr.bf16.mxu0 0
    %4223 = vmatpush1.bf16.msra.mxu0 %v3472
    %4224 = vmatprep.subr.bf16.mxu0 0
    %4225 = vmatpush1.bf16.msra.mxu0 %v3479
    %4226 = vmatprep.subr.bf16.mxu0 0
    %4227 = vmatpush1.bf16.msra.mxu0 %v3486
    %4228 = vmatprep.subr.bf16.mxu0 0
    %4229 = vmatpush1.bf16.msra.mxu0 %v3493
    %4230 = vmatprep.subr.bf16.mxu0 0
    %4231 = vmatpush1.bf16.msra.mxu0 %v3500
    %4232 = vmatprep.subr.bf16.mxu0 0
    %4233 = vmatpush1.bf16.msra.mxu0 %v3507
    %4234 = vmatprep.subr.bf16.mxu0 0
    %4235 = vmatpush1.bf16.msra.mxu0 %v3514
    %4236 = vmatprep.subr.bf16.mxu0 0
    %4237 = vmatpush1.bf16.msra.mxu0 %v3521
    %4238 = vmatprep.subr.bf16.mxu0 0
    %4239 = vmatpush1.bf16.msra.mxu0 %v3528
    %4240 = vmatprep.subr.bf16.mxu0 0
    %4241 = vmatpush1.bf16.msra.mxu0 %v3535
    %4242 = vmatprep.subr.bf16.mxu0 0
    %4243 = vmatpush1.bf16.msra.mxu0 %v3542
    %4244 = vmatprep.subr.bf16.mxu0 0
    %4245 = vmatpush1.bf16.msra.mxu0 %v3549
    %4246 = vmatprep.subr.bf16.mxu0 0
    %4247 = vmatpush1.bf16.msra.mxu0 %v3556
    %4248 = vmatprep.subr.bf16.mxu0 0
    %4249 = vmatpush1.bf16.msra.mxu0 %v3563
    %4250 = vmatprep.subr.bf16.mxu0 0
    %4251 = vmatpush1.bf16.msra.mxu0 %v3570
    %4252 = vmatprep.mubr.bf16.mxu0 %v3122
    %4253 = vmatmul.mubr.bf16.gmra.mrb[0].mxu0 %v3121
    %v4254 = vpop.f32.mrb[0].mxu0
    %v4255 = vadd.f32 %v4215, %v4254
    %v4256 = vpop.f32.mrb[0].mxu0
    %v4257 = vpop.f32.mrb[0].mxu0
    %v4258 = vpop.f32.mrb[0].mxu0
    %4259 = vdwg.mxu0
    %v4260 = vtanh.pop %v3766
    %v4261 = vtanh.pop %v3768
    %v4262 = vtanh.pop %v3930
    %v4263 = vtanh.pop %v3932
    %v4264 = vtanh.pop %v4094
    %v4265 = vtanh.pop %v4096
    %v4266 = vtanh.pop %v4255
    %4267 = vst [vmem:[#allocation25] sm:$0xff] %v4260
    %4268 = vst [vmem:[#allocation25 + $0x8] sm:$0xff] %v4261
    %4269 = vst [vmem:[#allocation25 + $0x10] sm:$0xff] %v4262
    %4270 = vst [vmem:[#allocation25 + $0x18] sm:$0xff] %v4263
    %4271 = vst [vmem:[#allocation25 + $0x20] sm:$0xff] %v4264
    %4272 = vst [vmem:[#allocation25 + $0x28] sm:$0xff] %v4265
    %4273 = vst [vmem:[#allocation25 + $0x30] sm:$0xff] %v4266
    // Predicated region
    $region98: #{tpu_custom_call.1} parent=1 // pred_check
      _
    $region99: #{tpu_custom_call.1} parent=1 // pred_check_branch
      %4275 = sbr.rel (0) target = $region101
    $region100: #{tpu_custom_call.1} parent=1 // pred_region
      %s4277 = ssub.s32 896, 896
      %4278 = vsyncadd [#allocation7], %s4277
      %s4280 = sshll.u32 [#allocation25], 4
      %s4281 = int_to_ptr.vmem [resolvable:$true] %s4280
      %4283 = dma.vmem_to_hbm [thread:$0]  %s4281, 896, %s14, [#allocation7]
    $region101: #{tpu_custom_call.1} parent=1 // pred_fallthru
      _
    // Predicated region
    $region102: #{tpu_custom_call.1} parent=1 // pred_check
      _
    $region103: #{tpu_custom_call.1} parent=1 // pred_check_branch
      %4285 = sbr.rel (0) target = $region105
    $region104: #{tpu_custom_call.1} parent=1 // pred_region
      %4286 = dma.done [#allocation7], 896
    $region105: #{tpu_custom_call.1} parent=1 // pred_fallthru
      _
    %4287 = vsyncpa [#allocation6], 1
    %4288 = vsyncpa [#allocation9], 1
    %4289 = vsyncpa [#allocation12], 1
    %4290 = vsyncpa [#allocation15], 1
    %4291 = vsyncpa [#allocation18], 1
    %4292 = vsyncpa [#allocation21], 1
    %4293 = vsyncpa [#allocation24], 1
    %4294 = vsyncpa [#allocation7], 1
  %4295 = vsyncmov [#allocation4]
  %s4296 = vpop.sfrf %4295
  %p4297 = scmp.eq.s32.totalorder %s4296, 0
  %p4298 = pneg %p4297
  %4300 = shalt.err (%p4298)
  %s4301 = scalar_lea.sflag [#allocation4], 1
  %4302 = vsyncmov %s4301
  %s4303 = vpop.sfrf %4302
  %p4304 = scmp.eq.s32.totalorder %s4303, 0
  %p4305 = pneg %p4304
  %4307 = shalt.err (%p4305)

</llo_original>
